<compile_context>
chip_gen: v5e
topology: v5e:2x2
jax: 0.10.0
libtpu: 0.0.40
codegen_flags: <defaults>
</compile_context>

<pallas_src>
import functools

import jax
import jax.numpy as jnp
from jax.experimental import pallas as pl
from jax.experimental.pallas import tpu as pltpu

_LANE = 128
_SUBLANE = 8
_VMEM_LIMIT = 32 * 1024 * 1024      # scoped-VMEM cap: safe on v5e / v6e / v7x
_A_TILE_BUDGET = 4 * 1024 * 1024    # per-buffer budget for the streaming A tile


def _round_up(x, m):
    return (x + m - 1) // m * m


# ----------------------------------------------------------------------------
# Pallas kernel bodies
# ----------------------------------------------------------------------------
def _matmul_kernel(a_ref, w_ref, o_ref):
    # a: [TM, Kp] (streamed), w: [Kp, Cp] (resident), o: [TM, Cp].  K untiled.
    o_ref[...] = jnp.dot(a_ref[...], w_ref[...], preferred_element_type=jnp.float32)


def _conv_s1_tap_kernel(x0_ref, x1_ref, x2_ref, w_ref, o_ref, *, Wp, L, kdims):
    # x*_ref: [Hp*Wp, Cin] -- three consecutive depth planes of the padded input
    # (flattened H*W).  w_ref: [27, Cin, Cp] (resident).  o_ref: [L, Cp] where
    # pseudo-row p = ho*Wp + wo; taps are static offsets into the flat plane.
    kd, kh, kw = kdims
    planes = (x0_ref, x1_ref, x2_ref)
    acc = jnp.zeros(o_ref.shape, jnp.float32)
    for dz in range(kd):
        xr = planes[dz]
        for dy in range(kh):
            for dx in range(kw):
                t = (dz * kh + dy) * kw + dx
                xs = xr[pl.ds(dy * Wp + dx, L), :]          # static-offset slice
                acc = acc + jnp.dot(xs, w_ref[t], preferred_element_type=jnp.float32)
    o_ref[...] = acc


def _in_stats_kernel(x_ref, sum_ref, sq_ref):
    # x: [TS, C]; accumulate per-(n, c) sum / sum-of-squares over the S grid axis.
    @pl.when(pl.program_id(1) == 0)
    def _():
        sum_ref[...] = jnp.zeros_like(sum_ref)
        sq_ref[...] = jnp.zeros_like(sq_ref)

    x = x_ref[...]
    sum_ref[...] += jnp.sum(x, axis=0, keepdims=True)
    sq_ref[...] += jnp.sum(x * x, axis=0, keepdims=True)


def _in_norm_lrelu_kernel(x_ref, sum_ref, sq_ref, g_ref, b_ref, o_ref, *,
                          inv_count, eps, slope):
    x = x_ref[...]                                          # [TS, C]
    mean = sum_ref[...] * inv_count                         # [1, C]
    var = jnp.maximum(sq_ref[...] * inv_count - mean * mean, 0.0)   # biased var
    inv = jax.lax.rsqrt(var + eps)
    y = (x - mean) * (inv * g_ref[...]) + b_ref[...]
    o_ref[...] = jnp.where(y >= 0, y, slope * y)


# ----------------------------------------------------------------------------
# Conv wrappers (channels-last)
# ----------------------------------------------------------------------------
def conv3d_strided_im2col(x, w, stride):
    """3-D conv, 'same'-style padding.  x: [N,D,H,W,Cin], w: [Cout,Cin,kd,kh,kw]."""
    N, D, H, W, Cin = x.shape
    Cout, _, kd, kh, kw = w.shape
    sd, sh, sw = stride
    pd, ph, pw = (kd - 1) // 2, (kh - 1) // 2, (kw - 1) // 2
    xp = jnp.pad(x, ((0, 0), (pd, pd), (ph, ph), (pw, pw), (0, 0)))
    Do = (D + 2 * pd - kd) // sd + 1
    Ho = (H + 2 * ph - kh) // sh + 1
    Wo = (W + 2 * pw - kw) // sw + 1

    # Channels-last im2col: taps stack onto a new minor axis -> no 6-D transpose.
    taps = []
    for dz in range(kd):
        for dy in range(kh):
            for dx in range(kw):
                taps.append(xp[:, dz:dz + Do * sd:sd, dy:dy + Ho * sh:sh,
                               dx:dx + Wo * sw:sw, :])
    cols = jnp.stack(taps, axis=4)                          # [N, Do, Ho, Wo, 27, Cin]

    M = N * Do * Ho * Wo
    K = kd * kh * kw * Cin
    a = cols.reshape(M, K)
    w2 = jnp.transpose(w, (2, 3, 4, 1, 0)).reshape(K, Cout)   # (tap-major, cin-minor)

    # Lane-dense / MXU-friendly padding; M tile chosen from a VMEM budget.
    Kp = _round_up(K, _LANE)
    Cp = _round_up(Cout, _LANE)
    TM = min(512, _round_up(M, _SUBLANE),
             max(_SUBLANE, (_A_TILE_BUDGET // (Kp * 4)) // _SUBLANE * _SUBLANE))
    Mp = _round_up(M, TM)
    a = jnp.pad(a, ((0, Mp - M), (0, Kp - K)))
    w2 = jnp.pad(w2, ((0, Kp - K), (0, Cp - Cout)))

    out = pl.pallas_call(
        _matmul_kernel,
        out_shape=jax.ShapeDtypeStruct((Mp, Cp), jnp.float32),
        grid=(Mp // TM,),
        in_specs=[
            pl.BlockSpec((TM, Kp), lambda i: (i, 0)),       # streamed A tiles
            pl.BlockSpec((Kp, Cp), lambda i: (0, 0)),       # resident weights
        ],
        out_specs=pl.BlockSpec((TM, Cp), lambda i: (i, 0)),
        compiler_params=pltpu.CompilerParams(
            dimension_semantics=("parallel",),
            vmem_limit_bytes=_VMEM_LIMIT),
    )(a, w2)

    return out[:M, :Cout].reshape(N, Do, Ho, Wo, Cout)


def conv3d_s1_direct(x, w):
    """Stride-1 3x3x3 conv, padding 1, channels-last, no materialized im2col."""
    N, D, H, W, Cin = x.shape
    Cout, _, kd, kh, kw = w.shape
    assert (kd, kh, kw) == (3, 3, 3)
    xp = jnp.pad(x, ((0, 0), (1, 1), (1, 1), (1, 1), (0, 0)))
    Dp, Hp, Wp = D + 2, H + 2, W + 2
    Do, Ho, Wo = D, H, W
    xf = xp.reshape(N, Dp, Hp * Wp, Cin)                    # flattened-HW planes
    L = (Ho - 1) * Wp + Wo                                  # pseudo-rows per plane
    Cp = _round_up(Cout, _LANE)
    wt = jnp.transpose(w, (2, 3, 4, 1, 0)).reshape(kd * kh * kw, Cin, Cout)
    wt = jnp.pad(wt, ((0, 0), (0, 0), (0, Cp - Cout)))

    out = pl.pallas_call(
        functools.partial(_conv_s1_tap_kernel, Wp=Wp, L=L, kdims=(kd, kh, kw)),
        out_shape=jax.ShapeDtypeStruct((N, Do, L, Cp), jnp.float32),
        grid=(N, Do),
        in_specs=[
            # Same padded array three times: depth planes d, d+1, d+2 (halo).
            pl.BlockSpec((None, None, Hp * Wp, Cin), lambda n, d: (n, d, 0, 0)),
            pl.BlockSpec((None, None, Hp * Wp, Cin), lambda n, d: (n, d + 1, 0, 0)),
            pl.BlockSpec((None, None, Hp * Wp, Cin), lambda n, d: (n, d + 2, 0, 0)),
            pl.BlockSpec((kd * kh * kw, Cin, Cp), lambda n, d: (0, 0, 0)),
        ],
        out_specs=pl.BlockSpec((None, None, L, Cp), lambda n, d: (n, d, 0, 0)),
        compiler_params=pltpu.CompilerParams(
            dimension_semantics=("parallel", "parallel"),
            vmem_limit_bytes=_VMEM_LIMIT),
    )(xf, xf, xf, wt)

    out = out[:, :, :, :Cout]                               # drop lane padding
    out = jnp.pad(out, ((0, 0), (0, 0), (0, Ho * Wp - L), (0, 0)))
    return out.reshape(N, Do, Ho, Wp, Cout)[:, :, :, :Wo, :]


# ----------------------------------------------------------------------------
# InstanceNorm3d(affine) + LeakyReLU, channels-last, tiled two-pass reduction
# ----------------------------------------------------------------------------
def instnorm_lrelu_ndhwc(x, gamma, beta, eps=1e-5, slope=1e-2):
    N, D, H, W, C = x.shape
    S = D * H * W
    xr = x.reshape(N, S, C)
    TS = min(512, _round_up(S, _SUBLANE))
    Sp = _round_up(S, TS)
    if Sp != S:
        xr = jnp.pad(xr, ((0, 0), (0, Sp - S), (0, 0)))     # zero rows: sums unaffected
    n_s = Sp // TS
    g2 = gamma.reshape(1, C).astype(jnp.float32)
    b2 = beta.reshape(1, C).astype(jnp.float32)

    ssum, ssq = pl.pallas_call(
        _in_stats_kernel,
        out_shape=(jax.ShapeDtypeStruct((N, 1, C), jnp.float32),
                   jax.ShapeDtypeStruct((N, 1, C), jnp.float32)),
        grid=(N, n_s),
        in_specs=[pl.BlockSpec((None, TS, C), lambda n, s: (n, s, 0))],
        out_specs=(pl.BlockSpec((None, 1, C), lambda n, s: (n, 0, 0)),
                   pl.BlockSpec((None, 1, C), lambda n, s: (n, 0, 0))),
        compiler_params=pltpu.CompilerParams(
            dimension_semantics=("parallel", "arbitrary"),
            vmem_limit_bytes=_VMEM_LIMIT),
    )(xr)

    out = pl.pallas_call(
        functools.partial(_in_norm_lrelu_kernel,
                          inv_count=1.0 / S, eps=eps, slope=slope),
        out_shape=jax.ShapeDtypeStruct((N, Sp, C), jnp.float32),
        grid=(N, n_s),
        in_specs=[
            pl.BlockSpec((None, TS, C), lambda n, s: (n, s, 0)),
            pl.BlockSpec((None, 1, C), lambda n, s: (n, 0, 0)),
            pl.BlockSpec((None, 1, C), lambda n, s: (n, 0, 0)),
            pl.BlockSpec((1, C), lambda n, s: (0, 0)),
            pl.BlockSpec((1, C), lambda n, s: (0, 0)),
        ],
        out_specs=pl.BlockSpec((None, TS, C), lambda n, s: (n, s, 0)),
        compiler_params=pltpu.CompilerParams(
            dimension_semantics=("parallel", "parallel"),
            vmem_limit_bytes=_VMEM_LIMIT),
    )(xr, ssum, ssq, g2, b2)

    return out[:, :S, :].reshape(N, D, H, W, C)


# ----------------------------------------------------------------------------
# Module-level wrappers
# ----------------------------------------------------------------------------
def conv_dropout_norm_nonlin(x, params, stride):
    """ConvDropoutNormNonlin (channels-last): conv -> dropout -> instnorm -> lrelu."""
    w, b, gamma, beta = params
    del b  # conv bias is exactly cancelled by the InstanceNorm mean subtraction
    if stride == (1, 1, 1):
        y = conv3d_s1_direct(x, w)
    else:
        y = conv3d_strided_im2col(x, w, stride)
    # TODO(synk): Dropout3d is identity at inference / p=0; no kernel emitted.
    return instnorm_lrelu_ndhwc(y, gamma, beta)


def down_block(x, down_params, conv_params):
    """DownBlock.forward.  x: [N, Cin, D, H, W] (PyTorch NCDHW layout)."""
    x = jnp.transpose(x, (0, 2, 3, 4, 1))                   # NDHWC: C on the lane axis
    x = conv_dropout_norm_nonlin(x, down_params, stride=(2, 2, 2))
    x = conv_dropout_norm_nonlin(x, conv_params, stride=(1, 1, 1))
    return jnp.transpose(x, (0, 4, 1, 2, 3))                # back to NCDHW


# ----------------------------------------------------------------------------
# Deterministic parameter init
# ----------------------------------------------------------------------------
def init_conv_params(key, cin, cout, k=(3, 3, 3)):
    kw_, kb = jax.random.split(key)
    fan_in = cin * k[0] * k[1] * k[2]
    w = jax.random.normal(kw_, (cout, cin, *k), jnp.float32) / jnp.sqrt(float(fan_in))
    b = 0.01 * jax.random.normal(kb, (cout,), jnp.float32)  # kept for interface parity
    gamma = jnp.ones((cout,), jnp.float32)                  # PyTorch affine-norm default
    beta = jnp.zeros((cout,), jnp.float32)
    return w, b, gamma, beta


if __name__ == "__main__":
    key = jax.random.PRNGKey(0)
    kx, k1, k2 = jax.random.split(key, 3)

    N, Cin, Cout = 2, 4, 8
    D = H = W = 8
    x = jax.random.normal(kx, (N, Cin, D, H, W), jnp.float32)

    down_params = init_conv_params(k1, Cin, Cout)
    conv_params = init_conv_params(k2, Cout, Cout)

    y = jax.jit(down_block)(x, down_params, conv_params)
    jax.block_until_ready(y)
    assert y.shape == (N, Cout, D // 2, H // 2, W // 2), y.shape
    assert bool(jnp.all(jnp.isfinite(y)))
    print("KERNEL_OK")
</pallas_src>

<mosaic_0001>
module attributes {stable_mosaic.version = 11 : i64} {
  func.func @_matmul_kernel(%arg0: i32, %arg1: memref<128x128xf32, #tpu.memory_space<vmem>>, %arg2: memref<128x128xf32, #tpu.memory_space<vmem>>, %arg3: memref<128x128xf32, #tpu.memory_space<vmem>>) attributes {dimension_semantics = [#tpu.dimension_semantics<parallel>], iteration_bounds = array<i64: 1>, scalar_prefetch = 0 : i64, scratch_operands = 0 : i64, tpu.core_type = #tpu.core_type<tc>, window_params = [{transform_indices = @transform_0, window_bounds = array<i64: 128, 128>}, {pipeline_mode = #tpu.pipeline_mode<synchronous>, transform_indices = @transform_1, window_bounds = array<i64: 128, 128>}, {transform_indices = @transform_2, window_bounds = array<i64: 128, 128>}]} {
    %c0 = arith.constant 0 : index
    %c0_0 = arith.constant 0 : index
    %0 = vector.load %arg1[%c0, %c0_0] : memref<128x128xf32, #tpu.memory_space<vmem>>, vector<128x128xf32>
    %c0_1 = arith.constant 0 : index
    %c0_2 = arith.constant 0 : index
    %1 = vector.load %arg2[%c0_1, %c0_2] : memref<128x128xf32, #tpu.memory_space<vmem>>, vector<128x128xf32>
    %cst = arith.constant dense<0.000000e+00> : vector<128x128xf32>
    %2 = tpu.matmul %0, %1, %cst {dimension_numbers = #tpu.dot_dimension_numbers<[1], [0], [0], [1], [0, 0, 1, 1], [], []>} : vector<128x128xf32>, vector<128x128xf32>, vector<128x128xf32> -> vector<128x128xf32>
    %c0_3 = arith.constant 0 : index
    %c0_4 = arith.constant 0 : index
    %3 = vector.load %arg3[%c0_3, %c0_4] : memref<128x128xf32, #tpu.memory_space<vmem>>, vector<128x128xf32>
    tpu.vector_store %arg3[%c0_3, %c0_4], %2 {strides = array<i32>} : memref<128x128xf32, #tpu.memory_space<vmem>>, vector<128x128xf32>,
    return
  }
  func.func @transform_0(%arg0: i32) -> (i32, i32) {
    %c0_i32 = arith.constant 0 : i32
    %c0_i32_0 = arith.constant 0 : i32
    return %arg0, %c0_i32 : i32, i32
  }
  func.func @transform_1(%arg0: i32) -> (i32, i32) {
    %c0_i32 = arith.constant 0 : i32
    %c0_i32_0 = arith.constant 0 : i32
    %c0_i32_1 = arith.constant 0 : i32
    return %c0_i32, %c0_i32_0 : i32, i32
  }
  func.func @transform_2(%arg0: i32) -> (i32, i32) {
    %c0_i32 = arith.constant 0 : i32
    %c0_i32_0 = arith.constant 0 : i32
    return %arg0, %c0_i32 : i32, i32
  }
}

module attributes {stable_mosaic.version = 11 : i64} {
  func.func @_in_stats_kernel(%arg0: i32, %arg1: i32, %arg2: memref<1x64x8xf32, #tpu.memory_space<vmem>>, %arg3: memref<1x1x8xf32, #tpu.memory_space<vmem>>, %arg4: memref<1x1x8xf32, #tpu.memory_space<vmem>>) attributes {dimension_semantics = [#tpu.dimension_semantics<parallel>, #tpu.dimension_semantics<arbitrary>], iteration_bounds = array<i64: 2, 1>, scalar_prefetch = 0 : i64, scratch_operands = 0 : i64, tpu.core_type = #tpu.core_type<tc>, window_params = [{transform_indices = @transform_0, window_bounds = array<i64: 1, 64, 8>}, {transform_indices = @transform_1, window_bounds = array<i64: 1, 1, 8>}, {transform_indices = @transform_2, window_bounds = array<i64: 1, 1, 8>}]} {
    %c0_i32 = arith.constant 0 : i32
    %0 = arith.cmpi eq, %arg1, %c0_i32 : i32
    %1 = arith.extui %0 : i1 to i32
    %c0_i32_0 = arith.constant 0 : i32
    %2 = arith.cmpi ne, %1, %c0_i32_0 : i32
    scf.if %2 {
      %cst_16 = arith.constant 0.000000e+00 : f32
      %22 = vector.broadcast %cst_16 : f32 to vector<1x8xf32>
      %c0_17 = arith.constant 0 : index
      %c0_18 = arith.constant 0 : index
      %c0_19 = arith.constant 0 : index
      %23 = vector.load %arg3[%c0_17, %c0_18, %c0_19] : memref<1x1x8xf32, #tpu.memory_space<vmem>>, vector<1x1x8xf32>
      %24 = vector.shape_cast %23 : vector<1x1x8xf32> to vector<1x8xf32>
      %25 = vector.shape_cast %22 : vector<1x8xf32> to vector<1x1x8xf32>
      tpu.vector_store %arg3[%c0_17, %c0_18, %c0_19], %25 {strides = array<i32>} : memref<1x1x8xf32, #tpu.memory_space<vmem>>, vector<1x1x8xf32>,
      %cst_20 = arith.constant 0.000000e+00 : f32
      %26 = vector.broadcast %cst_20 : f32 to vector<1x8xf32>
      %c0_21 = arith.constant 0 : index
      %c0_22 = arith.constant 0 : index
      %c0_23 = arith.constant 0 : index
      %27 = vector.load %arg4[%c0_21, %c0_22, %c0_23] : memref<1x1x8xf32, #tpu.memory_space<vmem>>, vector<1x1x8xf32>
      %28 = vector.shape_cast %27 : vector<1x1x8xf32> to vector<1x8xf32>
      %29 = vector.shape_cast %26 : vector<1x8xf32> to vector<1x1x8xf32>
      tpu.vector_store %arg4[%c0_21, %c0_22, %c0_23], %29 {strides = array<i32>} : memref<1x1x8xf32, #tpu.memory_space<vmem>>, vector<1x1x8xf32>,
    } else {
    }
    %c0 = arith.constant 0 : index
    %c0_1 = arith.constant 0 : index
    %c0_2 = arith.constant 0 : index
    %3 = vector.load %arg2[%c0, %c0_1, %c0_2] : memref<1x64x8xf32, #tpu.memory_space<vmem>>, vector<1x64x8xf32>
    %4 = vector.shape_cast %3 : vector<1x64x8xf32> to vector<64x8xf32>
    %c0_3 = arith.constant 0 : index
    %c0_4 = arith.constant 0 : index
    %c0_5 = arith.constant 0 : index
    %5 = vector.load %arg3[%c0_3, %c0_4, %c0_5] : memref<1x1x8xf32, #tpu.memory_space<vmem>>, vector<1x1x8xf32>
    %6 = vector.shape_cast %5 : vector<1x1x8xf32> to vector<1x8xf32>
    %cst = arith.constant dense<0.000000e+00> : vector<8xf32>
    %7 = vector.multi_reduction <add>, %4, %cst [0] : vector<64x8xf32> to vector<8xf32>
    %8 = vector.shape_cast %7 : vector<8xf32> to vector<1x8xf32>
    %9 = arith.addf %6, %8 : vector<1x8xf32>
    %c0_6 = arith.constant 0 : index
    %c0_7 = arith.constant 0 : index
    %c0_8 = arith.constant 0 : index
    %10 = vector.load %arg3[%c0_6, %c0_7, %c0_8] : memref<1x1x8xf32, #tpu.memory_space<vmem>>, vector<1x1x8xf32>
    %11 = vector.shape_cast %10 : vector<1x1x8xf32> to vector<1x8xf32>
    %12 = vector.shape_cast %9 : vector<1x8xf32> to vector<1x1x8xf32>
    tpu.vector_store %arg3[%c0_6, %c0_7, %c0_8], %12 {strides = array<i32>} : memref<1x1x8xf32, #tpu.memory_space<vmem>>, vector<1x1x8xf32>,
    %c0_9 = arith.constant 0 : index
    %c0_10 = arith.constant 0 : index
    %c0_11 = arith.constant 0 : index
    %13 = vector.load %arg4[%c0_9, %c0_10, %c0_11] : memref<1x1x8xf32, #tpu.memory_space<vmem>>, vector<1x1x8xf32>
    %14 = vector.shape_cast %13 : vector<1x1x8xf32> to vector<1x8xf32>
    %15 = arith.mulf %4, %4 : vector<64x8xf32>
    %cst_12 = arith.constant dense<0.000000e+00> : vector<8xf32>
    %16 = vector.multi_reduction <add>, %15, %cst_12 [0] : vector<64x8xf32> to vector<8xf32>
    %17 = vector.shape_cast %16 : vector<8xf32> to vector<1x8xf32>
    %18 = arith.addf %14, %17 : vector<1x8xf32>
    %c0_13 = arith.constant 0 : index
    %c0_14 = arith.constant 0 : index
    %c0_15 = arith.constant 0 : index
    %19 = vector.load %arg4[%c0_13, %c0_14, %c0_15] : memref<1x1x8xf32, #tpu.memory_space<vmem>>, vector<1x1x8xf32>
    %20 = vector.shape_cast %19 : vector<1x1x8xf32> to vector<1x8xf32>
    %21 = vector.shape_cast %18 : vector<1x8xf32> to vector<1x1x8xf32>
    tpu.vector_store %arg4[%c0_13, %c0_14, %c0_15], %21 {strides = array<i32>} : memref<1x1x8xf32, #tpu.memory_space<vmem>>, vector<1x1x8xf32>,
    return
  }
  func.func @transform_0(%arg0: i32, %arg1: i32) -> (i32, i32, i32) {
    %c0_i32 = arith.constant 0 : i32
    %c0_i32_0 = arith.constant 0 : i32
    return %arg0, %arg1, %c0_i32 : i32, i32, i32
  }
  func.func @transform_1(%arg0: i32, %arg1: i32) -> (i32, i32, i32) {
    %c0_i32 = arith.constant 0 : i32
    %c0_i32_0 = arith.constant 0 : i32
    %c0_i32_1 = arith.constant 0 : i32
    return %arg0, %c0_i32, %c0_i32_0 : i32, i32, i32
  }
  func.func @transform_2(%arg0: i32, %arg1: i32) -> (i32, i32, i32) {
    %c0_i32 = arith.constant 0 : i32
    %c0_i32_0 = arith.constant 0 : i32
    %c0_i32_1 = arith.constant 0 : i32
    return %arg0, %c0_i32, %c0_i32_0 : i32, i32, i32
  }
}

module attributes {stable_mosaic.version = 11 : i64} {
  func.func @_in_norm_lrelu_kernel(%arg0: i32, %arg1: i32, %arg2: memref<1x64x8xf32, #tpu.memory_space<vmem>>, %arg3: memref<1x1x8xf32, #tpu.memory_space<vmem>>, %arg4: memref<1x1x8xf32, #tpu.memory_space<vmem>>, %arg5: memref<1x8xf32, #tpu.memory_space<vmem>>, %arg6: memref<1x8xf32, #tpu.memory_space<vmem>>, %arg7: memref<1x64x8xf32, #tpu.memory_space<vmem>>) attributes {dimension_semantics = [#tpu.dimension_semantics<parallel>, #tpu.dimension_semantics<parallel>], iteration_bounds = array<i64: 2, 1>, scalar_prefetch = 0 : i64, scratch_operands = 0 : i64, tpu.core_type = #tpu.core_type<tc>, window_params = [{transform_indices = @transform_0, window_bounds = array<i64: 1, 64, 8>}, {transform_indices = @transform_1, window_bounds = array<i64: 1, 1, 8>}, {transform_indices = @transform_2, window_bounds = array<i64: 1, 1, 8>}, {pipeline_mode = #tpu.pipeline_mode<synchronous>, transform_indices = @transform_3, window_bounds = array<i64: 1, 8>}, {pipeline_mode = #tpu.pipeline_mode<synchronous>, transform_indices = @transform_4, window_bounds = array<i64: 1, 8>}, {transform_indices = @transform_5, window_bounds = array<i64: 1, 64, 8>}]} {
    %c0 = arith.constant 0 : index
    %c0_0 = arith.constant 0 : index
    %c0_1 = arith.constant 0 : index
    %0 = vector.load %arg2[%c0, %c0_0, %c0_1] : memref<1x64x8xf32, #tpu.memory_space<vmem>>, vector<1x64x8xf32>
    %1 = vector.shape_cast %0 : vector<1x64x8xf32> to vector<64x8xf32>
    %c0_2 = arith.constant 0 : index
    %c0_3 = arith.constant 0 : index
    %c0_4 = arith.constant 0 : index
    %2 = vector.load %arg3[%c0_2, %c0_3, %c0_4] : memref<1x1x8xf32, #tpu.memory_space<vmem>>, vector<1x1x8xf32>
    %3 = vector.shape_cast %2 : vector<1x1x8xf32> to vector<1x8xf32>
    %cst = arith.constant 1.562500e-02 : f32
    %4 = vector.broadcast %cst : f32 to vector<1x8xf32>
    %5 = arith.mulf %3, %4 : vector<1x8xf32>
    %c0_5 = arith.constant 0 : index
    %c0_6 = arith.constant 0 : index
    %c0_7 = arith.constant 0 : index
    %6 = vector.load %arg4[%c0_5, %c0_6, %c0_7] : memref<1x1x8xf32, #tpu.memory_space<vmem>>, vector<1x1x8xf32>
    %7 = vector.shape_cast %6 : vector<1x1x8xf32> to vector<1x8xf32>
    %cst_8 = arith.constant 1.562500e-02 : f32
    %8 = vector.broadcast %cst_8 : f32 to vector<1x8xf32>
    %9 = arith.mulf %7, %8 : vector<1x8xf32>
    %10 = arith.mulf %5, %5 : vector<1x8xf32>
    %11 = arith.subf %9, %10 : vector<1x8xf32>
    %cst_9 = arith.constant 0.000000e+00 : f32
    %12 = vector.broadcast %cst_9 : f32 to vector<1x8xf32>
    %13 = arith.maximumf %11, %12 : vector<1x8xf32>
    %cst_10 = arith.constant 9.99999974E-6 : f32
    %14 = vector.broadcast %cst_10 : f32 to vector<1x8xf32>
    %15 = arith.addf %13, %14 : vector<1x8xf32>
    %16 = math.rsqrt %15 : vector<1x8xf32>
    %17 = vector.broadcast %5 : vector<1x8xf32> to vector<64x8xf32>
    %18 = arith.subf %1, %17 : vector<64x8xf32>
    %c0_11 = arith.constant 0 : index
    %c0_12 = arith.constant 0 : index
    %19 = vector.load %arg5[%c0_11, %c0_12] : memref<1x8xf32, #tpu.memory_space<vmem>>, vector<1x8xf32>
    %20 = arith.mulf %16, %19 : vector<1x8xf32>
    %21 = vector.broadcast %20 : vector<1x8xf32> to vector<64x8xf32>
    %22 = arith.mulf %18, %21 : vector<64x8xf32>
    %c0_13 = arith.constant 0 : index
    %c0_14 = arith.constant 0 : index
    %23 = vector.load %arg6[%c0_13, %c0_14] : memref<1x8xf32, #tpu.memory_space<vmem>>, vector<1x8xf32>
    %24 = vector.broadcast %23 : vector<1x8xf32> to vector<64x8xf32>
    %25 = arith.addf %22, %24 : vector<64x8xf32>
    %cst_15 = arith.constant 0.000000e+00 : f32
    %26 = vector.broadcast %cst_15 : f32 to vector<64x8xf32>
    %27 = arith.cmpf oge, %25, %26 : vector<64x8xf32>
    %cst_16 = arith.constant 0.00999999977 : f32
    %28 = vector.broadcast %cst_16 : f32 to vector<64x8xf32>
    %29 = arith.mulf %28, %25 : vector<64x8xf32>
    %30 = arith.select %27, %25, %29 : vector<64x8xi1>, vector<64x8xf32>
    %c0_17 = arith.constant 0 : index
    %c0_18 = arith.constant 0 : index
    %c0_19 = arith.constant 0 : index
    %31 = vector.load %arg7[%c0_17, %c0_18, %c0_19] : memref<1x64x8xf32, #tpu.memory_space<vmem>>, vector<1x64x8xf32>
    %32 = vector.shape_cast %31 : vector<1x64x8xf32> to vector<64x8xf32>
    %33 = vector.shape_cast %30 : vector<64x8xf32> to vector<1x64x8xf32>
    tpu.vector_store %arg7[%c0_17, %c0_18, %c0_19], %33 {strides = array<i32>} : memref<1x64x8xf32, #tpu.memory_space<vmem>>, vector<1x64x8xf32>,
    return
  }
  func.func @transform_0(%arg0: i32, %arg1: i32) -> (i32, i32, i32) {
    %c0_i32 = arith.constant 0 : i32
    %c0_i32_0 = arith.constant 0 : i32
    return %arg0, %arg1, %c0_i32 : i32, i32, i32
  }
  func.func @transform_1(%arg0: i32, %arg1: i32) -> (i32, i32, i32) {
    %c0_i32 = arith.constant 0 : i32
    %c0_i32_0 = arith.constant 0 : i32
    %c0_i32_1 = arith.constant 0 : i32
    return %arg0, %c0_i32, %c0_i32_0 : i32, i32, i32
  }
  func.func @transform_2(%arg0: i32, %arg1: i32) -> (i32, i32, i32) {
    %c0_i32 = arith.constant 0 : i32
    %c0_i32_0 = arith.constant 0 : i32
    %c0_i32_1 = arith.constant 0 : i32
    return %arg0, %c0_i32, %c0_i32_0 : i32, i32, i32
  }
  func.func @transform_3(%arg0: i32, %arg1: i32) -> (i32, i32) {
    %c0_i32 = arith.constant 0 : i32
    %c0_i32_0 = arith.constant 0 : i32
    %c0_i32_1 = arith.constant 0 : i32
    return %c0_i32, %c0_i32_0 : i32, i32
  }
  func.func @transform_4(%arg0: i32, %arg1: i32) -> (i32, i32) {
    %c0_i32 = arith.constant 0 : i32
    %c0_i32_0 = arith.constant 0 : i32
    %c0_i32_1 = arith.constant 0 : i32
    return %c0_i32, %c0_i32_0 : i32, i32
  }
  func.func @transform_5(%arg0: i32, %arg1: i32) -> (i32, i32, i32) {
    %c0_i32 = arith.constant 0 : i32
    %c0_i32_0 = arith.constant 0 : i32
    return %arg0, %arg1, %c0_i32 : i32, i32, i32
  }
}

module attributes {stable_mosaic.version = 11 : i64} {
  func.func @_conv_s1_tap_kernel(%arg0: i32, %arg1: i32, %arg2: memref<1x1x36x8xf32, #tpu.memory_space<vmem>>, %arg3: memref<1x1x36x8xf32, #tpu.memory_space<vmem>>, %arg4: memref<1x1x36x8xf32, #tpu.memory_space<vmem>>, %arg5: memref<27x8x128xf32, #tpu.memory_space<vmem>>, %arg6: memref<1x1x22x128xf32, #tpu.memory_space<vmem>>) attributes {dimension_semantics = [#tpu.dimension_semantics<parallel>, #tpu.dimension_semantics<parallel>], iteration_bounds = array<i64: 2, 4>, scalar_prefetch = 0 : i64, scratch_operands = 0 : i64, tpu.core_type = #tpu.core_type<tc>, window_params = [{transform_indices = @transform_0, window_bounds = array<i64: 1, 1, 36, 8>}, {transform_indices = @transform_1, window_bounds = array<i64: 1, 1, 36, 8>}, {transform_indices = @transform_2, window_bounds = array<i64: 1, 1, 36, 8>}, {pipeline_mode = #tpu.pipeline_mode<synchronous>, transform_indices = @transform_3, window_bounds = array<i64: 27, 8, 128>}, {transform_indices = @transform_4, window_bounds = array<i64: 1, 1, 22, 128>}]} {
    %cst = arith.constant 0.000000e+00 : f32
    %0 = vector.broadcast %cst : f32 to vector<22x128xf32>
    %c0 = arith.constant 0 : index
    %c0_0 = arith.constant 0 : index
    %c0_1 = arith.constant 0 : index
    %c0_2 = arith.constant 0 : index
    %1 = vector.load %arg2[%c0, %c0_0, %c0_1, %c0_2] : memref<1x1x36x8xf32, #tpu.memory_space<vmem>>, vector<1x1x22x8xf32>
    %2 = vector.shape_cast %1 : vector<1x1x22x8xf32> to vector<22x8xf32>
    %c0_3 = arith.constant 0 : index
    %c0_4 = arith.constant 0 : index
    %c0_5 = arith.constant 0 : index
    %3 = vector.load %arg5[%c0_3, %c0_4, %c0_5] : memref<27x8x128xf32, #tpu.memory_space<vmem>>, vector<1x8x128xf32>
    %4 = vector.shape_cast %3 : vector<1x8x128xf32> to vector<8x128xf32>
    %cst_6 = arith.constant dense<0.000000e+00> : vector<22x128xf32>
    %5 = tpu.matmul %2, %4, %cst_6 {dimension_numbers = #tpu.dot_dimension_numbers<[1], [0], [0], [1], [0, 0, 1, 1], [], []>} : vector<22x8xf32>, vector<8x128xf32>, vector<22x128xf32> -> vector<22x128xf32>
    %6 = arith.addf %0, %5 : vector<22x128xf32>
    %c0_7 = arith.constant 0 : index
    %c0_8 = arith.constant 0 : index
    %c1 = arith.constant 1 : index
    %c0_9 = arith.constant 0 : index
    %7 = vector.load %arg2[%c0_7, %c0_8, %c1, %c0_9] : memref<1x1x36x8xf32, #tpu.memory_space<vmem>>, vector<1x1x22x8xf32>
    %8 = vector.shape_cast %7 : vector<1x1x22x8xf32> to vector<22x8xf32>
    %c1_10 = arith.constant 1 : index
    %c0_11 = arith.constant 0 : index
    %c0_12 = arith.constant 0 : index
    %9 = vector.load %arg5[%c1_10, %c0_11, %c0_12] : memref<27x8x128xf32, #tpu.memory_space<vmem>>, vector<1x8x128xf32>
    %10 = vector.shape_cast %9 : vector<1x8x128xf32> to vector<8x128xf32>
    %cst_13 = arith.constant dense<0.000000e+00> : vector<22x128xf32>
    %11 = tpu.matmul %8, %10, %cst_13 {dimension_numbers = #tpu.dot_dimension_numbers<[1], [0], [0], [1], [0, 0, 1, 1], [], []>} : vector<22x8xf32>, vector<8x128xf32>, vector<22x128xf32> -> vector<22x128xf32>
    %12 = arith.addf %6, %11 : vector<22x128xf32>
    %c0_14 = arith.constant 0 : index
    %c0_15 = arith.constant 0 : index
    %c2 = arith.constant 2 : index
    %c0_16 = arith.constant 0 : index
    %13 = vector.load %arg2[%c0_14, %c0_15, %c2, %c0_16] : memref<1x1x36x8xf32, #tpu.memory_space<vmem>>, vector<1x1x22x8xf32>
    %14 = vector.shape_cast %13 : vector<1x1x22x8xf32> to vector<22x8xf32>
    %c2_17 = arith.constant 2 : index
    %c0_18 = arith.constant 0 : index
    %c0_19 = arith.constant 0 : index
    %15 = vector.load %arg5[%c2_17, %c0_18, %c0_19] : memref<27x8x128xf32, #tpu.memory_space<vmem>>, vector<1x8x128xf32>
    %16 = vector.shape_cast %15 : vector<1x8x128xf32> to vector<8x128xf32>
    %cst_20 = arith.constant dense<0.000000e+00> : vector<22x128xf32>
    %17 = tpu.matmul %14, %16, %cst_20 {dimension_numbers = #tpu.dot_dimension_numbers<[1], [0], [0], [1], [0, 0, 1, 1], [], []>} : vector<22x8xf32>, vector<8x128xf32>, vector<22x128xf32> -> vector<22x128xf32>
    %18 = arith.addf %12, %17 : vector<22x128xf32>
    %c0_21 = arith.constant 0 : index
    %c0_22 = arith.constant 0 : index
    %c6 = arith.constant 6 : index
    %c0_23 = arith.constant 0 : index
    %19 = vector.load %arg2[%c0_21, %c0_22, %c6, %c0_23] : memref<1x1x36x8xf32, #tpu.memory_space<vmem>>, vector<1x1x22x8xf32>
    %20 = vector.shape_cast %19 : vector<1x1x22x8xf32> to vector<22x8xf32>
    %c3 = arith.constant 3 : index
    %c0_24 = arith.constant 0 : index
    %c0_25 = arith.constant 0 : index
    %21 = vector.load %arg5[%c3, %c0_24, %c0_25] : memref<27x8x128xf32, #tpu.memory_space<vmem>>, vector<1x8x128xf32>
    %22 = vector.shape_cast %21 : vector<1x8x128xf32> to vector<8x128xf32>
    %cst_26 = arith.constant dense<0.000000e+00> : vector<22x128xf32>
    %23 = tpu.matmul %20, %22, %cst_26 {dimension_numbers = #tpu.dot_dimension_numbers<[1], [0], [0], [1], [0, 0, 1, 1], [], []>} : vector<22x8xf32>, vector<8x128xf32>, vector<22x128xf32> -> vector<22x128xf32>
    %24 = arith.addf %18, %23 : vector<22x128xf32>
    %c0_27 = arith.constant 0 : index
    %c0_28 = arith.constant 0 : index
    %c7 = arith.constant 7 : index
    %c0_29 = arith.constant 0 : index
    %25 = vector.load %arg2[%c0_27, %c0_28, %c7, %c0_29] : memref<1x1x36x8xf32, #tpu.memory_space<vmem>>, vector<1x1x22x8xf32>
    %26 = vector.shape_cast %25 : vector<1x1x22x8xf32> to vector<22x8xf32>
    %c4 = arith.constant 4 : index
    %c0_30 = arith.constant 0 : index
    %c0_31 = arith.constant 0 : index
    %27 = vector.load %arg5[%c4, %c0_30, %c0_31] : memref<27x8x128xf32, #tpu.memory_space<vmem>>, vector<1x8x128xf32>
    %28 = vector.shape_cast %27 : vector<1x8x128xf32> to vector<8x128xf32>
    %cst_32 = arith.constant dense<0.000000e+00> : vector<22x128xf32>
    %29 = tpu.matmul %26, %28, %cst_32 {dimension_numbers = #tpu.dot_dimension_numbers<[1], [0], [0], [1], [0, 0, 1, 1], [], []>} : vector<22x8xf32>, vector<8x128xf32>, vector<22x128xf32> -> vector<22x128xf32>
    %30 = arith.addf %24, %29 : vector<22x128xf32>
    %c0_33 = arith.constant 0 : index
    %c0_34 = arith.constant 0 : index
    %c8 = arith.constant 8 : index
    %c0_35 = arith.constant 0 : index
    %31 = vector.load %arg2[%c0_33, %c0_34, %c8, %c0_35] : memref<1x1x36x8xf32, #tpu.memory_space<vmem>>, vector<1x1x22x8xf32>
    %32 = vector.shape_cast %31 : vector<1x1x22x8xf32> to vector<22x8xf32>
    %c5 = arith.constant 5 : index
    %c0_36 = arith.constant 0 : index
    %c0_37 = arith.constant 0 : index
    %33 = vector.load %arg5[%c5, %c0_36, %c0_37] : memref<27x8x128xf32, #tpu.memory_space<vmem>>, vector<1x8x128xf32>
    %34 = vector.shape_cast %33 : vector<1x8x128xf32> to vector<8x128xf32>
    %cst_38 = arith.constant dense<0.000000e+00> : vector<22x128xf32>
    %35 = tpu.matmul %32, %34, %cst_38 {dimension_numbers = #tpu.dot_dimension_numbers<[1], [0], [0], [1], [0, 0, 1, 1], [], []>} : vector<22x8xf32>, vector<8x128xf32>, vector<22x128xf32> -> vector<22x128xf32>
    %36 = arith.addf %30, %35 : vector<22x128xf32>
    %c0_39 = arith.constant 0 : index
    %c0_40 = arith.constant 0 : index
    %c12 = arith.constant 12 : index
    %c0_41 = arith.constant 0 : index
    %37 = vector.load %arg2[%c0_39, %c0_40, %c12, %c0_41] : memref<1x1x36x8xf32, #tpu.memory_space<vmem>>, vector<1x1x22x8xf32>
    %38 = vector.shape_cast %37 : vector<1x1x22x8xf32> to vector<22x8xf32>
    %c6_42 = arith.constant 6 : index
    %c0_43 = arith.constant 0 : index
    %c0_44 = arith.constant 0 : index
    %39 = vector.load %arg5[%c6_42, %c0_43, %c0_44] : memref<27x8x128xf32, #tpu.memory_space<vmem>>, vector<1x8x128xf32>
    %40 = vector.shape_cast %39 : vector<1x8x128xf32> to vector<8x128xf32>
    %cst_45 = arith.constant dense<0.000000e+00> : vector<22x128xf32>
    %41 = tpu.matmul %38, %40, %cst_45 {dimension_numbers = #tpu.dot_dimension_numbers<[1], [0], [0], [1], [0, 0, 1, 1], [], []>} : vector<22x8xf32>, vector<8x128xf32>, vector<22x128xf32> -> vector<22x128xf32>
    %42 = arith.addf %36, %41 : vector<22x128xf32>
    %c0_46 = arith.constant 0 : index
    %c0_47 = arith.constant 0 : index
    %c13 = arith.constant 13 : index
    %c0_48 = arith.constant 0 : index
    %43 = vector.load %arg2[%c0_46, %c0_47, %c13, %c0_48] : memref<1x1x36x8xf32, #tpu.memory_space<vmem>>, vector<1x1x22x8xf32>
    %44 = vector.shape_cast %43 : vector<1x1x22x8xf32> to vector<22x8xf32>
    %c7_49 = arith.constant 7 : index
    %c0_50 = arith.constant 0 : index
    %c0_51 = arith.constant 0 : index
    %45 = vector.load %arg5[%c7_49, %c0_50, %c0_51] : memref<27x8x128xf32, #tpu.memory_space<vmem>>, vector<1x8x128xf32>
    %46 = vector.shape_cast %45 : vector<1x8x128xf32> to vector<8x128xf32>
    %cst_52 = arith.constant dense<0.000000e+00> : vector<22x128xf32>
    %47 = tpu.matmul %44, %46, %cst_52 {dimension_numbers = #tpu.dot_dimension_numbers<[1], [0], [0], [1], [0, 0, 1, 1], [], []>} : vector<22x8xf32>, vector<8x128xf32>, vector<22x128xf32> -> vector<22x128xf32>
    %48 = arith.addf %42, %47 : vector<22x128xf32>
    %c0_53 = arith.constant 0 : index
    %c0_54 = arith.constant 0 : index
    %c14 = arith.constant 14 : index
    %c0_55 = arith.constant 0 : index
    %49 = vector.load %arg2[%c0_53, %c0_54, %c14, %c0_55] : memref<1x1x36x8xf32, #tpu.memory_space<vmem>>, vector<1x1x22x8xf32>
    %50 = vector.shape_cast %49 : vector<1x1x22x8xf32> to vector<22x8xf32>
    %c8_56 = arith.constant 8 : index
    %c0_57 = arith.constant 0 : index
    %c0_58 = arith.constant 0 : index
    %51 = vector.load %arg5[%c8_56, %c0_57, %c0_58] : memref<27x8x128xf32, #tpu.memory_space<vmem>>, vector<1x8x128xf32>
    %52 = vector.shape_cast %51 : vector<1x8x128xf32> to vector<8x128xf32>
    %cst_59 = arith.constant dense<0.000000e+00> : vector<22x128xf32>
    %53 = tpu.matmul %50, %52, %cst_59 {dimension_numbers = #tpu.dot_dimension_numbers<[1], [0], [0], [1], [0, 0, 1, 1], [], []>} : vector<22x8xf32>, vector<8x128xf32>, vector<22x128xf32> -> vector<22x128xf32>
    %54 = arith.addf %48, %53 : vector<22x128xf32>
    %c0_60 = arith.constant 0 : index
    %c0_61 = arith.constant 0 : index
    %c0_62 = arith.constant 0 : index
    %c0_63 = arith.constant 0 : index
    %55 = vector.load %arg3[%c0_60, %c0_61, %c0_62, %c0_63] : memref<1x1x36x8xf32, #tpu.memory_space<vmem>>, vector<1x1x22x8xf32>
    %56 = vector.shape_cast %55 : vector<1x1x22x8xf32> to vector<22x8xf32>
    %c9 = arith.constant 9 : index
    %c0_64 = arith.constant 0 : index
    %c0_65 = arith.constant 0 : index
    %57 = vector.load %arg5[%c9, %c0_64, %c0_65] : memref<27x8x128xf32, #tpu.memory_space<vmem>>, vector<1x8x128xf32>
    %58 = vector.shape_cast %57 : vector<1x8x128xf32> to vector<8x128xf32>
    %cst_66 = arith.constant dense<0.000000e+00> : vector<22x128xf32>
    %59 = tpu.matmul %56, %58, %cst_66 {dimension_numbers = #tpu.dot_dimension_numbers<[1], [0], [0], [1], [0, 0, 1, 1], [], []>} : vector<22x8xf32>, vector<8x128xf32>, vector<22x128xf32> -> vector<22x128xf32>
    %60 = arith.addf %54, %59 : vector<22x128xf32>
    %c0_67 = arith.constant 0 : index
    %c0_68 = arith.constant 0 : index
    %c1_69 = arith.constant 1 : index
    %c0_70 = arith.constant 0 : index
    %61 = vector.load %arg3[%c0_67, %c0_68, %c1_69, %c0_70] : memref<1x1x36x8xf32, #tpu.memory_space<vmem>>, vector<1x1x22x8xf32>
    %62 = vector.shape_cast %61 : vector<1x1x22x8xf32> to vector<22x8xf32>
    %c10 = arith.constant 10 : index
    %c0_71 = arith.constant 0 : index
    %c0_72 = arith.constant 0 : index
    %63 = vector.load %arg5[%c10, %c0_71, %c0_72] : memref<27x8x128xf32, #tpu.memory_space<vmem>>, vector<1x8x128xf32>
    %64 = vector.shape_cast %63 : vector<1x8x128xf32> to vector<8x128xf32>
    %cst_73 = arith.constant dense<0.000000e+00> : vector<22x128xf32>
    %65 = tpu.matmul %62, %64, %cst_73 {dimension_numbers = #tpu.dot_dimension_numbers<[1], [0], [0], [1], [0, 0, 1, 1], [], []>} : vector<22x8xf32>, vector<8x128xf32>, vector<22x128xf32> -> vector<22x128xf32>
    %66 = arith.addf %60, %65 : vector<22x128xf32>
    %c0_74 = arith.constant 0 : index
    %c0_75 = arith.constant 0 : index
    %c2_76 = arith.constant 2 : index
    %c0_77 = arith.constant 0 : index
    %67 = vector.load %arg3[%c0_74, %c0_75, %c2_76, %c0_77] : memref<1x1x36x8xf32, #tpu.memory_space<vmem>>, vector<1x1x22x8xf32>
    %68 = vector.shape_cast %67 : vector<1x1x22x8xf32> to vector<22x8xf32>
    %c11 = arith.constant 11 : index
    %c0_78 = arith.constant 0 : index
    %c0_79 = arith.constant 0 : index
    %69 = vector.load %arg5[%c11, %c0_78, %c0_79] : memref<27x8x128xf32, #tpu.memory_space<vmem>>, vector<1x8x128xf32>
    %70 = vector.shape_cast %69 : vector<1x8x128xf32> to vector<8x128xf32>
    %cst_80 = arith.constant dense<0.000000e+00> : vector<22x128xf32>
    %71 = tpu.matmul %68, %70, %cst_80 {dimension_numbers = #tpu.dot_dimension_numbers<[1], [0], [0], [1], [0, 0, 1, 1], [], []>} : vector<22x8xf32>, vector<8x128xf32>, vector<22x128xf32> -> vector<22x128xf32>
    %72 = arith.addf %66, %71 : vector<22x128xf32>
    %c0_81 = arith.constant 0 : index
    %c0_82 = arith.constant 0 : index
    %c6_83 = arith.constant 6 : index
    %c0_84 = arith.constant 0 : index
    %73 = vector.load %arg3[%c0_81, %c0_82, %c6_83, %c0_84] : memref<1x1x36x8xf32, #tpu.memory_space<vmem>>, vector<1x1x22x8xf32>
    %74 = vector.shape_cast %73 : vector<1x1x22x8xf32> to vector<22x8xf32>
    %c12_85 = arith.constant 12 : index
    %c0_86 = arith.constant 0 : index
    %c0_87 = arith.constant 0 : index
    %75 = vector.load %arg5[%c12_85, %c0_86, %c0_87] : memref<27x8x128xf32, #tpu.memory_space<vmem>>, vector<1x8x128xf32>
    %76 = vector.shape_cast %75 : vector<1x8x128xf32> to vector<8x128xf32>
    %cst_88 = arith.constant dense<0.000000e+00> : vector<22x128xf32>
    %77 = tpu.matmul %74, %76, %cst_88 {dimension_numbers = #tpu.dot_dimension_numbers<[1], [0], [0], [1], [0, 0, 1, 1], [], []>} : vector<22x8xf32>, vector<8x128xf32>, vector<22x128xf32> -> vector<22x128xf32>
    %78 = arith.addf %72, %77 : vector<22x128xf32>
    %c0_89 = arith.constant 0 : index
    %c0_90 = arith.constant 0 : index
    %c7_91 = arith.constant 7 : index
    %c0_92 = arith.constant 0 : index
    %79 = vector.load %arg3[%c0_89, %c0_90, %c7_91, %c0_92] : memref<1x1x36x8xf32, #tpu.memory_space<vmem>>, vector<1x1x22x8xf32>
    %80 = vector.shape_cast %79 : vector<1x1x22x8xf32> to vector<22x8xf32>
    %c13_93 = arith.constant 13 : index
    %c0_94 = arith.constant 0 : index
    %c0_95 = arith.constant 0 : index
    %81 = vector.load %arg5[%c13_93, %c0_94, %c0_95] : memref<27x8x128xf32, #tpu.memory_space<vmem>>, vector<1x8x128xf32>
    %82 = vector.shape_cast %81 : vector<1x8x128xf32> to vector<8x128xf32>
    %cst_96 = arith.constant dense<0.000000e+00> : vector<22x128xf32>
    %83 = tpu.matmul %80, %82, %cst_96 {dimension_numbers = #tpu.dot_dimension_numbers<[1], [0], [0], [1], [0, 0, 1, 1], [], []>} : vector<22x8xf32>, vector<8x128xf32>, vector<22x128xf32> -> vector<22x128xf32>
    %84 = arith.addf %78, %83 : vector<22x128xf32>
    %c0_97 = arith.constant 0 : index
    %c0_98 = arith.constant 0 : index
    %c8_99 = arith.constant 8 : index
    %c0_100 = arith.constant 0 : index
    %85 = vector.load %arg3[%c0_97, %c0_98, %c8_99, %c0_100] : memref<1x1x36x8xf32, #tpu.memory_space<vmem>>, vector<1x1x22x8xf32>
    %86 = vector.shape_cast %85 : vector<1x1x22x8xf32> to vector<22x8xf32>
    %c14_101 = arith.constant 14 : index
    %c0_102 = arith.constant 0 : index
    %c0_103 = arith.constant 0 : index
    %87 = vector.load %arg5[%c14_101, %c0_102, %c0_103] : memref<27x8x128xf32, #tpu.memory_space<vmem>>, vector<1x8x128xf32>
    %88 = vector.shape_cast %87 : vector<1x8x128xf32> to vector<8x128xf32>
    %cst_104 = arith.constant dense<0.000000e+00> : vector<22x128xf32>
    %89 = tpu.matmul %86, %88, %cst_104 {dimension_numbers = #tpu.dot_dimension_numbers<[1], [0], [0], [1], [0, 0, 1, 1], [], []>} : vector<22x8xf32>, vector<8x128xf32>, vector<22x128xf32> -> vector<22x128xf32>
    %90 = arith.addf %84, %89 : vector<22x128xf32>
    %c0_105 = arith.constant 0 : index
    %c0_106 = arith.constant 0 : index
    %c12_107 = arith.constant 12 : index
    %c0_108 = arith.constant 0 : index
    %91 = vector.load %arg3[%c0_105, %c0_106, %c12_107, %c0_108] : memref<1x1x36x8xf32, #tpu.memory_space<vmem>>, vector<1x1x22x8xf32>
    %92 = vector.shape_cast %91 : vector<1x1x22x8xf32> to vector<22x8xf32>
    %c15 = arith.constant 15 : index
    %c0_109 = arith.constant 0 : index
    %c0_110 = arith.constant 0 : index
    %93 = vector.load %arg5[%c15, %c0_109, %c0_110] : memref<27x8x128xf32, #tpu.memory_space<vmem>>, vector<1x8x128xf32>
    %94 = vector.shape_cast %93 : vector<1x8x128xf32> to vector<8x128xf32>
    %cst_111 = arith.constant dense<0.000000e+00> : vector<22x128xf32>
    %95 = tpu.matmul %92, %94, %cst_111 {dimension_numbers = #tpu.dot_dimension_numbers<[1], [0], [0], [1], [0, 0, 1, 1], [], []>} : vector<22x8xf32>, vector<8x128xf32>, vector<22x128xf32> -> vector<22x128xf32>
    %96 = arith.addf %90, %95 : vector<22x128xf32>
    %c0_112 = arith.constant 0 : index
    %c0_113 = arith.constant 0 : index
    %c13_114 = arith.constant 13 : index
    %c0_115 = arith.constant 0 : index
    %97 = vector.load %arg3[%c0_112, %c0_113, %c13_114, %c0_115] : memref<1x1x36x8xf32, #tpu.memory_space<vmem>>, vector<1x1x22x8xf32>
    %98 = vector.shape_cast %97 : vector<1x1x22x8xf32> to vector<22x8xf32>
    %c16 = arith.constant 16 : index
    %c0_116 = arith.constant 0 : index
    %c0_117 = arith.constant 0 : index
    %99 = vector.load %arg5[%c16, %c0_116, %c0_117] : memref<27x8x128xf32, #tpu.memory_space<vmem>>, vector<1x8x128xf32>
    %100 = vector.shape_cast %99 : vector<1x8x128xf32> to vector<8x128xf32>
    %cst_118 = arith.constant dense<0.000000e+00> : vector<22x128xf32>
    %101 = tpu.matmul %98, %100, %cst_118 {dimension_numbers = #tpu.dot_dimension_numbers<[1], [0], [0], [1], [0, 0, 1, 1], [], []>} : vector<22x8xf32>, vector<8x128xf32>, vector<22x128xf32> -> vector<22x128xf32>
    %102 = arith.addf %96, %101 : vector<22x128xf32>
    %c0_119 = arith.constant 0 : index
    %c0_120 = arith.constant 0 : index
    %c14_121 = arith.constant 14 : index
    %c0_122 = arith.constant 0 : index
    %103 = vector.load %arg3[%c0_119, %c0_120, %c14_121, %c0_122] : memref<1x1x36x8xf32, #tpu.memory_space<vmem>>, vector<1x1x22x8xf32>
    %104 = vector.shape_cast %103 : vector<1x1x22x8xf32> to vector<22x8xf32>
    %c17 = arith.constant 17 : index
    %c0_123 = arith.constant 0 : index
    %c0_124 = arith.constant 0 : index
    %105 = vector.load %arg5[%c17, %c0_123, %c0_124] : memref<27x8x128xf32, #tpu.memory_space<vmem>>, vector<1x8x128xf32>
    %106 = vector.shape_cast %105 : vector<1x8x128xf32> to vector<8x128xf32>
    %cst_125 = arith.constant dense<0.000000e+00> : vector<22x128xf32>
    %107 = tpu.matmul %104, %106, %cst_125 {dimension_numbers = #tpu.dot_dimension_numbers<[1], [0], [0], [1], [0, 0, 1, 1], [], []>} : vector<22x8xf32>, vector<8x128xf32>, vector<22x128xf32> -> vector<22x128xf32>
    %108 = arith.addf %102, %107 : vector<22x128xf32>
    %c0_126 = arith.constant 0 : index
    %c0_127 = arith.constant 0 : index
    %c0_128 = arith.constant 0 : index
    %c0_129 = arith.constant 0 : index
    %109 = vector.load %arg4[%c0_126, %c0_127, %c0_128, %c0_129] : memref<1x1x36x8xf32, #tpu.memory_space<vmem>>, vector<1x1x22x8xf32>
    %110 = vector.shape_cast %109 : vector<1x1x22x8xf32> to vector<22x8xf32>
    %c18 = arith.constant 18 : index
    %c0_130 = arith.constant 0 : index
    %c0_131 = arith.constant 0 : index
    %111 = vector.load %arg5[%c18, %c0_130, %c0_131] : memref<27x8x128xf32, #tpu.memory_space<vmem>>, vector<1x8x128xf32>
    %112 = vector.shape_cast %111 : vector<1x8x128xf32> to vector<8x128xf32>
    %cst_132 = arith.constant dense<0.000000e+00> : vector<22x128xf32>
    %113 = tpu.matmul %110, %112, %cst_132 {dimension_numbers = #tpu.dot_dimension_numbers<[1], [0], [0], [1], [0, 0, 1, 1], [], []>} : vector<22x8xf32>, vector<8x128xf32>, vector<22x128xf32> -> vector<22x128xf32>
    %114 = arith.addf %108, %113 : vector<22x128xf32>
    %c0_133 = arith.constant 0 : index
    %c0_134 = arith.constant 0 : index
    %c1_135 = arith.constant 1 : index
    %c0_136 = arith.constant 0 : index
    %115 = vector.load %arg4[%c0_133, %c0_134, %c1_135, %c0_136] : memref<1x1x36x8xf32, #tpu.memory_space<vmem>>, vector<1x1x22x8xf32>
    %116 = vector.shape_cast %115 : vector<1x1x22x8xf32> to vector<22x8xf32>
    %c19 = arith.constant 19 : index
    %c0_137 = arith.constant 0 : index
    %c0_138 = arith.constant 0 : index
    %117 = vector.load %arg5[%c19, %c0_137, %c0_138] : memref<27x8x128xf32, #tpu.memory_space<vmem>>, vector<1x8x128xf32>
    %118 = vector.shape_cast %117 : vector<1x8x128xf32> to vector<8x128xf32>
    %cst_139 = arith.constant dense<0.000000e+00> : vector<22x128xf32>
    %119 = tpu.matmul %116, %118, %cst_139 {dimension_numbers = #tpu.dot_dimension_numbers<[1], [0], [0], [1], [0, 0, 1, 1], [], []>} : vector<22x8xf32>, vector<8x128xf32>, vector<22x128xf32> -> vector<22x128xf32>
    %120 = arith.addf %114, %119 : vector<22x128xf32>
    %c0_140 = arith.constant 0 : index
    %c0_141 = arith.constant 0 : index
    %c2_142 = arith.constant 2 : index
    %c0_143 = arith.constant 0 : index
    %121 = vector.load %arg4[%c0_140, %c0_141, %c2_142, %c0_143] : memref<1x1x36x8xf32, #tpu.memory_space<vmem>>, vector<1x1x22x8xf32>
    %122 = vector.shape_cast %121 : vector<1x1x22x8xf32> to vector<22x8xf32>
    %c20 = arith.constant 20 : index
    %c0_144 = arith.constant 0 : index
    %c0_145 = arith.constant 0 : index
    %123 = vector.load %arg5[%c20, %c0_144, %c0_145] : memref<27x8x128xf32, #tpu.memory_space<vmem>>, vector<1x8x128xf32>
    %124 = vector.shape_cast %123 : vector<1x8x128xf32> to vector<8x128xf32>
    %cst_146 = arith.constant dense<0.000000e+00> : vector<22x128xf32>
    %125 = tpu.matmul %122, %124, %cst_146 {dimension_numbers = #tpu.dot_dimension_numbers<[1], [0], [0], [1], [0, 0, 1, 1], [], []>} : vector<22x8xf32>, vector<8x128xf32>, vector<22x128xf32> -> vector<22x128xf32>
    %126 = arith.addf %120, %125 : vector<22x128xf32>
    %c0_147 = arith.constant 0 : index
    %c0_148 = arith.constant 0 : index
    %c6_149 = arith.constant 6 : index
    %c0_150 = arith.constant 0 : index
    %127 = vector.load %arg4[%c0_147, %c0_148, %c6_149, %c0_150] : memref<1x1x36x8xf32, #tpu.memory_space<vmem>>, vector<1x1x22x8xf32>
    %128 = vector.shape_cast %127 : vector<1x1x22x8xf32> to vector<22x8xf32>
    %c21 = arith.constant 21 : index
    %c0_151 = arith.constant 0 : index
    %c0_152 = arith.constant 0 : index
    %129 = vector.load %arg5[%c21, %c0_151, %c0_152] : memref<27x8x128xf32, #tpu.memory_space<vmem>>, vector<1x8x128xf32>
    %130 = vector.shape_cast %129 : vector<1x8x128xf32> to vector<8x128xf32>
    %cst_153 = arith.constant dense<0.000000e+00> : vector<22x128xf32>
    %131 = tpu.matmul %128, %130, %cst_153 {dimension_numbers = #tpu.dot_dimension_numbers<[1], [0], [0], [1], [0, 0, 1, 1], [], []>} : vector<22x8xf32>, vector<8x128xf32>, vector<22x128xf32> -> vector<22x128xf32>
    %132 = arith.addf %126, %131 : vector<22x128xf32>
    %c0_154 = arith.constant 0 : index
    %c0_155 = arith.constant 0 : index
    %c7_156 = arith.constant 7 : index
    %c0_157 = arith.constant 0 : index
    %133 = vector.load %arg4[%c0_154, %c0_155, %c7_156, %c0_157] : memref<1x1x36x8xf32, #tpu.memory_space<vmem>>, vector<1x1x22x8xf32>
    %134 = vector.shape_cast %133 : vector<1x1x22x8xf32> to vector<22x8xf32>
    %c22 = arith.constant 22 : index
    %c0_158 = arith.constant 0 : index
    %c0_159 = arith.constant 0 : index
    %135 = vector.load %arg5[%c22, %c0_158, %c0_159] : memref<27x8x128xf32, #tpu.memory_space<vmem>>, vector<1x8x128xf32>
    %136 = vector.shape_cast %135 : vector<1x8x128xf32> to vector<8x128xf32>
    %cst_160 = arith.constant dense<0.000000e+00> : vector<22x128xf32>
    %137 = tpu.matmul %134, %136, %cst_160 {dimension_numbers = #tpu.dot_dimension_numbers<[1], [0], [0], [1], [0, 0, 1, 1], [], []>} : vector<22x8xf32>, vector<8x128xf32>, vector<22x128xf32> -> vector<22x128xf32>
    %138 = arith.addf %132, %137 : vector<22x128xf32>
    %c0_161 = arith.constant 0 : index
    %c0_162 = arith.constant 0 : index
    %c8_163 = arith.constant 8 : index
    %c0_164 = arith.constant 0 : index
    %139 = vector.load %arg4[%c0_161, %c0_162, %c8_163, %c0_164] : memref<1x1x36x8xf32, #tpu.memory_space<vmem>>, vector<1x1x22x8xf32>
    %140 = vector.shape_cast %139 : vector<1x1x22x8xf32> to vector<22x8xf32>
    %c23 = arith.constant 23 : index
    %c0_165 = arith.constant 0 : index
    %c0_166 = arith.constant 0 : index
    %141 = vector.load %arg5[%c23, %c0_165, %c0_166] : memref<27x8x128xf32, #tpu.memory_space<vmem>>, vector<1x8x128xf32>
    %142 = vector.shape_cast %141 : vector<1x8x128xf32> to vector<8x128xf32>
    %cst_167 = arith.constant dense<0.000000e+00> : vector<22x128xf32>
    %143 = tpu.matmul %140, %142, %cst_167 {dimension_numbers = #tpu.dot_dimension_numbers<[1], [0], [0], [1], [0, 0, 1, 1], [], []>} : vector<22x8xf32>, vector<8x128xf32>, vector<22x128xf32> -> vector<22x128xf32>
    %144 = arith.addf %138, %143 : vector<22x128xf32>
    %c0_168 = arith.constant 0 : index
    %c0_169 = arith.constant 0 : index
    %c12_170 = arith.constant 12 : index
    %c0_171 = arith.constant 0 : index
    %145 = vector.load %arg4[%c0_168, %c0_169, %c12_170, %c0_171] : memref<1x1x36x8xf32, #tpu.memory_space<vmem>>, vector<1x1x22x8xf32>
    %146 = vector.shape_cast %145 : vector<1x1x22x8xf32> to vector<22x8xf32>
    %c24 = arith.constant 24 : index
    %c0_172 = arith.constant 0 : index
    %c0_173 = arith.constant 0 : index
    %147 = vector.load %arg5[%c24, %c0_172, %c0_173] : memref<27x8x128xf32, #tpu.memory_space<vmem>>, vector<1x8x128xf32>
    %148 = vector.shape_cast %147 : vector<1x8x128xf32> to vector<8x128xf32>
    %cst_174 = arith.constant dense<0.000000e+00> : vector<22x128xf32>
    %149 = tpu.matmul %146, %148, %cst_174 {dimension_numbers = #tpu.dot_dimension_numbers<[1], [0], [0], [1], [0, 0, 1, 1], [], []>} : vector<22x8xf32>, vector<8x128xf32>, vector<22x128xf32> -> vector<22x128xf32>
    %150 = arith.addf %144, %149 : vector<22x128xf32>
    %c0_175 = arith.constant 0 : index
    %c0_176 = arith.constant 0 : index
    %c13_177 = arith.constant 13 : index
    %c0_178 = arith.constant 0 : index
    %151 = vector.load %arg4[%c0_175, %c0_176, %c13_177, %c0_178] : memref<1x1x36x8xf32, #tpu.memory_space<vmem>>, vector<1x1x22x8xf32>
    %152 = vector.shape_cast %151 : vector<1x1x22x8xf32> to vector<22x8xf32>
    %c25 = arith.constant 25 : index
    %c0_179 = arith.constant 0 : index
    %c0_180 = arith.constant 0 : index
    %153 = vector.load %arg5[%c25, %c0_179, %c0_180] : memref<27x8x128xf32, #tpu.memory_space<vmem>>, vector<1x8x128xf32>
    %154 = vector.shape_cast %153 : vector<1x8x128xf32> to vector<8x128xf32>
    %cst_181 = arith.constant dense<0.000000e+00> : vector<22x128xf32>
    %155 = tpu.matmul %152, %154, %cst_181 {dimension_numbers = #tpu.dot_dimension_numbers<[1], [0], [0], [1], [0, 0, 1, 1], [], []>} : vector<22x8xf32>, vector<8x128xf32>, vector<22x128xf32> -> vector<22x128xf32>
    %156 = arith.addf %150, %155 : vector<22x128xf32>
    %c0_182 = arith.constant 0 : index
    %c0_183 = arith.constant 0 : index
    %c14_184 = arith.constant 14 : index
    %c0_185 = arith.constant 0 : index
    %157 = vector.load %arg4[%c0_182, %c0_183, %c14_184, %c0_185] : memref<1x1x36x8xf32, #tpu.memory_space<vmem>>, vector<1x1x22x8xf32>
    %158 = vector.shape_cast %157 : vector<1x1x22x8xf32> to vector<22x8xf32>
    %c26 = arith.constant 26 : index
    %c0_186 = arith.constant 0 : index
    %c0_187 = arith.constant 0 : index
    %159 = vector.load %arg5[%c26, %c0_186, %c0_187] : memref<27x8x128xf32, #tpu.memory_space<vmem>>, vector<1x8x128xf32>
    %160 = vector.shape_cast %159 : vector<1x8x128xf32> to vector<8x128xf32>
    %cst_188 = arith.constant dense<0.000000e+00> : vector<22x128xf32>
    %161 = tpu.matmul %158, %160, %cst_188 {dimension_numbers = #tpu.dot_dimension_numbers<[1], [0], [0], [1], [0, 0, 1, 1], [], []>} : vector<22x8xf32>, vector<8x128xf32>, vector<22x128xf32> -> vector<22x128xf32>
    %162 = arith.addf %156, %161 : vector<22x128xf32>
    %c0_189 = arith.constant 0 : index
    %c0_190 = arith.constant 0 : index
    %c0_191 = arith.constant 0 : index
    %c0_192 = arith.constant 0 : index
    %163 = vector.load %arg6[%c0_189, %c0_190, %c0_191, %c0_192] : memref<1x1x22x128xf32, #tpu.memory_space<vmem>>, vector<1x1x22x128xf32>
    %164 = vector.shape_cast %163 : vector<1x1x22x128xf32> to vector<22x128xf32>
    %165 = vector.shape_cast %162 : vector<22x128xf32> to vector<1x1x22x128xf32>
    tpu.vector_store %arg6[%c0_189, %c0_190, %c0_191, %c0_192], %165 {strides = array<i32>} : memref<1x1x22x128xf32, #tpu.memory_space<vmem>>, vector<1x1x22x128xf32>,
    return
  }
  func.func @transform_0(%arg0: i32, %arg1: i32) -> (i32, i32, i32, i32) {
    %c0_i32 = arith.constant 0 : i32
    %c0_i32_0 = arith.constant 0 : i32
    %c0_i32_1 = arith.constant 0 : i32
    return %arg0, %arg1, %c0_i32, %c0_i32_0 : i32, i32, i32, i32
  }
  func.func @transform_1(%arg0: i32, %arg1: i32) -> (i32, i32, i32, i32) {
    %c1_i32 = arith.constant 1 : i32
    %0 = arith.addi %arg1, %c1_i32 : i32
    %c0_i32 = arith.constant 0 : i32
    %c0_i32_0 = arith.constant 0 : i32
    %c0_i32_1 = arith.constant 0 : i32
    return %arg0, %0, %c0_i32, %c0_i32_0 : i32, i32, i32, i32
  }
  func.func @transform_2(%arg0: i32, %arg1: i32) -> (i32, i32, i32, i32) {
    %c2_i32 = arith.constant 2 : i32
    %0 = arith.addi %arg1, %c2_i32 : i32
    %c0_i32 = arith.constant 0 : i32
    %c0_i32_0 = arith.constant 0 : i32
    %c0_i32_1 = arith.constant 0 : i32
    return %arg0, %0, %c0_i32, %c0_i32_0 : i32, i32, i32, i32
  }
  func.func @transform_3(%arg0: i32, %arg1: i32) -> (i32, i32, i32) {
    %c0_i32 = arith.constant 0 : i32
    %c0_i32_0 = arith.constant 0 : i32
    %c0_i32_1 = arith.constant 0 : i32
    %c0_i32_2 = arith.constant 0 : i32
    return %c0_i32, %c0_i32_0, %c0_i32_1 : i32, i32, i32
  }
  func.func @transform_4(%arg0: i32, %arg1: i32) -> (i32, i32, i32, i32) {
    %c0_i32 = arith.constant 0 : i32
    %c0_i32_0 = arith.constant 0 : i32
    %c0_i32_1 = arith.constant 0 : i32
    return %arg0, %arg1, %c0_i32, %c0_i32_0 : i32, i32, i32, i32
  }
}

module attributes {stable_mosaic.version = 11 : i64} {
  func.func @_in_norm_lrelu_kernel(%arg0: i32, %arg1: i32, %arg2: memref<1x64x8xf32, #tpu.memory_space<vmem>>, %arg3: memref<1x1x8xf32, #tpu.memory_space<vmem>>, %arg4: memref<1x1x8xf32, #tpu.memory_space<vmem>>, %arg5: memref<1x8xf32, #tpu.memory_space<vmem>>, %arg6: memref<1x8xf32, #tpu.memory_space<vmem>>, %arg7: memref<1x64x8xf32, #tpu.memory_space<vmem>>) attributes {dimension_semantics = [#tpu.dimension_semantics<parallel>, #tpu.dimension_semantics<parallel>], iteration_bounds = array<i64: 2, 1>, scalar_prefetch = 0 : i64, scratch_operands = 0 : i64, tpu.core_type = #tpu.core_type<tc>, window_params = [{transform_indices = @transform_0, window_bounds = array<i64: 1, 64, 8>}, {transform_indices = @transform_1, window_bounds = array<i64: 1, 1, 8>}, {transform_indices = @transform_2, window_bounds = array<i64: 1, 1, 8>}, {pipeline_mode = #tpu.pipeline_mode<synchronous>, transform_indices = @transform_3, window_bounds = array<i64: 1, 8>}, {pipeline_mode = #tpu.pipeline_mode<synchronous>, transform_indices = @transform_4, window_bounds = array<i64: 1, 8>}, {transform_indices = @transform_5, window_bounds = array<i64: 1, 64, 8>}]} {
    %c0 = arith.constant 0 : index
    %c0_0 = arith.constant 0 : index
    %c0_1 = arith.constant 0 : index
    %0 = vector.load %arg2[%c0, %c0_0, %c0_1] : memref<1x64x8xf32, #tpu.memory_space<vmem>>, vector<1x64x8xf32>
    %1 = vector.shape_cast %0 : vector<1x64x8xf32> to vector<64x8xf32>
    %c0_2 = arith.constant 0 : index
    %c0_3 = arith.constant 0 : index
    %c0_4 = arith.constant 0 : index
    %2 = vector.load %arg3[%c0_2, %c0_3, %c0_4] : memref<1x1x8xf32, #tpu.memory_space<vmem>>, vector<1x1x8xf32>
    %3 = vector.shape_cast %2 : vector<1x1x8xf32> to vector<1x8xf32>
    %cst = arith.constant 1.562500e-02 : f32
    %4 = vector.broadcast %cst : f32 to vector<1x8xf32>
    %5 = arith.mulf %3, %4 : vector<1x8xf32>
    %c0_5 = arith.constant 0 : index
    %c0_6 = arith.constant 0 : index
    %c0_7 = arith.constant 0 : index
    %6 = vector.load %arg4[%c0_5, %c0_6, %c0_7] : memref<1x1x8xf32, #tpu.memory_space<vmem>>, vector<1x1x8xf32>
    %7 = vector.shape_cast %6 : vector<1x1x8xf32> to vector<1x8xf32>
    %cst_8 = arith.constant 1.562500e-02 : f32
    %8 = vector.broadcast %cst_8 : f32 to vector<1x8xf32>
    %9 = arith.mulf %7, %8 : vector<1x8xf32>
    %10 = arith.mulf %5, %5 : vector<1x8xf32>
    %11 = arith.subf %9, %10 : vector<1x8xf32>
    %cst_9 = arith.constant 0.000000e+00 : f32
    %12 = vector.broadcast %cst_9 : f32 to vector<1x8xf32>
    %13 = arith.maximumf %11, %12 : vector<1x8xf32>
    %cst_10 = arith.constant 9.99999974E-6 : f32
    %14 = vector.broadcast %cst_10 : f32 to vector<1x8xf32>
    %15 = arith.addf %13, %14 : vector<1x8xf32>
    %16 = math.rsqrt %15 : vector<1x8xf32>
    %17 = vector.broadcast %5 : vector<1x8xf32> to vector<64x8xf32>
    %18 = arith.subf %1, %17 : vector<64x8xf32>
    %c0_11 = arith.constant 0 : index
    %c0_12 = arith.constant 0 : index
    %19 = vector.load %arg5[%c0_11, %c0_12] : memref<1x8xf32, #tpu.memory_space<vmem>>, vector<1x8xf32>
    %20 = arith.mulf %16, %19 : vector<1x8xf32>
    %21 = vector.broadcast %20 : vector<1x8xf32> to vector<64x8xf32>
    %22 = arith.mulf %18, %21 : vector<64x8xf32>
    %c0_13 = arith.constant 0 : index
    %c0_14 = arith.constant 0 : index
    %23 = vector.load %arg6[%c0_13, %c0_14] : memref<1x8xf32, #tpu.memory_space<vmem>>, vector<1x8xf32>
    %24 = vector.broadcast %23 : vector<1x8xf32> to vector<64x8xf32>
    %25 = arith.addf %22, %24 : vector<64x8xf32>
    %cst_15 = arith.constant 0.000000e+00 : f32
    %26 = vector.broadcast %cst_15 : f32 to vector<64x8xf32>
    %27 = arith.cmpf oge, %25, %26 : vector<64x8xf32>
    %cst_16 = arith.constant 0.00999999977 : f32
    %28 = vector.broadcast %cst_16 : f32 to vector<64x8xf32>
    %29 = arith.mulf %28, %25 : vector<64x8xf32>
    %30 = arith.select %27, %25, %29 : vector<64x8xi1>, vector<64x8xf32>
    %c0_17 = arith.constant 0 : index
    %c0_18 = arith.constant 0 : index
    %c0_19 = arith.constant 0 : index
    %31 = vector.load %arg7[%c0_17, %c0_18, %c0_19] : memref<1x64x8xf32, #tpu.memory_space<vmem>>, vector<1x64x8xf32>
    %32 = vector.shape_cast %31 : vector<1x64x8xf32> to vector<64x8xf32>
    %33 = vector.shape_cast %30 : vector<64x8xf32> to vector<1x64x8xf32>
    tpu.vector_store %arg7[%c0_17, %c0_18, %c0_19], %33 {strides = array<i32>} : memref<1x64x8xf32, #tpu.memory_space<vmem>>, vector<1x64x8xf32>,
    return
  }
  func.func @transform_0(%arg0: i32, %arg1: i32) -> (i32, i32, i32) {
    %c0_i32 = arith.constant 0 : i32
    %c0_i32_0 = arith.constant 0 : i32
    return %arg0, %arg1, %c0_i32 : i32, i32, i32
  }
  func.func @transform_1(%arg0: i32, %arg1: i32) -> (i32, i32, i32) {
    %c0_i32 = arith.constant 0 : i32
    %c0_i32_0 = arith.constant 0 : i32
    %c0_i32_1 = arith.constant 0 : i32
    return %arg0, %c0_i32, %c0_i32_0 : i32, i32, i32
  }
  func.func @transform_2(%arg0: i32, %arg1: i32) -> (i32, i32, i32) {
    %c0_i32 = arith.constant 0 : i32
    %c0_i32_0 = arith.constant 0 : i32
    %c0_i32_1 = arith.constant 0 : i32
    return %arg0, %c0_i32, %c0_i32_0 : i32, i32, i32
  }
  func.func @transform_3(%arg0: i32, %arg1: i32) -> (i32, i32) {
    %c0_i32 = arith.constant 0 : i32
    %c0_i32_0 = arith.constant 0 : i32
    %c0_i32_1 = arith.constant 0 : i32
    return %c0_i32, %c0_i32_0 : i32, i32
  }
  func.func @transform_4(%arg0: i32, %arg1: i32) -> (i32, i32) {
    %c0_i32 = arith.constant 0 : i32
    %c0_i32_0 = arith.constant 0 : i32
    %c0_i32_1 = arith.constant 0 : i32
    return %c0_i32, %c0_i32_0 : i32, i32
  }
  func.func @transform_5(%arg0: i32, %arg1: i32) -> (i32, i32, i32) {
    %c0_i32 = arith.constant 0 : i32
    %c0_i32_0 = arith.constant 0 : i32
    return %arg0, %arg1, %c0_i32 : i32, i32, i32
  }
}

</mosaic_0001>

<llo_original>
// kernel: down_block.7
$region0: #{down_block.7}
  #allocation0 [shape = 'u32[]', space=smem, size = 0x4, offset = 0x4, fixed_abs, tag = 'smem constant byte address 0x4 - core index']
  #allocation1 [shape = 'u32[72,128]{1,0:T(1,128)}', space=vmem, size = 0x9000, scoped, tag = 'internal scratch']
  %s0 = inlined_call_operand.vmem [shape: f32[2,64,8], index: 0, kind: input, shape index: {}]
  %s1 = inlined_call_operand.vmem [shape: f32[2,1,8], index: 1, kind: output, shape index: {0}]
  %s2 = inlined_call_operand.vmem [shape: f32[2,1,8], index: 2, kind: output, shape index: {1}]
  %3 = xla_tuple %s1, %s2
  %s4 = sld [smem:[#allocation0]]
  $region49: #{down_block.7} parent=0
    _
  %s6 = ssub.s32 1, %s4
  %s7 = scalar_select 0, %s6, %s4
  loop: start=0, step=1, limit=4
  $region2: #{down_block.7} parent=0 // loop_pre_header
    _
  $region3: #{down_block.7} parent=0 // loop_header
    %s9 = sphi 0, %s13
    %p10 = scmp.ge.s32.totalorder %s9, 4
    %s16 = sphi 0, %s28
    %s17 = sphi 0, %s24
    %s18 = sphi 0, %s16
    %s19 = sphi 0, %s17
    %s20 = sphi 0, %s18
    %s21 = sphi 0, %s19
    %s33 = sphi 0, %s35
    %s36 = sphi 0, %s33
    %s37 = sphi 0, %s36
    %s53 = sphi 0, %s37
    %s59 = sphi 0, %s61
    %s62 = sphi 0, %s59
    %s63 = sphi 0, %s62
    %s79 = sphi 0, %s63
    %s85 = sphi 0, %s87
    %s88 = sphi 0, %s85
    %s89 = sphi 0, %s88
    %s105 = sphi 0, %s89
  $region4: #{down_block.7} parent=0 // loop_header_branch
    %12 = sbr.rel (%p10) target = $region8
  $region5: #{down_block.7} parent=0 // loop_body
    %s14 = ssub.s32 %s9, 1
    %s15 = ssub.s32 %s9, 2
    %s22 = sadd.s32 1, %s17
    %p23 = scmp.ge.s32.totalorder %s22, 1
    %s24 = scalar_select %p23, 0, %s22
    %s25 = sadd.s32 1, %s16
    %s26 = scalar_select %p23, %s25, %s16
    %p27 = scmp.ge.s32.totalorder %s26, 2
    %s28 = scalar_select %p27, 0, %s26
    %s29 = ssub.s32 %s16, %s28
    %s30 = ssub.s32 %s17, %s24
    %s31 = sor.u32 %s29, %s30
    %p32 = scmp.eq.s32.totalorder %s31, 0
    %s34 = sadd.s32 %s33, 1
    %s35 = scalar_select %p32, %s33, %s34
    %p38 = pneg %p32
    %p39 = scmp.eq.s32.totalorder %s9, 1
    %p40 = por %p38, %p39
    %p41 = scmp.ne.s32.totalorder %s33, %s36
    %p42 = scmp.eq.s32.totalorder %s9, 0
    %p43 = por %p41, %p42
    %p44 = scmp.ne.s32.totalorder %s33, %s36
    %p45 = scmp.eq.s32.totalorder %s14, 1
    %p46 = por %p44, %p45
    %p47 = scmp.ne.s32.totalorder %s36, %s37
    %p48 = scmp.eq.s32.totalorder %s14, 0
    %p49 = por %p47, %p48
    %p50 = scmp.ne.s32.totalorder %s36, %s37
    %p51 = scmp.eq.s32.totalorder %s15, 1
    %p52 = por %p50, %p51
    %p54 = scmp.ne.s32.totalorder %s37, %s53
    %p55 = scmp.eq.s32.totalorder %s15, 0
    %p56 = por %p54, %p55
    %s57 = ssub.s32 %s16, %s28
    %p58 = scmp.eq.s32.totalorder %s57, 0
    %s60 = sadd.s32 %s59, 1
    %s61 = scalar_select %p58, %s59, %s60
    %p64 = pneg %p58
    %p65 = scmp.eq.s32.totalorder %s9, 1
    %p66 = por %p64, %p65
    %p67 = scmp.ne.s32.totalorder %s59, %s62
    %p68 = scmp.eq.s32.totalorder %s9, 0
    %p69 = por %p67, %p68
    %p70 = scmp.ne.s32.totalorder %s59, %s62
    %p71 = scmp.eq.s32.totalorder %s14, 1
    %p72 = por %p70, %p71
    %p73 = scmp.ne.s32.totalorder %s62, %s63
    %p74 = scmp.eq.s32.totalorder %s14, 0
    %p75 = por %p73, %p74
    %p76 = scmp.ne.s32.totalorder %s62, %s63
    %p77 = scmp.eq.s32.totalorder %s15, 1
    %p78 = por %p76, %p77
    %p80 = scmp.ne.s32.totalorder %s63, %s79
    %p81 = scmp.eq.s32.totalorder %s15, 0
    %p82 = por %p80, %p81
    %s83 = ssub.s32 %s16, %s28
    %p84 = scmp.eq.s32.totalorder %s83, 0
    %s86 = sadd.s32 %s85, 1
    %s87 = scalar_select %p84, %s85, %s86
    %p90 = pneg %p84
    %p91 = scmp.eq.s32.totalorder %s9, 1
    %p92 = por %p90, %p91
    %p93 = scmp.ne.s32.totalorder %s85, %s88
    %p94 = scmp.eq.s32.totalorder %s9, 0
    %p95 = por %p93, %p94
    %p96 = scmp.ne.s32.totalorder %s85, %s88
    %p97 = scmp.eq.s32.totalorder %s14, 1
    %p98 = por %p96, %p97
    %p99 = scmp.ne.s32.totalorder %s88, %s89
    %p100 = scmp.eq.s32.totalorder %s14, 0
    %p101 = por %p99, %p100
    %p102 = scmp.ne.s32.totalorder %s88, %s89
    %p103 = scmp.eq.s32.totalorder %s15, 1
    %p104 = por %p102, %p103
    %p106 = scmp.ne.s32.totalorder %s89, %s105
    %p107 = scmp.eq.s32.totalorder %s15, 0
    %p108 = por %p106, %p107
    %p109 = scmp.le.s32.totalorder 1, %s9
    %p110 = scmp.lt.s32.totalorder %s9, 3
    %p111 = pnand %p109, %p110
    %p112 = pneg %p111
    // Predicated region
    $region9: #{down_block.7} parent=5 // pred_check
      _
    $region10: #{down_block.7} parent=5 // pred_check_branch
      %114 = sbr.rel (%p111) target = $region12
    $region11: #{down_block.7} parent=5 // pred_region
      %s115 = ssub.s32 %s9, 1
    $region12: #{down_block.7} parent=5 // pred_fallthru
      _
    %p116 = scmp.lt.s32.totalorder %s9, 2
    // Predicated region
    $region13: #{down_block.7} parent=5 // pred_check
      %p117 = pneg %p116
    $region14: #{down_block.7} parent=5 // pred_check_branch
      %119 = sbr.rel (%p117) target = $region16
    $region15: #{down_block.7} parent=5 // pred_region
      // Predicated region
      $region17: #{down_block.7} parent=15 // pred_check
        %p120 = pneg %p43
      $region18: #{down_block.7} parent=15 // pred_check_branch
        %122 = sbr.rel (%p120) target = $region20
      $region19: #{down_block.7} parent=15 // pred_region
        %s123 = smul.u32 8, %s17
        %p124 = scmp.lt.s32.totalorder %s16, 1
        %s125 = scalar_select %p124, %s16, 1
        %p126 = scmp.lt.s32.totalorder %s123, 7
        %s127 = scalar_select %p126, %s123, 7
        %s128 = smul.addr %s125, 8
        %s129 = sadd.s32 %s127, %s128
        %s130 = smul.addr %s129, 8
        %s131 = scalar_lea.vmem %s0, %s130
        %s132 = smul.u32 8, %s17
      $region20: #{down_block.7} parent=15 // pred_fallthru
        _
    $region16: #{down_block.7} parent=5 // pred_fallthru
      _
    %p133 = scmp.le.s32.totalorder 1, %s9
    %p134 = scmp.lt.s32.totalorder %s9, 3
    %p135 = pnand %p133, %p134
    %p136 = pneg %p135
    // Predicated region
    $region21: #{down_block.7} parent=5 // pred_check
      _
    $region22: #{down_block.7} parent=5 // pred_check_branch
      %138 = sbr.rel (%p135) target = $region24
    $region23: #{down_block.7} parent=5 // pred_region
      %s139 = ssub.s32 %s9, 1
      %s140 = smul.u32 8, %s19
      %p141 = scmp.lt.s32.totalorder %s18, 1
      %s142 = scalar_select %p141, %s18, 1
      %p143 = scmp.lt.s32.totalorder %s140, 7
      %s144 = scalar_select %p143, %s140, 7
      %s145 = smul.addr %s142, 8
      %s146 = sadd.s32 %s144, %s145
      %s147 = smul.addr %s146, 8
      %s148 = scalar_lea.vmem %s0, %s147
      %p149 = pneg %p49
      %p150 = pneg %p46
      %p151 = pneg %p75
      %p152 = pneg %p72
      %p153 = scmp.lt.s32.totalorder %s18, 1
      %s154 = scalar_select %p153, %s18, 1
      %s155 = scalar_lea.vmem %s1, %s154
      %p156 = pneg %p101
      %p157 = pneg %p98
      %p158 = scmp.lt.s32.totalorder %s18, 1
      %s159 = scalar_select %p158, %s18, 1
      %s160 = scalar_lea.vmem %s2, %s159
      %s161 = smul.u32 8, %s19
      %p162 = scmp.lt.s32.totalorder %s18, 1
      %s163 = scalar_select %p162, %s18, 1
      %p164 = scmp.lt.s32.totalorder %s161, 7
      %s165 = scalar_select %p164, %s161, 7
      %s166 = smul.addr %s163, 8
      %s167 = sadd.s32 %s165, %s166
      %s168 = smul.addr %s167, 8
      %s169 = scalar_lea.vmem %s0, %s168
      %s170 = smul.u32 8, %s19
      %p171 = scmp.lt.s32.totalorder %s18, 1
      %s172 = scalar_select %p171, %s18, 1
      %s173 = scalar_lea.vmem %s1, %s172
      %p174 = scmp.lt.s32.totalorder %s18, 1
      %s175 = scalar_select %p174, %s18, 1
      %s176 = scalar_lea.vmem %s2, %s175
      %p177 = scmp.eq.s32.totalorder %s19, 0
      // Predicated region
      $region25: #{down_block.7} parent=23 // pred_check
        %p178 = pneg %p177
      $region26: #{down_block.7} parent=23 // pred_check_branch
        %180 = sbr.rel (%p178) target = $region28
      $region27: #{down_block.7} parent=23 // pred_region
        %vm181 = vcmask 57344
        %182 = vst.msk [vmem:[%s173] sm:$0x1] %vm181, 0.0
        %183 = vst.msk [vmem:[%s176] sm:$0x1] %vm181, 0.0
      $region28: #{down_block.7} parent=23 // pred_fallthru
        _
      %v184 = vld [vmem:[%s169] sm:$0xff]
      %v185 = vld [vmem:[%s169 + $0x8] sm:$0xff]
      %v186 = vld [vmem:[%s169 + $0x10] sm:$0xff]
      %v187 = vld [vmem:[%s169 + $0x18] sm:$0xff]
      %v188 = vld [vmem:[%s169 + $0x20] sm:$0xff]
      %v189 = vld [vmem:[%s169 + $0x28] sm:$0xff]
      %v190 = vld [vmem:[%s169 + $0x30] sm:$0xff]
      %v191 = vld [vmem:[%s169 + $0x38] sm:$0xff]
      %v192 = vld [vmem:[%s173] sm:$0x1]
      %vm193 = vcmask 64512
      %v194 = vsel %vm193, %v184, 0.0
      %v195 = vsel %vm193, %v185, 0.0
      %v196 = vadd.f32 %v194, %v195
      %v197 = vsel %vm193, %v186, 0.0
      %v198 = vadd.f32 %v196, %v197
      %v199 = vsel %vm193, %v187, 0.0
      %v200 = vadd.f32 %v198, %v199
      %v201 = vsel %vm193, %v188, 0.0
      %v202 = vadd.f32 %v200, %v201
      %v203 = vsel %vm193, %v189, 0.0
      %v204 = vadd.f32 %v202, %v203
      %v205 = vsel %vm193, %v190, 0.0
      %v206 = vadd.f32 %v204, %v205
      %v207 = vsel %vm193, %v191, 0.0
      %v208 = vadd.f32 %v206, %v207
      %v209 = vrot.slane %v208, 4
      %v210 = vadd.f32 %v208, %v209
      %v211 = vrot.slane %v210, 2
      %v212 = vadd.f32 %v210, %v211
      %v213 = vrot.slane %v212, 1
      %v214 = vadd.f32 %v212, %v213
      %v215 = vadd.f32 %v192, %v214
      %vm216 = vcmask 57344
      %217 = vst.msk [vmem:[%s173] sm:$0x1] %vm216, %v215
      %v218 = vld [vmem:[%s176] sm:$0x1]
      %v219 = vmul.f32 %v184, %v184
      %v220 = vmul.f32 %v185, %v185
      %v221 = vmul.f32 %v186, %v186
      %v222 = vmul.f32 %v187, %v187
      %v223 = vmul.f32 %v188, %v188
      %v224 = vmul.f32 %v189, %v189
      %v225 = vmul.f32 %v190, %v190
      %v226 = vmul.f32 %v191, %v191
      %v227 = vsel %vm193, %v219, 0.0
      %v228 = vsel %vm193, %v220, 0.0
      %v229 = vadd.f32 %v227, %v228
      %v230 = vsel %vm193, %v221, 0.0
      %v231 = vadd.f32 %v229, %v230
      %v232 = vsel %vm193, %v222, 0.0
      %v233 = vadd.f32 %v231, %v232
      %v234 = vsel %vm193, %v223, 0.0
      %v235 = vadd.f32 %v233, %v234
      %v236 = vsel %vm193, %v224, 0.0
      %v237 = vadd.f32 %v235, %v236
      %v238 = vsel %vm193, %v225, 0.0
      %v239 = vadd.f32 %v237, %v238
      %v240 = vsel %vm193, %v226, 0.0
      %v241 = vadd.f32 %v239, %v240
      %v242 = vrot.slane %v241, 4
      %v243 = vadd.f32 %v241, %v242
      %v244 = vrot.slane %v243, 2
      %v245 = vadd.f32 %v243, %v244
      %v246 = vrot.slane %v245, 1
      %v247 = vadd.f32 %v245, %v246
      %v248 = vadd.f32 %v218, %v247
      %249 = vst.msk [vmem:[%s176] sm:$0x1] %vm216, %v248
      %p250 = scmp.lt.s32.totalorder %s18, 1
      %s251 = scalar_select %p250, %s18, 1
      %s252 = scalar_lea.vmem %s1, %s251
      %p253 = scmp.lt.s32.totalorder %s18, 1
      %s254 = scalar_select %p253, %s18, 1
      %s255 = scalar_lea.vmem %s2, %s254
      // Predicated region
      $region29: #{down_block.7} parent=23 // pred_check
        %p256 = pneg %p72
      $region30: #{down_block.7} parent=23 // pred_check_branch
        %258 = sbr.rel (%p256) target = $region32
      $region31: #{down_block.7} parent=23 // pred_region
        _
      $region32: #{down_block.7} parent=23 // pred_fallthru
        _
      // Predicated region
      $region33: #{down_block.7} parent=23 // pred_check
        %p259 = pneg %p98
      $region34: #{down_block.7} parent=23 // pred_check_branch
        %261 = sbr.rel (%p259) target = $region36
      $region35: #{down_block.7} parent=23 // pred_region
        _
      $region36: #{down_block.7} parent=23 // pred_fallthru
        _
    $region24: #{down_block.7} parent=5 // pred_fallthru
      _
    %p262 = scmp.le.s32.totalorder 2, %s9
    // Predicated region
    $region37: #{down_block.7} parent=5 // pred_check
      %p263 = pneg %p262
    $region38: #{down_block.7} parent=5 // pred_check_branch
      %265 = sbr.rel (%p263) target = $region40
    $region39: #{down_block.7} parent=5 // pred_region
      %s266 = ssub.s32 %s9, 2
      // Predicated region
      $region41: #{down_block.7} parent=39 // pred_check
        %p267 = pneg %p78
      $region42: #{down_block.7} parent=39 // pred_check_branch
        %269 = sbr.rel (%p267) target = $region44
      $region43: #{down_block.7} parent=39 // pred_region
        %p270 = scmp.lt.s32.totalorder %s20, 1
        %s271 = scalar_select %p270, %s20, 1
        %s272 = scalar_lea.vmem %s1, %s271
      $region44: #{down_block.7} parent=39 // pred_fallthru
        _
      // Predicated region
      $region45: #{down_block.7} parent=39 // pred_check
        %p273 = pneg %p104
      $region46: #{down_block.7} parent=39 // pred_check_branch
        %275 = sbr.rel (%p273) target = $region48
      $region47: #{down_block.7} parent=39 // pred_region
        %p276 = scmp.lt.s32.totalorder %s20, 1
        %s277 = scalar_select %p276, %s20, 1
        %s278 = scalar_lea.vmem %s2, %s277
      $region48: #{down_block.7} parent=39 // pred_fallthru
        _
    $region40: #{down_block.7} parent=5 // pred_fallthru
      _
  $region6: #{down_block.7} parent=0 // loop_footer
    %s13 = sadd.s32 1, %s9
  $region7: #{down_block.7} parent=0 // loop_footer_branch
    %8 = sbr.rel target = $region3
  $region8: #{down_block.7} parent=0 // loop_exit
    _

// kernel: down_block.6
$region0: #{down_block.6}
  #allocation0 [shape = 'u32[]', space=smem, size = 0x4, offset = 0x4, fixed_abs, tag = 'smem constant byte address 0x4 - core index']
  #allocation1 [shape = 'u32[72,128]{1,0:T(1,128)}', space=vmem, size = 0x9000, scoped, tag = 'internal scratch']
  %s0 = inlined_call_operand.vmem [shape: f32[128,128], index: 0, kind: input, shape index: {}]
  %s1 = inlined_call_operand.vmem [shape: f32[128,128], index: 1, kind: input, shape index: {}]
  %s2 = inlined_call_operand.vmem [shape: f32[128,128], index: 2, kind: output, shape index: {}]
  %s3 = sld [smem:[#allocation0]]
  $region18: #{down_block.6} parent=0
    _
  %s5 = ssub.s32 1, %s3
  %s6 = scalar_select 0, %s5, %s3
  // Predicated region
  $region2: #{down_block.6} parent=0 // pred_check
    _
  $region3: #{down_block.6} parent=0 // pred_check_branch
    %8 = sbr.rel (0) target = $region5
  $region4: #{down_block.6} parent=0 // pred_region
    _
  $region5: #{down_block.6} parent=0 // pred_fallthru
    _
  // Predicated region
  $region6: #{down_block.6} parent=0 // pred_check
    _
  $region7: #{down_block.6} parent=0 // pred_check_branch
    %10 = sbr.rel (0) target = $region9
  $region8: #{down_block.6} parent=0 // pred_region
    _
  $region9: #{down_block.6} parent=0 // pred_fallthru
    _
  %v11 = vld [vmem:[%s0] sm:$0xff]
  %v12 = vld [vmem:[%s0 + $0x8] sm:$0xff]
  %v13 = vld [vmem:[%s0 + $0x10] sm:$0xff]
  %v14 = vld [vmem:[%s0 + $0x18] sm:$0xff]
  %v15 = vld [vmem:[%s0 + $0x20] sm:$0xff]
  %v16 = vld [vmem:[%s0 + $0x28] sm:$0xff]
  %v17 = vld [vmem:[%s0 + $0x30] sm:$0xff]
  %v18 = vld [vmem:[%s0 + $0x38] sm:$0xff]
  %v19 = vld [vmem:[%s0 + $0x40] sm:$0xff]
  %v20 = vld [vmem:[%s0 + $0x48] sm:$0xff]
  %v21 = vld [vmem:[%s0 + $0x50] sm:$0xff]
  %v22 = vld [vmem:[%s0 + $0x58] sm:$0xff]
  %v23 = vld [vmem:[%s0 + $0x60] sm:$0xff]
  %v24 = vld [vmem:[%s0 + $0x68] sm:$0xff]
  %v25 = vld [vmem:[%s0 + $0x70] sm:$0xff]
  %v26 = vld [vmem:[%s0 + $0x78] sm:$0xff]
  %v27 = vld [vmem:[%s1] sm:$0xff]
  %v28 = vld [vmem:[%s1 + $0x8] sm:$0xff]
  %v29 = vld [vmem:[%s1 + $0x10] sm:$0xff]
  %v30 = vld [vmem:[%s1 + $0x18] sm:$0xff]
  %v31 = vld [vmem:[%s1 + $0x20] sm:$0xff]
  %v32 = vld [vmem:[%s1 + $0x28] sm:$0xff]
  %v33 = vld [vmem:[%s1 + $0x30] sm:$0xff]
  %v34 = vld [vmem:[%s1 + $0x38] sm:$0xff]
  %v35 = vld [vmem:[%s1 + $0x40] sm:$0xff]
  %v36 = vld [vmem:[%s1 + $0x48] sm:$0xff]
  %v37 = vld [vmem:[%s1 + $0x50] sm:$0xff]
  %v38 = vld [vmem:[%s1 + $0x58] sm:$0xff]
  %v39 = vld [vmem:[%s1 + $0x60] sm:$0xff]
  %v40 = vld [vmem:[%s1 + $0x68] sm:$0xff]
  %v41 = vld [vmem:[%s1 + $0x70] sm:$0xff]
  %v42 = vld [vmem:[%s1 + $0x78] sm:$0xff]
  %43 = vmatpush.msra.mxu0 %v42
  %44 = vmatpush.msra.mxu0 %v41
  %45 = vmatpush.msra.mxu0 %v40
  %46 = vmatpush.msra.mxu0 %v39
  %47 = vmatpush.msra.mxu0 %v38
  %48 = vmatpush.msra.mxu0 %v37
  %49 = vmatpush.msra.mxu0 %v36
  %50 = vmatpush.msra.mxu0 %v35
  %51 = vmatpush.msra.mxu0 %v34
  %52 = vmatpush.msra.mxu0 %v33
  %53 = vmatpush.msra.mxu0 %v32
  %54 = vmatpush.msra.mxu0 %v31
  %55 = vmatpush.msra.mxu0 %v30
  %56 = vmatpush.msra.mxu0 %v29
  %57 = vmatpush.msra.mxu0 %v28
  %58 = vmatpush.msra.mxu0 %v27
  %59 = vmatmul.f32.gmra.mxu0 %v11
  %v60 = vpop.f32.mrf.mxu0
  %v61 = vadd.f32 0.0, %v60
  %62 = vmatmul.f32.gmra.mxu0 %v12
  %v63 = vpop.f32.mrf.mxu0
  %v64 = vadd.f32 0.0, %v63
  %65 = vmatmul.f32.gmra.mxu0 %v13
  %v66 = vpop.f32.mrf.mxu0
  %v67 = vadd.f32 0.0, %v66
  %68 = vmatmul.f32.gmra.mxu0 %v14
  %v69 = vpop.f32.mrf.mxu0
  %v70 = vadd.f32 0.0, %v69
  %71 = vmatmul.f32.gmra.mxu0 %v15
  %v72 = vpop.f32.mrf.mxu0
  %v73 = vadd.f32 0.0, %v72
  %74 = vmatmul.f32.gmra.mxu0 %v16
  %v75 = vpop.f32.mrf.mxu0
  %v76 = vadd.f32 0.0, %v75
  %77 = vmatmul.f32.gmra.mxu0 %v17
  %v78 = vpop.f32.mrf.mxu0
  %v79 = vadd.f32 0.0, %v78
  %80 = vmatmul.f32.gmra.mxu0 %v18
  %v81 = vpop.f32.mrf.mxu0
  %v82 = vadd.f32 0.0, %v81
  %83 = vmatmul.f32.gmra.mxu0 %v19
  %v84 = vpop.f32.mrf.mxu0
  %v85 = vadd.f32 0.0, %v84
  %86 = vmatmul.f32.gmra.mxu0 %v20
  %v87 = vpop.f32.mrf.mxu0
  %v88 = vadd.f32 0.0, %v87
  %89 = vmatmul.f32.gmra.mxu0 %v21
  %v90 = vpop.f32.mrf.mxu0
  %v91 = vadd.f32 0.0, %v90
  %92 = vmatmul.f32.gmra.mxu0 %v22
  %v93 = vpop.f32.mrf.mxu0
  %v94 = vadd.f32 0.0, %v93
  %95 = vmatmul.f32.gmra.mxu0 %v23
  %v96 = vpop.f32.mrf.mxu0
  %v97 = vadd.f32 0.0, %v96
  %98 = vmatmul.f32.gmra.mxu0 %v24
  %v99 = vpop.f32.mrf.mxu0
  %v100 = vadd.f32 0.0, %v99
  %101 = vmatmul.f32.gmra.mxu0 %v25
  %v102 = vpop.f32.mrf.mxu0
  %v103 = vadd.f32 0.0, %v102
  %104 = vmatmul.f32.gmra.mxu0 %v26
  %v105 = vpop.f32.mrf.mxu0
  %v106 = vadd.f32 0.0, %v105
  %107 = vdwg.mxu0
  %108 = vst [vmem:[%s2] sm:$0xff] %v61
  %109 = vst [vmem:[%s2 + $0x8] sm:$0xff] %v64
  %110 = vst [vmem:[%s2 + $0x10] sm:$0xff] %v67
  %111 = vst [vmem:[%s2 + $0x18] sm:$0xff] %v70
  %112 = vst [vmem:[%s2 + $0x20] sm:$0xff] %v73
  %113 = vst [vmem:[%s2 + $0x28] sm:$0xff] %v76
  %114 = vst [vmem:[%s2 + $0x30] sm:$0xff] %v79
  %115 = vst [vmem:[%s2 + $0x38] sm:$0xff] %v82
  %116 = vst [vmem:[%s2 + $0x40] sm:$0xff] %v85
  %117 = vst [vmem:[%s2 + $0x48] sm:$0xff] %v88
  %118 = vst [vmem:[%s2 + $0x50] sm:$0xff] %v91
  %119 = vst [vmem:[%s2 + $0x58] sm:$0xff] %v94
  %120 = vst [vmem:[%s2 + $0x60] sm:$0xff] %v97
  %121 = vst [vmem:[%s2 + $0x68] sm:$0xff] %v100
  %122 = vst [vmem:[%s2 + $0x70] sm:$0xff] %v103
  %123 = vst [vmem:[%s2 + $0x78] sm:$0xff] %v106
  // Predicated region
  $region10: #{down_block.6} parent=0 // pred_check
    _
  $region11: #{down_block.6} parent=0 // pred_check_branch
    %125 = sbr.rel (0) target = $region13
  $region12: #{down_block.6} parent=0 // pred_region
    _
  $region13: #{down_block.6} parent=0 // pred_fallthru
    _
  // Predicated region
  $region14: #{down_block.6} parent=0 // pred_check
    _
  $region15: #{down_block.6} parent=0 // pred_check_branch
    %127 = sbr.rel (0) target = $region17
  $region16: #{down_block.6} parent=0 // pred_region
    _
  $region17: #{down_block.6} parent=0 // pred_fallthru
    _

// kernel: down_block.8
$region0: #{down_block.8}
  #allocation0 [shape = 'u32[]', space=smem, size = 0x4, offset = 0x4, fixed_abs, tag = 'smem constant byte address 0x4 - core index']
  #allocation1 [shape = 'u32[72,128]{1,0:T(1,128)}', space=vmem, size = 0x9000, scoped, tag = 'internal scratch']
  %s0 = inlined_call_operand.vmem [shape: f32[2,64,8], index: 0, kind: input, shape index: {}]
  %s1 = inlined_call_operand.vmem [shape: f32[2,1,8], index: 1, kind: input, shape index: {}]
  %s2 = inlined_call_operand.vmem [shape: f32[2,1,8], index: 2, kind: input, shape index: {}]
  %s3 = inlined_call_operand.vmem [shape: f32[1,8], index: 3, kind: input, shape index: {}]
  %s4 = inlined_call_operand.vmem [shape: f32[1,8], index: 4, kind: input, shape index: {}]
  %s5 = inlined_call_operand.vmem [shape: f32[2,64,8], index: 5, kind: output, shape index: {}]
  %s6 = sld [smem:[#allocation0]]
  $region53: #{down_block.8} parent=0
    _
  %s8 = ssub.s32 1, %s6
  %s9 = scalar_select 0, %s8, %s6
  loop: start=0, step=1, limit=4
  $region2: #{down_block.8} parent=0 // loop_pre_header
    _
  $region3: #{down_block.8} parent=0 // loop_header
    %s11 = sphi 0, %s15
    %p12 = scmp.ge.s32.totalorder %s11, 4
    %s18 = sphi 0, %s30
    %s19 = sphi 0, %s26
    %s20 = sphi 0, %s18
    %s21 = sphi 0, %s19
    %s22 = sphi 0, %s20
    %s23 = sphi 0, %s21
    %s35 = sphi 0, %s37
    %s38 = sphi 0, %s35
    %s39 = sphi 0, %s38
    %s55 = sphi 0, %s39
    %s61 = sphi 0, %s63
    %s64 = sphi 0, %s61
    %s65 = sphi 0, %s64
    %s81 = sphi 0, %s65
    %s87 = sphi 0, %s89
    %s90 = sphi 0, %s87
    %s91 = sphi 0, %s90
    %s107 = sphi 0, %s91
    %s111 = sphi 0, %s111
    %s113 = sphi 0, %s111
    %s114 = sphi 0, %s113
    %s128 = sphi 0, %s114
    %s132 = sphi 0, %s132
    %s134 = sphi 0, %s132
    %s135 = sphi 0, %s134
    %s149 = sphi 0, %s135
    %s157 = sphi 0, %s159
    %s160 = sphi 0, %s157
    %s161 = sphi 0, %s160
    %s177 = sphi 0, %s161
  $region4: #{down_block.8} parent=0 // loop_header_branch
    %14 = sbr.rel (%p12) target = $region8
  $region5: #{down_block.8} parent=0 // loop_body
    %s16 = ssub.s32 %s11, 1
    %s17 = ssub.s32 %s11, 2
    %s24 = sadd.s32 1, %s19
    %p25 = scmp.ge.s32.totalorder %s24, 1
    %s26 = scalar_select %p25, 0, %s24
    %s27 = sadd.s32 1, %s18
    %s28 = scalar_select %p25, %s27, %s18
    %p29 = scmp.ge.s32.totalorder %s28, 2
    %s30 = scalar_select %p29, 0, %s28
    %s31 = ssub.s32 %s18, %s30
    %s32 = ssub.s32 %s19, %s26
    %s33 = sor.u32 %s31, %s32
    %p34 = scmp.eq.s32.totalorder %s33, 0
    %s36 = sadd.s32 %s35, 1
    %s37 = scalar_select %p34, %s35, %s36
    %p40 = pneg %p34
    %p41 = scmp.eq.s32.totalorder %s11, 1
    %p42 = por %p40, %p41
    %p43 = scmp.ne.s32.totalorder %s35, %s38
    %p44 = scmp.eq.s32.totalorder %s11, 0
    %p45 = por %p43, %p44
    %p46 = scmp.ne.s32.totalorder %s35, %s38
    %p47 = scmp.eq.s32.totalorder %s16, 1
    %p48 = por %p46, %p47
    %p49 = scmp.ne.s32.totalorder %s38, %s39
    %p50 = scmp.eq.s32.totalorder %s16, 0
    %p51 = por %p49, %p50
    %p52 = scmp.ne.s32.totalorder %s38, %s39
    %p53 = scmp.eq.s32.totalorder %s17, 1
    %p54 = por %p52, %p53
    %p56 = scmp.ne.s32.totalorder %s39, %s55
    %p57 = scmp.eq.s32.totalorder %s17, 0
    %p58 = por %p56, %p57
    %s59 = ssub.s32 %s18, %s30
    %p60 = scmp.eq.s32.totalorder %s59, 0
    %s62 = sadd.s32 %s61, 1
    %s63 = scalar_select %p60, %s61, %s62
    %p66 = pneg %p60
    %p67 = scmp.eq.s32.totalorder %s11, 1
    %p68 = por %p66, %p67
    %p69 = scmp.ne.s32.totalorder %s61, %s64
    %p70 = scmp.eq.s32.totalorder %s11, 0
    %p71 = por %p69, %p70
    %p72 = scmp.ne.s32.totalorder %s61, %s64
    %p73 = scmp.eq.s32.totalorder %s16, 1
    %p74 = por %p72, %p73
    %p75 = scmp.ne.s32.totalorder %s64, %s65
    %p76 = scmp.eq.s32.totalorder %s16, 0
    %p77 = por %p75, %p76
    %p78 = scmp.ne.s32.totalorder %s64, %s65
    %p79 = scmp.eq.s32.totalorder %s17, 1
    %p80 = por %p78, %p79
    %p82 = scmp.ne.s32.totalorder %s65, %s81
    %p83 = scmp.eq.s32.totalorder %s17, 0
    %p84 = por %p82, %p83
    %s85 = ssub.s32 %s18, %s30
    %p86 = scmp.eq.s32.totalorder %s85, 0
    %s88 = sadd.s32 %s87, 1
    %s89 = scalar_select %p86, %s87, %s88
    %p92 = pneg %p86
    %p93 = scmp.eq.s32.totalorder %s11, 1
    %p94 = por %p92, %p93
    %p95 = scmp.ne.s32.totalorder %s87, %s90
    %p96 = scmp.eq.s32.totalorder %s11, 0
    %p97 = por %p95, %p96
    %p98 = scmp.ne.s32.totalorder %s87, %s90
    %p99 = scmp.eq.s32.totalorder %s16, 1
    %p100 = por %p98, %p99
    %p101 = scmp.ne.s32.totalorder %s90, %s91
    %p102 = scmp.eq.s32.totalorder %s16, 0
    %p103 = por %p101, %p102
    %p104 = scmp.ne.s32.totalorder %s90, %s91
    %p105 = scmp.eq.s32.totalorder %s17, 1
    %p106 = por %p104, %p105
    %p108 = scmp.ne.s32.totalorder %s91, %s107
    %p109 = scmp.eq.s32.totalorder %s17, 0
    %p110 = por %p108, %p109
    %s112 = sadd.s32 %s111, 1
    %p115 = scmp.eq.s32.totalorder %s11, 1
    %p116 = scmp.ne.s32.totalorder %s111, %s113
    %p117 = scmp.eq.s32.totalorder %s11, 0
    %p118 = por %p116, %p117
    %p119 = scmp.ne.s32.totalorder %s111, %s113
    %p120 = scmp.eq.s32.totalorder %s16, 1
    %p121 = por %p119, %p120
    %p122 = scmp.ne.s32.totalorder %s113, %s114
    %p123 = scmp.eq.s32.totalorder %s16, 0
    %p124 = por %p122, %p123
    %p125 = scmp.ne.s32.totalorder %s113, %s114
    %p126 = scmp.eq.s32.totalorder %s17, 1
    %p127 = por %p125, %p126
    %p129 = scmp.ne.s32.totalorder %s114, %s128
    %p130 = scmp.eq.s32.totalorder %s17, 0
    %p131 = por %p129, %p130
    %s133 = sadd.s32 %s132, 1
    %p136 = scmp.eq.s32.totalorder %s11, 1
    %p137 = scmp.ne.s32.totalorder %s132, %s134
    %p138 = scmp.eq.s32.totalorder %s11, 0
    %p139 = por %p137, %p138
    %p140 = scmp.ne.s32.totalorder %s132, %s134
    %p141 = scmp.eq.s32.totalorder %s16, 1
    %p142 = por %p140, %p141
    %p143 = scmp.ne.s32.totalorder %s134, %s135
    %p144 = scmp.eq.s32.totalorder %s16, 0
    %p145 = por %p143, %p144
    %p146 = scmp.ne.s32.totalorder %s134, %s135
    %p147 = scmp.eq.s32.totalorder %s17, 1
    %p148 = por %p146, %p147
    %p150 = scmp.ne.s32.totalorder %s135, %s149
    %p151 = scmp.eq.s32.totalorder %s17, 0
    %p152 = por %p150, %p151
    %s153 = ssub.s32 %s18, %s30
    %s154 = ssub.s32 %s19, %s26
    %s155 = sor.u32 %s153, %s154
    %p156 = scmp.eq.s32.totalorder %s155, 0
    %s158 = sadd.s32 %s157, 1
    %s159 = scalar_select %p156, %s157, %s158
    %p162 = pneg %p156
    %p163 = scmp.eq.s32.totalorder %s11, 1
    %p164 = por %p162, %p163
    %p165 = scmp.ne.s32.totalorder %s157, %s160
    %p166 = scmp.eq.s32.totalorder %s11, 0
    %p167 = por %p165, %p166
    %p168 = scmp.ne.s32.totalorder %s157, %s160
    %p169 = scmp.eq.s32.totalorder %s16, 1
    %p170 = por %p168, %p169
    %p171 = scmp.ne.s32.totalorder %s160, %s161
    %p172 = scmp.eq.s32.totalorder %s16, 0
    %p173 = por %p171, %p172
    %p174 = scmp.ne.s32.totalorder %s160, %s161
    %p175 = scmp.eq.s32.totalorder %s17, 1
    %p176 = por %p174, %p175
    %p178 = scmp.ne.s32.totalorder %s161, %s177
    %p179 = scmp.eq.s32.totalorder %s17, 0
    %p180 = por %p178, %p179
    %p181 = scmp.le.s32.totalorder 1, %s11
    %p182 = scmp.lt.s32.totalorder %s11, 3
    %p183 = pnand %p181, %p182
    %p184 = pneg %p183
    // Predicated region
    $region9: #{down_block.8} parent=5 // pred_check
      _
    $region10: #{down_block.8} parent=5 // pred_check_branch
      %186 = sbr.rel (%p183) target = $region12
    $region11: #{down_block.8} parent=5 // pred_region
      %s187 = ssub.s32 %s11, 1
      // Predicated region
      $region13: #{down_block.8} parent=11 // pred_check
        %p188 = pneg %p124
      $region14: #{down_block.8} parent=11 // pred_check_branch
        %190 = sbr.rel (%p188) target = $region16
      $region15: #{down_block.8} parent=11 // pred_region
        _
      $region16: #{down_block.8} parent=11 // pred_fallthru
        _
      // Predicated region
      $region17: #{down_block.8} parent=11 // pred_check
        %p191 = pneg %p145
      $region18: #{down_block.8} parent=11 // pred_check_branch
        %193 = sbr.rel (%p191) target = $region20
      $region19: #{down_block.8} parent=11 // pred_region
        _
      $region20: #{down_block.8} parent=11 // pred_fallthru
        _
    $region12: #{down_block.8} parent=5 // pred_fallthru
      _
    %p194 = scmp.lt.s32.totalorder %s11, 2
    // Predicated region
    $region21: #{down_block.8} parent=5 // pred_check
      %p195 = pneg %p194
    $region22: #{down_block.8} parent=5 // pred_check_branch
      %197 = sbr.rel (%p195) target = $region24
    $region23: #{down_block.8} parent=5 // pred_region
      // Predicated region
      $region25: #{down_block.8} parent=23 // pred_check
        %p198 = pneg %p45
      $region26: #{down_block.8} parent=23 // pred_check_branch
        %200 = sbr.rel (%p198) target = $region28
      $region27: #{down_block.8} parent=23 // pred_region
        %s201 = smul.u32 8, %s19
        %p202 = scmp.lt.s32.totalorder %s18, 1
        %s203 = scalar_select %p202, %s18, 1
        %p204 = scmp.lt.s32.totalorder %s201, 7
        %s205 = scalar_select %p204, %s201, 7
        %s206 = smul.addr %s203, 8
        %s207 = sadd.s32 %s205, %s206
        %s208 = smul.addr %s207, 8
        %s209 = scalar_lea.vmem %s0, %s208
        %s210 = smul.u32 8, %s19
      $region28: #{down_block.8} parent=23 // pred_fallthru
        _
      // Predicated region
      $region29: #{down_block.8} parent=23 // pred_check
        %p211 = pneg %p71
      $region30: #{down_block.8} parent=23 // pred_check_branch
        %213 = sbr.rel (%p211) target = $region32
      $region31: #{down_block.8} parent=23 // pred_region
        %p214 = scmp.lt.s32.totalorder %s18, 1
        %s215 = scalar_select %p214, %s18, 1
        %s216 = scalar_lea.vmem %s1, %s215
      $region32: #{down_block.8} parent=23 // pred_fallthru
        _
      // Predicated region
      $region33: #{down_block.8} parent=23 // pred_check
        %p217 = pneg %p97
      $region34: #{down_block.8} parent=23 // pred_check_branch
        %219 = sbr.rel (%p217) target = $region36
      $region35: #{down_block.8} parent=23 // pred_region
        %p220 = scmp.lt.s32.totalorder %s18, 1
        %s221 = scalar_select %p220, %s18, 1
        %s222 = scalar_lea.vmem %s2, %s221
      $region36: #{down_block.8} parent=23 // pred_fallthru
        _
    $region24: #{down_block.8} parent=5 // pred_fallthru
      _
    %p223 = scmp.le.s32.totalorder 1, %s11
    %p224 = scmp.lt.s32.totalorder %s11, 3
    %p225 = pnand %p223, %p224
    %p226 = pneg %p225
    // Predicated region
    $region37: #{down_block.8} parent=5 // pred_check
      _
    $region38: #{down_block.8} parent=5 // pred_check_branch
      %228 = sbr.rel (%p225) target = $region40
    $region39: #{down_block.8} parent=5 // pred_region
      %s229 = ssub.s32 %s11, 1
      %s230 = smul.u32 8, %s21
      %p231 = scmp.lt.s32.totalorder %s20, 1
      %s232 = scalar_select %p231, %s20, 1
      %p233 = scmp.lt.s32.totalorder %s230, 7
      %s234 = scalar_select %p233, %s230, 7
      %s235 = smul.addr %s232, 8
      %s236 = sadd.s32 %s234, %s235
      %s237 = smul.addr %s236, 8
      %s238 = scalar_lea.vmem %s0, %s237
      %p239 = pneg %p51
      %p240 = pneg %p48
      %p241 = scmp.lt.s32.totalorder %s20, 1
      %s242 = scalar_select %p241, %s20, 1
      %s243 = scalar_lea.vmem %s1, %s242
      %p244 = pneg %p77
      %p245 = pneg %p74
      %p246 = scmp.lt.s32.totalorder %s20, 1
      %s247 = scalar_select %p246, %s20, 1
      %s248 = scalar_lea.vmem %s2, %s247
      %p249 = pneg %p103
      %p250 = pneg %p100
      %p251 = pneg %p124
      %p252 = pneg %p121
      %p253 = pneg %p145
      %p254 = pneg %p142
      %p255 = pneg %p173
      %p256 = pneg %p170
      %s257 = smul.u32 8, %s21
      %p258 = scmp.lt.s32.totalorder %s20, 1
      %s259 = scalar_select %p258, %s20, 1
      %p260 = scmp.lt.s32.totalorder %s257, 7
      %s261 = scalar_select %p260, %s257, 7
      %s262 = smul.addr %s259, 8
      %s263 = sadd.s32 %s261, %s262
      %s264 = smul.addr %s263, 8
      %s265 = scalar_lea.vmem %s5, %s264
      %s266 = smul.u32 8, %s21
      %p267 = scmp.lt.s32.totalorder %s20, 1
      %s268 = scalar_select %p267, %s20, 1
      %p269 = scmp.lt.s32.totalorder %s266, 7
      %s270 = scalar_select %p269, %s266, 7
      %s271 = smul.addr %s268, 8
      %s272 = sadd.s32 %s270, %s271
      %s273 = smul.addr %s272, 8
      %s274 = scalar_lea.vmem %s0, %s273
      %s275 = smul.u32 8, %s21
      %p276 = scmp.lt.s32.totalorder %s20, 1
      %s277 = scalar_select %p276, %s20, 1
      %s278 = scalar_lea.vmem %s1, %s277
      %p279 = scmp.lt.s32.totalorder %s20, 1
      %s280 = scalar_select %p279, %s20, 1
      %s281 = scalar_lea.vmem %s2, %s280
      %s282 = smul.u32 8, %s21
      %p283 = scmp.lt.s32.totalorder %s20, 1
      %s284 = scalar_select %p283, %s20, 1
      %p285 = scmp.lt.s32.totalorder %s282, 7
      %s286 = scalar_select %p285, %s282, 7
      %s287 = smul.addr %s284, 8
      %s288 = sadd.s32 %s286, %s287
      %s289 = smul.addr %s288, 8
      %s290 = scalar_lea.vmem %s5, %s289
      %s291 = smul.u32 8, %s21
      %v292 = vld [vmem:[%s274] sm:$0xff]
      %v293 = vld [vmem:[%s274 + $0x8] sm:$0xff]
      %v294 = vld [vmem:[%s274 + $0x10] sm:$0xff]
      %v295 = vld [vmem:[%s274 + $0x18] sm:$0xff]
      %v296 = vld [vmem:[%s274 + $0x20] sm:$0xff]
      %v297 = vld [vmem:[%s274 + $0x28] sm:$0xff]
      %v298 = vld [vmem:[%s274 + $0x30] sm:$0xff]
      %v299 = vld [vmem:[%s274 + $0x38] sm:$0xff]
      %v300 = vld [vmem:[%s278] sm:$0x1]
      %v301 = vmul.f32 %v300, 0.015625
      %v302 = vld [vmem:[%s281] sm:$0x1]
      %v303 = vmul.f32 %v302, 0.015625
      %v304 = vmul.f32 %v301, %v301
      %v305 = vsub.f32 %v303, %v304
      %v306 = vmax.f32 %v305, 0.0
      %v307 = vadd.f32 %v306, 1e-05
      %v308 = vrsqrt.pop %v307
      %v309 = vmul.f32 %v308, %v307
      %v310 = vmul.f32 %v309, %v308
      %v311 = vmul.f32 0.5, %v310
      %v312 = vsub.f32 1.5, %v311
      %v313 = vmul.f32 %v308, %v312
      %vm314 = vweird.f32 %v307
      %vm315 = vweird.f32 %v308
      %vm316 = vmor %vm314, %vm315
      %v317 = vsel %vm316, %v308, %v313
      %v319 = vperm.slane %v301, 0
      %v321 = vsub.f32 %v292, %v319
      %v322 = vsub.f32 %v293, %v319
      %v323 = vsub.f32 %v294, %v319
      %v324 = vsub.f32 %v295, %v319
      %v325 = vsub.f32 %v296, %v319
      %v326 = vsub.f32 %v297, %v319
      %v327 = vsub.f32 %v298, %v319
      %v328 = vsub.f32 %v299, %v319
      %v329 = vld [vmem:[%s3] sm:$0x1]
      %v330 = vmul.f32 %v317, %v329
      %v332 = vperm.slane %v330, 0
      %v334 = vmul.f32 %v321, %v332
      %v335 = vmul.f32 %v322, %v332
      %v336 = vmul.f32 %v323, %v332
      %v337 = vmul.f32 %v324, %v332
      %v338 = vmul.f32 %v325, %v332
      %v339 = vmul.f32 %v326, %v332
      %v340 = vmul.f32 %v327, %v332
      %v341 = vmul.f32 %v328, %v332
      %v342 = vld [vmem:[%s4] sm:$0x1]
      %v344 = vperm.slane %v342, 0
      %v346 = vadd.f32 %v334, %v344
      %v347 = vadd.f32 %v335, %v344
      %v348 = vadd.f32 %v336, %v344
      %v349 = vadd.f32 %v337, %v344
      %v350 = vadd.f32 %v338, %v344
      %v351 = vadd.f32 %v339, %v344
      %v352 = vadd.f32 %v340, %v344
      %v353 = vadd.f32 %v341, %v344
      %vm354 = vcmp.ge.f32.partialorder %v346, 0.0
      %vm355 = vcmp.ge.f32.partialorder %v347, 0.0
      %vm356 = vcmp.ge.f32.partialorder %v348, 0.0
      %vm357 = vcmp.ge.f32.partialorder %v349, 0.0
      %vm358 = vcmp.ge.f32.partialorder %v350, 0.0
      %vm359 = vcmp.ge.f32.partialorder %v351, 0.0
      %vm360 = vcmp.ge.f32.partialorder %v352, 0.0
      %vm361 = vcmp.ge.f32.partialorder %v353, 0.0
      %v362 = vmul.f32 %v346, 0.01
      %v363 = vmul.f32 %v347, 0.01
      %v364 = vmul.f32 %v348, 0.01
      %v365 = vmul.f32 %v349, 0.01
      %v366 = vmul.f32 %v350, 0.01
      %v367 = vmul.f32 %v351, 0.01
      %v368 = vmul.f32 %v352, 0.01
      %v369 = vmul.f32 %v353, 0.01
      %v370 = vsel %vm354, %v346, %v362
      %v371 = vsel %vm355, %v347, %v363
      %v372 = vsel %vm356, %v348, %v364
      %v373 = vsel %vm357, %v349, %v365
      %v374 = vsel %vm358, %v350, %v366
      %v375 = vsel %vm359, %v351, %v367
      %v376 = vsel %vm360, %v352, %v368
      %v377 = vsel %vm361, %v353, %v369
      %vm378 = vcmask 64512
      %379 = vst.msk [vmem:[%s290] sm:$0xff] %vm378, %v370
      %380 = vst.msk [vmem:[%s290 + $0x8] sm:$0xff] %vm378, %v371
      %381 = vst.msk [vmem:[%s290 + $0x10] sm:$0xff] %vm378, %v372
      %382 = vst.msk [vmem:[%s290 + $0x18] sm:$0xff] %vm378, %v373
      %383 = vst.msk [vmem:[%s290 + $0x20] sm:$0xff] %vm378, %v374
      %384 = vst.msk [vmem:[%s290 + $0x28] sm:$0xff] %vm378, %v375
      %385 = vst.msk [vmem:[%s290 + $0x30] sm:$0xff] %vm378, %v376
      %386 = vst.msk [vmem:[%s290 + $0x38] sm:$0xff] %vm378, %v377
      %s387 = smul.u32 8, %s21
      %p388 = scmp.lt.s32.totalorder %s20, 1
      %s389 = scalar_select %p388, %s20, 1
      %p390 = scmp.lt.s32.totalorder %s387, 7
      %s391 = scalar_select %p390, %s387, 7
      %s392 = smul.addr %s389, 8
      %s393 = sadd.s32 %s391, %s392
      %s394 = smul.addr %s393, 8
      %s395 = scalar_lea.vmem %s5, %s394
      // Predicated region
      $region41: #{down_block.8} parent=39 // pred_check
        %p396 = pneg %p170
      $region42: #{down_block.8} parent=39 // pred_check_branch
        %398 = sbr.rel (%p396) target = $region44
      $region43: #{down_block.8} parent=39 // pred_region
        %s399 = smul.u32 8, %s21
      $region44: #{down_block.8} parent=39 // pred_fallthru
        _
    $region40: #{down_block.8} parent=5 // pred_fallthru
      _
    %p400 = scmp.le.s32.totalorder 2, %s11
    // Predicated region
    $region45: #{down_block.8} parent=5 // pred_check
      %p401 = pneg %p400
    $region46: #{down_block.8} parent=5 // pred_check_branch
      %403 = sbr.rel (%p401) target = $region48
    $region47: #{down_block.8} parent=5 // pred_region
      %s404 = ssub.s32 %s11, 2
      // Predicated region
      $region49: #{down_block.8} parent=47 // pred_check
        %p405 = pneg %p176
      $region50: #{down_block.8} parent=47 // pred_check_branch
        %407 = sbr.rel (%p405) target = $region52
      $region51: #{down_block.8} parent=47 // pred_region
        %s408 = smul.u32 8, %s23
        %p409 = scmp.lt.s32.totalorder %s22, 1
        %s410 = scalar_select %p409, %s22, 1
        %p411 = scmp.lt.s32.totalorder %s408, 7
        %s412 = scalar_select %p411, %s408, 7
        %s413 = smul.addr %s410, 8
        %s414 = sadd.s32 %s412, %s413
        %s415 = smul.addr %s414, 8
        %s416 = scalar_lea.vmem %s5, %s415
      $region52: #{down_block.8} parent=47 // pred_fallthru
        _
    $region48: #{down_block.8} parent=5 // pred_fallthru
      _
  $region6: #{down_block.8} parent=0 // loop_footer
    %s15 = sadd.s32 1, %s11
  $region7: #{down_block.8} parent=0 // loop_footer_branch
    %10 = sbr.rel target = $region3
  $region8: #{down_block.8} parent=0 // loop_exit
    _

// kernel: down_block.9
$region0: #{down_block.9}
  #allocation0 [shape = 'u32[]', space=smem, size = 0x4, offset = 0x4, fixed_abs, tag = 'smem constant byte address 0x4 - core index']
  #allocation1 [shape = 'u32[72,128]{1,0:T(1,128)}', space=vmem, size = 0x9000, scoped, tag = 'internal scratch']
  %s0 = inlined_call_operand.vmem [shape: f32[2,6,36,8], index: 0, kind: input, shape index: {}, may-alias: {0,1,2}]
  %s1 = inlined_call_operand.vmem [shape: f32[2,6,36,8], index: 1, kind: input, shape index: {}, may-alias: {0,1,2}]
  %s2 = inlined_call_operand.vmem [shape: f32[2,6,36,8], index: 2, kind: input, shape index: {}, may-alias: {0,1,2}]
  %s3 = inlined_call_operand.vmem [shape: f32[27,8,128], index: 3, kind: input, shape index: {}]
  %s4 = inlined_call_operand.vmem [shape: f32[2,4,22,128], index: 4, kind: output, shape index: {}]
  %s5 = sld [smem:[#allocation0]]
  $region49: #{down_block.9} parent=0
    _
  %s7 = ssub.s32 1, %s5
  %s8 = scalar_select 0, %s7, %s5
  loop: start=0, step=1, limit=10
  $region2: #{down_block.9} parent=0 // loop_pre_header
    _
  $region3: #{down_block.9} parent=0 // loop_header
    %s10 = sphi 0, %s14
    %p11 = scmp.ge.s32.totalorder %s10, 10
    %s17 = sphi 0, %s29
    %s18 = sphi 0, %s25
    %s19 = sphi 0, %s17
    %s20 = sphi 0, %s18
    %s21 = sphi 0, %s19
    %s22 = sphi 0, %s20
    %s34 = sphi 0, %s36
    %s37 = sphi 0, %s34
    %s38 = sphi 0, %s37
    %s54 = sphi 0, %s38
    %s64 = sphi 0, %s66
    %s67 = sphi 0, %s64
    %s68 = sphi 0, %s67
    %s84 = sphi 0, %s68
    %s94 = sphi 0, %s96
    %s97 = sphi 0, %s94
    %s98 = sphi 0, %s97
    %s114 = sphi 0, %s98
    %s118 = sphi 0, %s118
    %s120 = sphi 0, %s118
    %s121 = sphi 0, %s120
    %s135 = sphi 0, %s121
    %s143 = sphi 0, %s145
    %s146 = sphi 0, %s143
    %s147 = sphi 0, %s146
    %s163 = sphi 0, %s147
  $region4: #{down_block.9} parent=0 // loop_header_branch
    %13 = sbr.rel (%p11) target = $region8
  $region5: #{down_block.9} parent=0 // loop_body
    %s15 = ssub.s32 %s10, 1
    %s16 = ssub.s32 %s10, 2
    %s23 = sadd.s32 1, %s18
    %p24 = scmp.ge.s32.totalorder %s23, 4
    %s25 = scalar_select %p24, 0, %s23
    %s26 = sadd.s32 1, %s17
    %s27 = scalar_select %p24, %s26, %s17
    %p28 = scmp.ge.s32.totalorder %s27, 2
    %s29 = scalar_select %p28, 0, %s27
    %s30 = ssub.s32 %s17, %s29
    %s31 = ssub.s32 %s18, %s25
    %s32 = sor.u32 %s30, %s31
    %p33 = scmp.eq.s32.totalorder %s32, 0
    %s35 = sadd.s32 %s34, 1
    %s36 = scalar_select %p33, %s34, %s35
    %p39 = pneg %p33
    %p40 = scmp.eq.s32.totalorder %s10, 7
    %p41 = por %p39, %p40
    %p42 = scmp.ne.s32.totalorder %s34, %s37
    %p43 = scmp.eq.s32.totalorder %s10, 0
    %p44 = por %p42, %p43
    %p45 = scmp.ne.s32.totalorder %s34, %s37
    %p46 = scmp.eq.s32.totalorder %s15, 7
    %p47 = por %p45, %p46
    %p48 = scmp.ne.s32.totalorder %s37, %s38
    %p49 = scmp.eq.s32.totalorder %s15, 0
    %p50 = por %p48, %p49
    %p51 = scmp.ne.s32.totalorder %s37, %s38
    %p52 = scmp.eq.s32.totalorder %s16, 7
    %p53 = por %p51, %p52
    %p55 = scmp.ne.s32.totalorder %s38, %s54
    %p56 = scmp.eq.s32.totalorder %s16, 0
    %p57 = por %p55, %p56
    %s58 = sadd.s32 %s18, 1
    %s59 = sadd.s32 %s25, 1
    %s60 = ssub.s32 %s17, %s29
    %s61 = ssub.s32 %s58, %s59
    %s62 = sor.u32 %s60, %s61
    %p63 = scmp.eq.s32.totalorder %s62, 0
    %s65 = sadd.s32 %s64, 1
    %s66 = scalar_select %p63, %s64, %s65
    %p69 = pneg %p63
    %p70 = scmp.eq.s32.totalorder %s10, 7
    %p71 = por %p69, %p70
    %p72 = scmp.ne.s32.totalorder %s64, %s67
    %p73 = scmp.eq.s32.totalorder %s10, 0
    %p74 = por %p72, %p73
    %p75 = scmp.ne.s32.totalorder %s64, %s67
    %p76 = scmp.eq.s32.totalorder %s15, 7
    %p77 = por %p75, %p76
    %p78 = scmp.ne.s32.totalorder %s67, %s68
    %p79 = scmp.eq.s32.totalorder %s15, 0
    %p80 = por %p78, %p79
    %p81 = scmp.ne.s32.totalorder %s67, %s68
    %p82 = scmp.eq.s32.totalorder %s16, 7
    %p83 = por %p81, %p82
    %p85 = scmp.ne.s32.totalorder %s68, %s84
    %p86 = scmp.eq.s32.totalorder %s16, 0
    %p87 = por %p85, %p86
    %s88 = sadd.s32 %s18, 2
    %s89 = sadd.s32 %s25, 2
    %s90 = ssub.s32 %s17, %s29
    %s91 = ssub.s32 %s88, %s89
    %s92 = sor.u32 %s90, %s91
    %p93 = scmp.eq.s32.totalorder %s92, 0
    %s95 = sadd.s32 %s94, 1
    %s96 = scalar_select %p93, %s94, %s95
    %p99 = pneg %p93
    %p100 = scmp.eq.s32.totalorder %s10, 7
    %p101 = por %p99, %p100
    %p102 = scmp.ne.s32.totalorder %s94, %s97
    %p103 = scmp.eq.s32.totalorder %s10, 0
    %p104 = por %p102, %p103
    %p105 = scmp.ne.s32.totalorder %s94, %s97
    %p106 = scmp.eq.s32.totalorder %s15, 7
    %p107 = por %p105, %p106
    %p108 = scmp.ne.s32.totalorder %s97, %s98
    %p109 = scmp.eq.s32.totalorder %s15, 0
    %p110 = por %p108, %p109
    %p111 = scmp.ne.s32.totalorder %s97, %s98
    %p112 = scmp.eq.s32.totalorder %s16, 7
    %p113 = por %p111, %p112
    %p115 = scmp.ne.s32.totalorder %s98, %s114
    %p116 = scmp.eq.s32.totalorder %s16, 0
    %p117 = por %p115, %p116
    %s119 = sadd.s32 %s118, 1
    %p122 = scmp.eq.s32.totalorder %s10, 7
    %p123 = scmp.ne.s32.totalorder %s118, %s120
    %p124 = scmp.eq.s32.totalorder %s10, 0
    %p125 = por %p123, %p124
    %p126 = scmp.ne.s32.totalorder %s118, %s120
    %p127 = scmp.eq.s32.totalorder %s15, 7
    %p128 = por %p126, %p127
    %p129 = scmp.ne.s32.totalorder %s120, %s121
    %p130 = scmp.eq.s32.totalorder %s15, 0
    %p131 = por %p129, %p130
    %p132 = scmp.ne.s32.totalorder %s120, %s121
    %p133 = scmp.eq.s32.totalorder %s16, 7
    %p134 = por %p132, %p133
    %p136 = scmp.ne.s32.totalorder %s121, %s135
    %p137 = scmp.eq.s32.totalorder %s16, 0
    %p138 = por %p136, %p137
    %s139 = ssub.s32 %s17, %s29
    %s140 = ssub.s32 %s18, %s25
    %s141 = sor.u32 %s139, %s140
    %p142 = scmp.eq.s32.totalorder %s141, 0
    %s144 = sadd.s32 %s143, 1
    %s145 = scalar_select %p142, %s143, %s144
    %p148 = pneg %p142
    %p149 = scmp.eq.s32.totalorder %s10, 7
    %p150 = por %p148, %p149
    %p151 = scmp.ne.s32.totalorder %s143, %s146
    %p152 = scmp.eq.s32.totalorder %s10, 0
    %p153 = por %p151, %p152
    %p154 = scmp.ne.s32.totalorder %s143, %s146
    %p155 = scmp.eq.s32.totalorder %s15, 7
    %p156 = por %p154, %p155
    %p157 = scmp.ne.s32.totalorder %s146, %s147
    %p158 = scmp.eq.s32.totalorder %s15, 0
    %p159 = por %p157, %p158
    %p160 = scmp.ne.s32.totalorder %s146, %s147
    %p161 = scmp.eq.s32.totalorder %s16, 7
    %p162 = por %p160, %p161
    %p164 = scmp.ne.s32.totalorder %s147, %s163
    %p165 = scmp.eq.s32.totalorder %s16, 0
    %p166 = por %p164, %p165
    %p167 = scmp.le.s32.totalorder 1, %s10
    %p168 = scmp.lt.s32.totalorder %s10, 9
    %p169 = pnand %p167, %p168
    %p170 = pneg %p169
    // Predicated region
    $region9: #{down_block.9} parent=5 // pred_check
      _
    $region10: #{down_block.9} parent=5 // pred_check_branch
      %172 = sbr.rel (%p169) target = $region12
    $region11: #{down_block.9} parent=5 // pred_region
      %s173 = ssub.s32 %s10, 1
      // Predicated region
      $region13: #{down_block.9} parent=11 // pred_check
        %p174 = pneg %p131
      $region14: #{down_block.9} parent=11 // pred_check_branch
        %176 = sbr.rel (%p174) target = $region16
      $region15: #{down_block.9} parent=11 // pred_region
        _
      $region16: #{down_block.9} parent=11 // pred_fallthru
        _
    $region12: #{down_block.9} parent=5 // pred_fallthru
      _
    %p177 = scmp.lt.s32.totalorder %s10, 8
    // Predicated region
    $region17: #{down_block.9} parent=5 // pred_check
      %p178 = pneg %p177
    $region18: #{down_block.9} parent=5 // pred_check_branch
      %180 = sbr.rel (%p178) target = $region20
    $region19: #{down_block.9} parent=5 // pred_region
      // Predicated region
      $region21: #{down_block.9} parent=19 // pred_check
        %p181 = pneg %p44
      $region22: #{down_block.9} parent=19 // pred_check_branch
        %183 = sbr.rel (%p181) target = $region24
      $region23: #{down_block.9} parent=19 // pred_region
        %p184 = scmp.lt.s32.totalorder %s17, 1
        %s185 = scalar_select %p184, %s17, 1
        %p186 = scmp.lt.s32.totalorder %s18, 5
        %s187 = scalar_select %p186, %s18, 5
        %s188 = smul.addr %s187, 5
        %s189 = smul.addr %s185, 30
        %s190 = sadd.s32 %s188, %s189
        %s191 = smul.addr %s190, 8
        %s192 = scalar_lea.vmem %s0, %s191
      $region24: #{down_block.9} parent=19 // pred_fallthru
        _
      // Predicated region
      $region25: #{down_block.9} parent=19 // pred_check
        %p193 = pneg %p74
      $region26: #{down_block.9} parent=19 // pred_check_branch
        %195 = sbr.rel (%p193) target = $region28
      $region27: #{down_block.9} parent=19 // pred_region
        %s196 = sadd.s32 %s18, 1
        %p197 = scmp.lt.s32.totalorder %s17, 1
        %s198 = scalar_select %p197, %s17, 1
        %p199 = scmp.lt.s32.totalorder %s196, 5
        %s200 = scalar_select %p199, %s196, 5
        %s201 = smul.addr %s200, 5
        %s202 = smul.addr %s198, 30
        %s203 = sadd.s32 %s201, %s202
        %s204 = smul.addr %s203, 8
        %s205 = scalar_lea.vmem %s1, %s204
        %s206 = sadd.s32 %s18, 1
      $region28: #{down_block.9} parent=19 // pred_fallthru
        _
      // Predicated region
      $region29: #{down_block.9} parent=19 // pred_check
        %p207 = pneg %p104
      $region30: #{down_block.9} parent=19 // pred_check_branch
        %209 = sbr.rel (%p207) target = $region32
      $region31: #{down_block.9} parent=19 // pred_region
        %s210 = sadd.s32 %s18, 2
        %p211 = scmp.lt.s32.totalorder %s17, 1
        %s212 = scalar_select %p211, %s17, 1
        %p213 = scmp.lt.s32.totalorder %s210, 5
        %s214 = scalar_select %p213, %s210, 5
        %s215 = smul.addr %s214, 5
        %s216 = smul.addr %s212, 30
        %s217 = sadd.s32 %s215, %s216
        %s218 = smul.addr %s217, 8
        %s219 = scalar_lea.vmem %s2, %s218
        %s220 = sadd.s32 %s18, 2
      $region32: #{down_block.9} parent=19 // pred_fallthru
        _
    $region20: #{down_block.9} parent=5 // pred_fallthru
      _
    %p221 = scmp.le.s32.totalorder 1, %s10
    %p222 = scmp.lt.s32.totalorder %s10, 9
    %p223 = pnand %p221, %p222
    %p224 = pneg %p223
    // Predicated region
    $region33: #{down_block.9} parent=5 // pred_check
      _
    $region34: #{down_block.9} parent=5 // pred_check_branch
      %226 = sbr.rel (%p223) target = $region36
    $region35: #{down_block.9} parent=5 // pred_region
      %s227 = ssub.s32 %s10, 1
      %p228 = scmp.lt.s32.totalorder %s19, 1
      %s229 = scalar_select %p228, %s19, 1
      %p230 = scmp.lt.s32.totalorder %s20, 5
      %s231 = scalar_select %p230, %s20, 5
      %s232 = smul.addr %s231, 5
      %s233 = smul.addr %s229, 30
      %s234 = sadd.s32 %s232, %s233
      %s235 = smul.addr %s234, 8
      %s236 = scalar_lea.vmem %s0, %s235
      %p237 = pneg %p50
      %p238 = pneg %p47
      %s239 = sadd.s32 %s20, 1
      %p240 = scmp.lt.s32.totalorder %s19, 1
      %s241 = scalar_select %p240, %s19, 1
      %p242 = scmp.lt.s32.totalorder %s239, 5
      %s243 = scalar_select %p242, %s239, 5
      %s244 = smul.addr %s243, 5
      %s245 = smul.addr %s241, 30
      %s246 = sadd.s32 %s244, %s245
      %s247 = smul.addr %s246, 8
      %s248 = scalar_lea.vmem %s1, %s247
      %p249 = pneg %p80
      %p250 = pneg %p77
      %s251 = sadd.s32 %s20, 2
      %p252 = scmp.lt.s32.totalorder %s19, 1
      %s253 = scalar_select %p252, %s19, 1
      %p254 = scmp.lt.s32.totalorder %s251, 5
      %s255 = scalar_select %p254, %s251, 5
      %s256 = smul.addr %s255, 5
      %s257 = smul.addr %s253, 30
      %s258 = sadd.s32 %s256, %s257
      %s259 = smul.addr %s258, 8
      %s260 = scalar_lea.vmem %s2, %s259
      %p261 = pneg %p110
      %p262 = pneg %p107
      %p263 = pneg %p131
      %p264 = pneg %p128
      %p265 = pneg %p159
      %p266 = pneg %p156
      %p267 = scmp.lt.s32.totalorder %s19, 1
      %s268 = scalar_select %p267, %s19, 1
      %p269 = scmp.lt.s32.totalorder %s20, 3
      %s270 = scalar_select %p269, %s20, 3
      %s271 = smul.addr %s270, 3
      %s272 = smul.addr %s268, 12
      %s273 = sadd.s32 %s271, %s272
      %s274 = smul.addr %s273, 8
      %s275 = scalar_lea.vmem %s4, %s274
      %p276 = scmp.lt.s32.totalorder %s19, 1
      %s277 = scalar_select %p276, %s19, 1
      %p278 = scmp.lt.s32.totalorder %s20, 5
      %s279 = scalar_select %p278, %s20, 5
      %s280 = smul.addr %s279, 5
      %s281 = smul.addr %s277, 30
      %s282 = sadd.s32 %s280, %s281
      %s283 = smul.addr %s282, 8
      %s284 = scalar_lea.vmem %s0, %s283
      %s285 = sadd.s32 %s20, 1
      %p286 = scmp.lt.s32.totalorder %s19, 1
      %s287 = scalar_select %p286, %s19, 1
      %p288 = scmp.lt.s32.totalorder %s285, 5
      %s289 = scalar_select %p288, %s285, 5
      %s290 = smul.addr %s289, 5
      %s291 = smul.addr %s287, 30
      %s292 = sadd.s32 %s290, %s291
      %s293 = smul.addr %s292, 8
      %s294 = scalar_lea.vmem %s1, %s293
      %s295 = sadd.s32 %s20, 1
      %s296 = sadd.s32 %s20, 2
      %p297 = scmp.lt.s32.totalorder %s19, 1
      %s298 = scalar_select %p297, %s19, 1
      %p299 = scmp.lt.s32.totalorder %s296, 5
      %s300 = scalar_select %p299, %s296, 5
      %s301 = smul.addr %s300, 5
      %s302 = smul.addr %s298, 30
      %s303 = sadd.s32 %s301, %s302
      %s304 = smul.addr %s303, 8
      %s305 = scalar_lea.vmem %s2, %s304
      %s306 = sadd.s32 %s20, 2
      %p307 = scmp.lt.s32.totalorder %s19, 1
      %s308 = scalar_select %p307, %s19, 1
      %p309 = scmp.lt.s32.totalorder %s20, 3
      %s310 = scalar_select %p309, %s20, 3
      %s311 = smul.addr %s310, 3
      %s312 = smul.addr %s308, 12
      %s313 = sadd.s32 %s311, %s312
      %s314 = smul.addr %s313, 8
      %s315 = scalar_lea.vmem %s4, %s314
      %v316 = vld [vmem:[%s284] sm:$0xff]
      %v317 = vld [vmem:[%s284 + $0x8] sm:$0xff]
      %v318 = vld [vmem:[%s284 + $0x10] sm:$0x3f]
      %v319 = vld [vmem:[%s3] sm:$0xff]
      %v320 = vld [vmem:[%s284 + $0x1] sm:$0xff]
      %v321 = vld [vmem:[%s284 + $0x9] sm:$0xff]
      %v322 = vld [vmem:[%s284 + $0x11] sm:$0x3f]
      %s323 = scalar_lea.vmem %s3, 8
      %v324 = vld [vmem:[%s323] sm:$0xff]
      %vm325 = vcmask 64512
      %v327 = vsel %vm325, %v320, 0
      %v330 = vsel %vm325, %v321, 0
      %v333 = vsel %vm325, %v322, 0
      %335 = vmatpush.msra.mxu0 0.0
      %336 = vmatpush.msra.mxu0 0.0
      %337 = vmatpush.msra.mxu0 0.0
      %338 = vmatpush.msra.mxu0 0.0
      %339 = vmatpush.msra.mxu0 0.0
      %340 = vmatpush.msra.mxu0 0.0
      %341 = vmatpush.msra.mxu0 0.0
      %342 = vmatpush.msra.mxu0 0.0
      %343 = vmatpush.msra.mxu0 0.0
      %344 = vmatpush.msra.mxu0 0.0
      %345 = vmatpush.msra.mxu0 0.0
      %346 = vmatpush.msra.mxu0 0.0
      %347 = vmatpush.msra.mxu0 0.0
      %348 = vmatpush.msra.mxu0 0.0
      %349 = vmatpush.msra.mxu0 0.0
      %350 = vmatpush.msra.mxu0 %v324
      %351 = vmatmul.f32.gmra.mxu0 %v327
      %v352 = vpop.f32.mrf.mxu0
      %v353 = vadd.f32 0.0, %v352
      %354 = vmatmul.f32.gmra.mxu0 %v330
      %v355 = vpop.f32.mrf.mxu0
      %v356 = vadd.f32 0.0, %v355
      %357 = vmatmul.f32.gmra.mxu0 %v333
      %v358 = vpop.f32.mrf.mxu0
      %v359 = vadd.f32 0.0, %v358
      %360 = vdwg.mxu0
      %v362 = vsel %vm325, %v316, 0
      %v365 = vsel %vm325, %v317, 0
      %v368 = vsel %vm325, %v318, 0
      %370 = vmatpush.msra.mxu0 0.0
      %371 = vmatpush.msra.mxu0 0.0
      %372 = vmatpush.msra.mxu0 0.0
      %373 = vmatpush.msra.mxu0 0.0
      %374 = vmatpush.msra.mxu0 0.0
      %375 = vmatpush.msra.mxu0 0.0
      %376 = vmatpush.msra.mxu0 0.0
      %377 = vmatpush.msra.mxu0 0.0
      %378 = vmatpush.msra.mxu0 0.0
      %379 = vmatpush.msra.mxu0 0.0
      %380 = vmatpush.msra.mxu0 0.0
      %381 = vmatpush.msra.mxu0 0.0
      %382 = vmatpush.msra.mxu0 0.0
      %383 = vmatpush.msra.mxu0 0.0
      %384 = vmatpush.msra.mxu0 0.0
      %385 = vmatpush.msra.mxu0 %v319
      %386 = vmatmul.f32.gmra.mxu0 %v362
      %v387 = vpop.f32.mrf.mxu0
      %v388 = vadd.f32 %v353, %v387
      %389 = vmatmul.f32.gmra.mxu0 %v365
      %v390 = vpop.f32.mrf.mxu0
      %v391 = vadd.f32 %v356, %v390
      %392 = vmatmul.f32.gmra.mxu0 %v368
      %v393 = vpop.f32.mrf.mxu0
      %v394 = vadd.f32 %v359, %v393
      %395 = vdwg.mxu0
      %v396 = vld [vmem:[%s284 + $0x2] sm:$0xff]
      %v397 = vld [vmem:[%s284 + $0xa] sm:$0xff]
      %v398 = vld [vmem:[%s284 + $0x12] sm:$0x3f]
      %s399 = scalar_lea.vmem %s3, 16
      %v400 = vld [vmem:[%s399] sm:$0xff]
      %v402 = vsel %vm325, %v396, 0
      %v405 = vsel %vm325, %v397, 0
      %v408 = vsel %vm325, %v398, 0
      %410 = vmatpush.msra.mxu0 0.0
      %411 = vmatpush.msra.mxu0 0.0
      %412 = vmatpush.msra.mxu0 0.0
      %413 = vmatpush.msra.mxu0 0.0
      %414 = vmatpush.msra.mxu0 0.0
      %415 = vmatpush.msra.mxu0 0.0
      %416 = vmatpush.msra.mxu0 0.0
      %417 = vmatpush.msra.mxu0 0.0
      %418 = vmatpush.msra.mxu0 0.0
      %419 = vmatpush.msra.mxu0 0.0
      %420 = vmatpush.msra.mxu0 0.0
      %421 = vmatpush.msra.mxu0 0.0
      %422 = vmatpush.msra.mxu0 0.0
      %423 = vmatpush.msra.mxu0 0.0
      %424 = vmatpush.msra.mxu0 0.0
      %425 = vmatpush.msra.mxu0 %v400
      %426 = vmatmul.f32.gmra.mxu0 %v402
      %v427 = vpop.f32.mrf.mxu0
      %v428 = vadd.f32 0.0, %v427
      %429 = vmatmul.f32.gmra.mxu0 %v405
      %v430 = vpop.f32.mrf.mxu0
      %v431 = vadd.f32 0.0, %v430
      %432 = vmatmul.f32.gmra.mxu0 %v408
      %v433 = vpop.f32.mrf.mxu0
      %v434 = vadd.f32 0.0, %v433
      %435 = vdwg.mxu0
      %v436 = vadd.f32 %v388, %v428
      %v437 = vadd.f32 %v391, %v431
      %v438 = vadd.f32 %v394, %v434
      %v439 = vld [vmem:[%s284 + $0x6] sm:$0xff]
      %v440 = vld [vmem:[%s284 + $0xe] sm:$0xff]
      %v441 = vld [vmem:[%s284 + $0x16] sm:$0x3f]
      %s442 = scalar_lea.vmem %s3, 24
      %v443 = vld [vmem:[%s442] sm:$0xff]
      %v445 = vsel %vm325, %v439, 0
      %v448 = vsel %vm325, %v440, 0
      %v451 = vsel %vm325, %v441, 0
      %453 = vmatpush.msra.mxu0 0.0
      %454 = vmatpush.msra.mxu0 0.0
      %455 = vmatpush.msra.mxu0 0.0
      %456 = vmatpush.msra.mxu0 0.0
      %457 = vmatpush.msra.mxu0 0.0
      %458 = vmatpush.msra.mxu0 0.0
      %459 = vmatpush.msra.mxu0 0.0
      %460 = vmatpush.msra.mxu0 0.0
      %461 = vmatpush.msra.mxu0 0.0
      %462 = vmatpush.msra.mxu0 0.0
      %463 = vmatpush.msra.mxu0 0.0
      %464 = vmatpush.msra.mxu0 0.0
      %465 = vmatpush.msra.mxu0 0.0
      %466 = vmatpush.msra.mxu0 0.0
      %467 = vmatpush.msra.mxu0 0.0
      %468 = vmatpush.msra.mxu0 %v443
      %469 = vmatmul.f32.gmra.mxu0 %v445
      %v470 = vpop.f32.mrf.mxu0
      %v471 = vadd.f32 0.0, %v470
      %472 = vmatmul.f32.gmra.mxu0 %v448
      %v473 = vpop.f32.mrf.mxu0
      %v474 = vadd.f32 0.0, %v473
      %475 = vmatmul.f32.gmra.mxu0 %v451
      %v476 = vpop.f32.mrf.mxu0
      %v477 = vadd.f32 0.0, %v476
      %478 = vdwg.mxu0
      %v479 = vadd.f32 %v436, %v471
      %v480 = vadd.f32 %v437, %v474
      %v481 = vadd.f32 %v438, %v477
      %v482 = vld [vmem:[%s284 + $0x7] sm:$0xff]
      %v483 = vld [vmem:[%s284 + $0xf] sm:$0xff]
      %v484 = vld [vmem:[%s284 + $0x17] sm:$0x3f]
      %s485 = scalar_lea.vmem %s3, 32
      %v486 = vld [vmem:[%s485] sm:$0xff]
      %v488 = vsel %vm325, %v482, 0
      %v491 = vsel %vm325, %v483, 0
      %v494 = vsel %vm325, %v484, 0
      %496 = vmatpush.msra.mxu0 0.0
      %497 = vmatpush.msra.mxu0 0.0
      %498 = vmatpush.msra.mxu0 0.0
      %499 = vmatpush.msra.mxu0 0.0
      %500 = vmatpush.msra.mxu0 0.0
      %501 = vmatpush.msra.mxu0 0.0
      %502 = vmatpush.msra.mxu0 0.0
      %503 = vmatpush.msra.mxu0 0.0
      %504 = vmatpush.msra.mxu0 0.0
      %505 = vmatpush.msra.mxu0 0.0
      %506 = vmatpush.msra.mxu0 0.0
      %507 = vmatpush.msra.mxu0 0.0
      %508 = vmatpush.msra.mxu0 0.0
      %509 = vmatpush.msra.mxu0 0.0
      %510 = vmatpush.msra.mxu0 0.0
      %511 = vmatpush.msra.mxu0 %v486
      %512 = vmatmul.f32.gmra.mxu0 %v488
      %v513 = vpop.f32.mrf.mxu0
      %v514 = vadd.f32 0.0, %v513
      %515 = vmatmul.f32.gmra.mxu0 %v491
      %v516 = vpop.f32.mrf.mxu0
      %v517 = vadd.f32 0.0, %v516
      %518 = vmatmul.f32.gmra.mxu0 %v494
      %v519 = vpop.f32.mrf.mxu0
      %v520 = vadd.f32 0.0, %v519
      %521 = vdwg.mxu0
      %v522 = vadd.f32 %v479, %v514
      %v523 = vadd.f32 %v480, %v517
      %v524 = vadd.f32 %v481, %v520
      %v525 = vld [vmem:[%s284 + $0x8] sm:$0xff]
      %v526 = vld [vmem:[%s284 + $0x10] sm:$0xff]
      %v527 = vld [vmem:[%s284 + $0x18] sm:$0x3f]
      %s528 = scalar_lea.vmem %s3, 40
      %v529 = vld [vmem:[%s528] sm:$0xff]
      %v531 = vsel %vm325, %v525, 0
      %v534 = vsel %vm325, %v526, 0
      %v537 = vsel %vm325, %v527, 0
      %539 = vmatpush.msra.mxu0 0.0
      %540 = vmatpush.msra.mxu0 0.0
      %541 = vmatpush.msra.mxu0 0.0
      %542 = vmatpush.msra.mxu0 0.0
      %543 = vmatpush.msra.mxu0 0.0
      %544 = vmatpush.msra.mxu0 0.0
      %545 = vmatpush.msra.mxu0 0.0
      %546 = vmatpush.msra.mxu0 0.0
      %547 = vmatpush.msra.mxu0 0.0
      %548 = vmatpush.msra.mxu0 0.0
      %549 = vmatpush.msra.mxu0 0.0
      %550 = vmatpush.msra.mxu0 0.0
      %551 = vmatpush.msra.mxu0 0.0
      %552 = vmatpush.msra.mxu0 0.0
      %553 = vmatpush.msra.mxu0 0.0
      %554 = vmatpush.msra.mxu0 %v529
      %555 = vmatmul.f32.gmra.mxu0 %v531
      %v556 = vpop.f32.mrf.mxu0
      %v557 = vadd.f32 0.0, %v556
      %558 = vmatmul.f32.gmra.mxu0 %v534
      %v559 = vpop.f32.mrf.mxu0
      %v560 = vadd.f32 0.0, %v559
      %561 = vmatmul.f32.gmra.mxu0 %v537
      %v562 = vpop.f32.mrf.mxu0
      %v563 = vadd.f32 0.0, %v562
      %564 = vdwg.mxu0
      %v565 = vadd.f32 %v522, %v557
      %v566 = vadd.f32 %v523, %v560
      %v567 = vadd.f32 %v524, %v563
      %v568 = vld [vmem:[%s284 + $0xc] sm:$0xff]
      %v569 = vld [vmem:[%s284 + $0x14] sm:$0xff]
      %v570 = vld [vmem:[%s284 + $0x1c] sm:$0x3f]
      %s571 = scalar_lea.vmem %s3, 48
      %v572 = vld [vmem:[%s571] sm:$0xff]
      %v574 = vsel %vm325, %v568, 0
      %v577 = vsel %vm325, %v569, 0
      %v580 = vsel %vm325, %v570, 0
      %582 = vmatpush.msra.mxu0 0.0
      %583 = vmatpush.msra.mxu0 0.0
      %584 = vmatpush.msra.mxu0 0.0
      %585 = vmatpush.msra.mxu0 0.0
      %586 = vmatpush.msra.mxu0 0.0
      %587 = vmatpush.msra.mxu0 0.0
      %588 = vmatpush.msra.mxu0 0.0
      %589 = vmatpush.msra.mxu0 0.0
      %590 = vmatpush.msra.mxu0 0.0
      %591 = vmatpush.msra.mxu0 0.0
      %592 = vmatpush.msra.mxu0 0.0
      %593 = vmatpush.msra.mxu0 0.0
      %594 = vmatpush.msra.mxu0 0.0
      %595 = vmatpush.msra.mxu0 0.0
      %596 = vmatpush.msra.mxu0 0.0
      %597 = vmatpush.msra.mxu0 %v572
      %598 = vmatmul.f32.gmra.mxu0 %v574
      %v599 = vpop.f32.mrf.mxu0
      %v600 = vadd.f32 0.0, %v599
      %601 = vmatmul.f32.gmra.mxu0 %v577
      %v602 = vpop.f32.mrf.mxu0
      %v603 = vadd.f32 0.0, %v602
      %604 = vmatmul.f32.gmra.mxu0 %v580
      %v605 = vpop.f32.mrf.mxu0
      %v606 = vadd.f32 0.0, %v605
      %607 = vdwg.mxu0
      %v608 = vadd.f32 %v565, %v600
      %v609 = vadd.f32 %v566, %v603
      %v610 = vadd.f32 %v567, %v606
      %v611 = vld [vmem:[%s284 + $0xd] sm:$0xff]
      %v612 = vld [vmem:[%s284 + $0x15] sm:$0xff]
      %v613 = vld [vmem:[%s284 + $0x1d] sm:$0x3f]
      %s614 = scalar_lea.vmem %s3, 56
      %v615 = vld [vmem:[%s614] sm:$0xff]
      %v617 = vsel %vm325, %v611, 0
      %v620 = vsel %vm325, %v612, 0
      %v623 = vsel %vm325, %v613, 0
      %625 = vmatpush.msra.mxu0 0.0
      %626 = vmatpush.msra.mxu0 0.0
      %627 = vmatpush.msra.mxu0 0.0
      %628 = vmatpush.msra.mxu0 0.0
      %629 = vmatpush.msra.mxu0 0.0
      %630 = vmatpush.msra.mxu0 0.0
      %631 = vmatpush.msra.mxu0 0.0
      %632 = vmatpush.msra.mxu0 0.0
      %633 = vmatpush.msra.mxu0 0.0
      %634 = vmatpush.msra.mxu0 0.0
      %635 = vmatpush.msra.mxu0 0.0
      %636 = vmatpush.msra.mxu0 0.0
      %637 = vmatpush.msra.mxu0 0.0
      %638 = vmatpush.msra.mxu0 0.0
      %639 = vmatpush.msra.mxu0 0.0
      %640 = vmatpush.msra.mxu0 %v615
      %641 = vmatmul.f32.gmra.mxu0 %v617
      %v642 = vpop.f32.mrf.mxu0
      %v643 = vadd.f32 0.0, %v642
      %644 = vmatmul.f32.gmra.mxu0 %v620
      %v645 = vpop.f32.mrf.mxu0
      %v646 = vadd.f32 0.0, %v645
      %647 = vmatmul.f32.gmra.mxu0 %v623
      %v648 = vpop.f32.mrf.mxu0
      %v649 = vadd.f32 0.0, %v648
      %650 = vdwg.mxu0
      %v651 = vadd.f32 %v608, %v643
      %v652 = vadd.f32 %v609, %v646
      %v653 = vadd.f32 %v610, %v649
      %v654 = vld [vmem:[%s284 + $0xe] sm:$0xff]
      %v655 = vld [vmem:[%s284 + $0x16] sm:$0xff]
      %v656 = vld [vmem:[%s284 + $0x1e] sm:$0x3f]
      %s657 = scalar_lea.vmem %s3, 64
      %v658 = vld [vmem:[%s657] sm:$0xff]
      %v660 = vsel %vm325, %v654, 0
      %v663 = vsel %vm325, %v655, 0
      %v666 = vsel %vm325, %v656, 0
      %668 = vmatpush.msra.mxu0 0.0
      %669 = vmatpush.msra.mxu0 0.0
      %670 = vmatpush.msra.mxu0 0.0
      %671 = vmatpush.msra.mxu0 0.0
      %672 = vmatpush.msra.mxu0 0.0
      %673 = vmatpush.msra.mxu0 0.0
      %674 = vmatpush.msra.mxu0 0.0
      %675 = vmatpush.msra.mxu0 0.0
      %676 = vmatpush.msra.mxu0 0.0
      %677 = vmatpush.msra.mxu0 0.0
      %678 = vmatpush.msra.mxu0 0.0
      %679 = vmatpush.msra.mxu0 0.0
      %680 = vmatpush.msra.mxu0 0.0
      %681 = vmatpush.msra.mxu0 0.0
      %682 = vmatpush.msra.mxu0 0.0
      %683 = vmatpush.msra.mxu0 %v658
      %684 = vmatmul.f32.gmra.mxu0 %v660
      %v685 = vpop.f32.mrf.mxu0
      %v686 = vadd.f32 0.0, %v685
      %687 = vmatmul.f32.gmra.mxu0 %v663
      %v688 = vpop.f32.mrf.mxu0
      %v689 = vadd.f32 0.0, %v688
      %690 = vmatmul.f32.gmra.mxu0 %v666
      %v691 = vpop.f32.mrf.mxu0
      %v692 = vadd.f32 0.0, %v691
      %693 = vdwg.mxu0
      %v694 = vadd.f32 %v651, %v686
      %v695 = vadd.f32 %v652, %v689
      %v696 = vadd.f32 %v653, %v692
      %v697 = vld [vmem:[%s294] sm:$0xff]
      %v698 = vld [vmem:[%s294 + $0x8] sm:$0xff]
      %v699 = vld [vmem:[%s294 + $0x10] sm:$0x3f]
      %s700 = scalar_lea.vmem %s3, 72
      %v701 = vld [vmem:[%s700] sm:$0xff]
      %v703 = vsel %vm325, %v697, 0
      %v706 = vsel %vm325, %v698, 0
      %v709 = vsel %vm325, %v699, 0
      %711 = vmatpush.msra.mxu0 0.0
      %712 = vmatpush.msra.mxu0 0.0
      %713 = vmatpush.msra.mxu0 0.0
      %714 = vmatpush.msra.mxu0 0.0
      %715 = vmatpush.msra.mxu0 0.0
      %716 = vmatpush.msra.mxu0 0.0
      %717 = vmatpush.msra.mxu0 0.0
      %718 = vmatpush.msra.mxu0 0.0
      %719 = vmatpush.msra.mxu0 0.0
      %720 = vmatpush.msra.mxu0 0.0
      %721 = vmatpush.msra.mxu0 0.0
      %722 = vmatpush.msra.mxu0 0.0
      %723 = vmatpush.msra.mxu0 0.0
      %724 = vmatpush.msra.mxu0 0.0
      %725 = vmatpush.msra.mxu0 0.0
      %726 = vmatpush.msra.mxu0 %v701
      %727 = vmatmul.f32.gmra.mxu0 %v703
      %v728 = vpop.f32.mrf.mxu0
      %v729 = vadd.f32 0.0, %v728
      %730 = vmatmul.f32.gmra.mxu0 %v706
      %v731 = vpop.f32.mrf.mxu0
      %v732 = vadd.f32 0.0, %v731
      %733 = vmatmul.f32.gmra.mxu0 %v709
      %v734 = vpop.f32.mrf.mxu0
      %v735 = vadd.f32 0.0, %v734
      %736 = vdwg.mxu0
      %v737 = vadd.f32 %v694, %v729
      %v738 = vadd.f32 %v695, %v732
      %v739 = vadd.f32 %v696, %v735
      %v740 = vld [vmem:[%s294 + $0x1] sm:$0xff]
      %v741 = vld [vmem:[%s294 + $0x9] sm:$0xff]
      %v742 = vld [vmem:[%s294 + $0x11] sm:$0x3f]
      %s743 = scalar_lea.vmem %s3, 80
      %v744 = vld [vmem:[%s743] sm:$0xff]
      %v746 = vsel %vm325, %v740, 0
      %v749 = vsel %vm325, %v741, 0
      %v752 = vsel %vm325, %v742, 0
      %754 = vmatpush.msra.mxu0 0.0
      %755 = vmatpush.msra.mxu0 0.0
      %756 = vmatpush.msra.mxu0 0.0
      %757 = vmatpush.msra.mxu0 0.0
      %758 = vmatpush.msra.mxu0 0.0
      %759 = vmatpush.msra.mxu0 0.0
      %760 = vmatpush.msra.mxu0 0.0
      %761 = vmatpush.msra.mxu0 0.0
      %762 = vmatpush.msra.mxu0 0.0
      %763 = vmatpush.msra.mxu0 0.0
      %764 = vmatpush.msra.mxu0 0.0
      %765 = vmatpush.msra.mxu0 0.0
      %766 = vmatpush.msra.mxu0 0.0
      %767 = vmatpush.msra.mxu0 0.0
      %768 = vmatpush.msra.mxu0 0.0
      %769 = vmatpush.msra.mxu0 %v744
      %770 = vmatmul.f32.gmra.mxu0 %v746
      %v771 = vpop.f32.mrf.mxu0
      %v772 = vadd.f32 0.0, %v771
      %773 = vmatmul.f32.gmra.mxu0 %v749
      %v774 = vpop.f32.mrf.mxu0
      %v775 = vadd.f32 0.0, %v774
      %776 = vmatmul.f32.gmra.mxu0 %v752
      %v777 = vpop.f32.mrf.mxu0
      %v778 = vadd.f32 0.0, %v777
      %779 = vdwg.mxu0
      %v780 = vadd.f32 %v737, %v772
      %v781 = vadd.f32 %v738, %v775
      %v782 = vadd.f32 %v739, %v778
      %v783 = vld [vmem:[%s294 + $0x2] sm:$0xff]
      %v784 = vld [vmem:[%s294 + $0xa] sm:$0xff]
      %v785 = vld [vmem:[%s294 + $0x12] sm:$0x3f]
      %s786 = scalar_lea.vmem %s3, 88
      %v787 = vld [vmem:[%s786] sm:$0xff]
      %v789 = vsel %vm325, %v783, 0
      %v792 = vsel %vm325, %v784, 0
      %v795 = vsel %vm325, %v785, 0
      %797 = vmatpush.msra.mxu0 0.0
      %798 = vmatpush.msra.mxu0 0.0
      %799 = vmatpush.msra.mxu0 0.0
      %800 = vmatpush.msra.mxu0 0.0
      %801 = vmatpush.msra.mxu0 0.0
      %802 = vmatpush.msra.mxu0 0.0
      %803 = vmatpush.msra.mxu0 0.0
      %804 = vmatpush.msra.mxu0 0.0
      %805 = vmatpush.msra.mxu0 0.0
      %806 = vmatpush.msra.mxu0 0.0
      %807 = vmatpush.msra.mxu0 0.0
      %808 = vmatpush.msra.mxu0 0.0
      %809 = vmatpush.msra.mxu0 0.0
      %810 = vmatpush.msra.mxu0 0.0
      %811 = vmatpush.msra.mxu0 0.0
      %812 = vmatpush.msra.mxu0 %v787
      %813 = vmatmul.f32.gmra.mxu0 %v789
      %v814 = vpop.f32.mrf.mxu0
      %v815 = vadd.f32 0.0, %v814
      %816 = vmatmul.f32.gmra.mxu0 %v792
      %v817 = vpop.f32.mrf.mxu0
      %v818 = vadd.f32 0.0, %v817
      %819 = vmatmul.f32.gmra.mxu0 %v795
      %v820 = vpop.f32.mrf.mxu0
      %v821 = vadd.f32 0.0, %v820
      %822 = vdwg.mxu0
      %v823 = vadd.f32 %v780, %v815
      %v824 = vadd.f32 %v781, %v818
      %v825 = vadd.f32 %v782, %v821
      %v826 = vld [vmem:[%s294 + $0x6] sm:$0xff]
      %v827 = vld [vmem:[%s294 + $0xe] sm:$0xff]
      %v828 = vld [vmem:[%s294 + $0x16] sm:$0x3f]
      %s829 = scalar_lea.vmem %s3, 96
      %v830 = vld [vmem:[%s829] sm:$0xff]
      %v832 = vsel %vm325, %v826, 0
      %v835 = vsel %vm325, %v827, 0
      %v838 = vsel %vm325, %v828, 0
      %840 = vmatpush.msra.mxu0 0.0
      %841 = vmatpush.msra.mxu0 0.0
      %842 = vmatpush.msra.mxu0 0.0
      %843 = vmatpush.msra.mxu0 0.0
      %844 = vmatpush.msra.mxu0 0.0
      %845 = vmatpush.msra.mxu0 0.0
      %846 = vmatpush.msra.mxu0 0.0
      %847 = vmatpush.msra.mxu0 0.0
      %848 = vmatpush.msra.mxu0 0.0
      %849 = vmatpush.msra.mxu0 0.0
      %850 = vmatpush.msra.mxu0 0.0
      %851 = vmatpush.msra.mxu0 0.0
      %852 = vmatpush.msra.mxu0 0.0
      %853 = vmatpush.msra.mxu0 0.0
      %854 = vmatpush.msra.mxu0 0.0
      %855 = vmatpush.msra.mxu0 %v830
      %856 = vmatmul.f32.gmra.mxu0 %v832
      %v857 = vpop.f32.mrf.mxu0
      %v858 = vadd.f32 0.0, %v857
      %859 = vmatmul.f32.gmra.mxu0 %v835
      %v860 = vpop.f32.mrf.mxu0
      %v861 = vadd.f32 0.0, %v860
      %862 = vmatmul.f32.gmra.mxu0 %v838
      %v863 = vpop.f32.mrf.mxu0
      %v864 = vadd.f32 0.0, %v863
      %865 = vdwg.mxu0
      %v866 = vadd.f32 %v823, %v858
      %v867 = vadd.f32 %v824, %v861
      %v868 = vadd.f32 %v825, %v864
      %v869 = vld [vmem:[%s294 + $0x7] sm:$0xff]
      %v870 = vld [vmem:[%s294 + $0xf] sm:$0xff]
      %v871 = vld [vmem:[%s294 + $0x17] sm:$0x3f]
      %s872 = scalar_lea.vmem %s3, 104
      %v873 = vld [vmem:[%s872] sm:$0xff]
      %v875 = vsel %vm325, %v869, 0
      %v878 = vsel %vm325, %v870, 0
      %v881 = vsel %vm325, %v871, 0
      %883 = vmatpush.msra.mxu0 0.0
      %884 = vmatpush.msra.mxu0 0.0
      %885 = vmatpush.msra.mxu0 0.0
      %886 = vmatpush.msra.mxu0 0.0
      %887 = vmatpush.msra.mxu0 0.0
      %888 = vmatpush.msra.mxu0 0.0
      %889 = vmatpush.msra.mxu0 0.0
      %890 = vmatpush.msra.mxu0 0.0
      %891 = vmatpush.msra.mxu0 0.0
      %892 = vmatpush.msra.mxu0 0.0
      %893 = vmatpush.msra.mxu0 0.0
      %894 = vmatpush.msra.mxu0 0.0
      %895 = vmatpush.msra.mxu0 0.0
      %896 = vmatpush.msra.mxu0 0.0
      %897 = vmatpush.msra.mxu0 0.0
      %898 = vmatpush.msra.mxu0 %v873
      %899 = vmatmul.f32.gmra.mxu0 %v875
      %v900 = vpop.f32.mrf.mxu0
      %v901 = vadd.f32 0.0, %v900
      %902 = vmatmul.f32.gmra.mxu0 %v878
      %v903 = vpop.f32.mrf.mxu0
      %v904 = vadd.f32 0.0, %v903
      %905 = vmatmul.f32.gmra.mxu0 %v881
      %v906 = vpop.f32.mrf.mxu0
      %v907 = vadd.f32 0.0, %v906
      %908 = vdwg.mxu0
      %v909 = vadd.f32 %v866, %v901
      %v910 = vadd.f32 %v867, %v904
      %v911 = vadd.f32 %v868, %v907
      %v912 = vld [vmem:[%s294 + $0x8] sm:$0xff]
      %v913 = vld [vmem:[%s294 + $0x10] sm:$0xff]
      %v914 = vld [vmem:[%s294 + $0x18] sm:$0x3f]
      %s915 = scalar_lea.vmem %s3, 112
      %v916 = vld [vmem:[%s915] sm:$0xff]
      %v918 = vsel %vm325, %v912, 0
      %v921 = vsel %vm325, %v913, 0
      %v924 = vsel %vm325, %v914, 0
      %926 = vmatpush.msra.mxu0 0.0
      %927 = vmatpush.msra.mxu0 0.0
      %928 = vmatpush.msra.mxu0 0.0
      %929 = vmatpush.msra.mxu0 0.0
      %930 = vmatpush.msra.mxu0 0.0
      %931 = vmatpush.msra.mxu0 0.0
      %932 = vmatpush.msra.mxu0 0.0
      %933 = vmatpush.msra.mxu0 0.0
      %934 = vmatpush.msra.mxu0 0.0
      %935 = vmatpush.msra.mxu0 0.0
      %936 = vmatpush.msra.mxu0 0.0
      %937 = vmatpush.msra.mxu0 0.0
      %938 = vmatpush.msra.mxu0 0.0
      %939 = vmatpush.msra.mxu0 0.0
      %940 = vmatpush.msra.mxu0 0.0
      %941 = vmatpush.msra.mxu0 %v916
      %942 = vmatmul.f32.gmra.mxu0 %v918
      %v943 = vpop.f32.mrf.mxu0
      %v944 = vadd.f32 0.0, %v943
      %945 = vmatmul.f32.gmra.mxu0 %v921
      %v946 = vpop.f32.mrf.mxu0
      %v947 = vadd.f32 0.0, %v946
      %948 = vmatmul.f32.gmra.mxu0 %v924
      %v949 = vpop.f32.mrf.mxu0
      %v950 = vadd.f32 0.0, %v949
      %951 = vdwg.mxu0
      %v952 = vadd.f32 %v909, %v944
      %v953 = vadd.f32 %v910, %v947
      %v954 = vadd.f32 %v911, %v950
      %v955 = vld [vmem:[%s294 + $0xc] sm:$0xff]
      %v956 = vld [vmem:[%s294 + $0x14] sm:$0xff]
      %v957 = vld [vmem:[%s294 + $0x1c] sm:$0x3f]
      %s958 = scalar_lea.vmem %s3, 120
      %v959 = vld [vmem:[%s958] sm:$0xff]
      %v961 = vsel %vm325, %v955, 0
      %v964 = vsel %vm325, %v956, 0
      %v967 = vsel %vm325, %v957, 0
      %969 = vmatpush.msra.mxu0 0.0
      %970 = vmatpush.msra.mxu0 0.0
      %971 = vmatpush.msra.mxu0 0.0
      %972 = vmatpush.msra.mxu0 0.0
      %973 = vmatpush.msra.mxu0 0.0
      %974 = vmatpush.msra.mxu0 0.0
      %975 = vmatpush.msra.mxu0 0.0
      %976 = vmatpush.msra.mxu0 0.0
      %977 = vmatpush.msra.mxu0 0.0
      %978 = vmatpush.msra.mxu0 0.0
      %979 = vmatpush.msra.mxu0 0.0
      %980 = vmatpush.msra.mxu0 0.0
      %981 = vmatpush.msra.mxu0 0.0
      %982 = vmatpush.msra.mxu0 0.0
      %983 = vmatpush.msra.mxu0 0.0
      %984 = vmatpush.msra.mxu0 %v959
      %985 = vmatmul.f32.gmra.mxu0 %v961
      %v986 = vpop.f32.mrf.mxu0
      %v987 = vadd.f32 0.0, %v986
      %988 = vmatmul.f32.gmra.mxu0 %v964
      %v989 = vpop.f32.mrf.mxu0
      %v990 = vadd.f32 0.0, %v989
      %991 = vmatmul.f32.gmra.mxu0 %v967
      %v992 = vpop.f32.mrf.mxu0
      %v993 = vadd.f32 0.0, %v992
      %994 = vdwg.mxu0
      %v995 = vadd.f32 %v952, %v987
      %v996 = vadd.f32 %v953, %v990
      %v997 = vadd.f32 %v954, %v993
      %v998 = vld [vmem:[%s294 + $0xd] sm:$0xff]
      %v999 = vld [vmem:[%s294 + $0x15] sm:$0xff]
      %v1000 = vld [vmem:[%s294 + $0x1d] sm:$0x3f]
      %s1001 = scalar_lea.vmem %s3, 128
      %v1002 = vld [vmem:[%s1001] sm:$0xff]
      %v1004 = vsel %vm325, %v998, 0
      %v1007 = vsel %vm325, %v999, 0
      %v1010 = vsel %vm325, %v1000, 0
      %1012 = vmatpush.msra.mxu0 0.0
      %1013 = vmatpush.msra.mxu0 0.0
      %1014 = vmatpush.msra.mxu0 0.0
      %1015 = vmatpush.msra.mxu0 0.0
      %1016 = vmatpush.msra.mxu0 0.0
      %1017 = vmatpush.msra.mxu0 0.0
      %1018 = vmatpush.msra.mxu0 0.0
      %1019 = vmatpush.msra.mxu0 0.0
      %1020 = vmatpush.msra.mxu0 0.0
      %1021 = vmatpush.msra.mxu0 0.0
      %1022 = vmatpush.msra.mxu0 0.0
      %1023 = vmatpush.msra.mxu0 0.0
      %1024 = vmatpush.msra.mxu0 0.0
      %1025 = vmatpush.msra.mxu0 0.0
      %1026 = vmatpush.msra.mxu0 0.0
      %1027 = vmatpush.msra.mxu0 %v1002
      %1028 = vmatmul.f32.gmra.mxu0 %v1004
      %v1029 = vpop.f32.mrf.mxu0
      %v1030 = vadd.f32 0.0, %v1029
      %1031 = vmatmul.f32.gmra.mxu0 %v1007
      %v1032 = vpop.f32.mrf.mxu0
      %v1033 = vadd.f32 0.0, %v1032
      %1034 = vmatmul.f32.gmra.mxu0 %v1010
      %v1035 = vpop.f32.mrf.mxu0
      %v1036 = vadd.f32 0.0, %v1035
      %1037 = vdwg.mxu0
      %v1038 = vadd.f32 %v995, %v1030
      %v1039 = vadd.f32 %v996, %v1033
      %v1040 = vadd.f32 %v997, %v1036
      %v1041 = vld [vmem:[%s294 + $0xe] sm:$0xff]
      %v1042 = vld [vmem:[%s294 + $0x16] sm:$0xff]
      %v1043 = vld [vmem:[%s294 + $0x1e] sm:$0x3f]
      %s1044 = scalar_lea.vmem %s3, 136
      %v1045 = vld [vmem:[%s1044] sm:$0xff]
      %v1047 = vsel %vm325, %v1041, 0
      %v1050 = vsel %vm325, %v1042, 0
      %v1053 = vsel %vm325, %v1043, 0
      %1055 = vmatpush.msra.mxu0 0.0
      %1056 = vmatpush.msra.mxu0 0.0
      %1057 = vmatpush.msra.mxu0 0.0
      %1058 = vmatpush.msra.mxu0 0.0
      %1059 = vmatpush.msra.mxu0 0.0
      %1060 = vmatpush.msra.mxu0 0.0
      %1061 = vmatpush.msra.mxu0 0.0
      %1062 = vmatpush.msra.mxu0 0.0
      %1063 = vmatpush.msra.mxu0 0.0
      %1064 = vmatpush.msra.mxu0 0.0
      %1065 = vmatpush.msra.mxu0 0.0
      %1066 = vmatpush.msra.mxu0 0.0
      %1067 = vmatpush.msra.mxu0 0.0
      %1068 = vmatpush.msra.mxu0 0.0
      %1069 = vmatpush.msra.mxu0 0.0
      %1070 = vmatpush.msra.mxu0 %v1045
      %1071 = vmatmul.f32.gmra.mxu0 %v1047
      %v1072 = vpop.f32.mrf.mxu0
      %v1073 = vadd.f32 0.0, %v1072
      %1074 = vmatmul.f32.gmra.mxu0 %v1050
      %v1075 = vpop.f32.mrf.mxu0
      %v1076 = vadd.f32 0.0, %v1075
      %1077 = vmatmul.f32.gmra.mxu0 %v1053
      %v1078 = vpop.f32.mrf.mxu0
      %v1079 = vadd.f32 0.0, %v1078
      %1080 = vdwg.mxu0
      %v1081 = vadd.f32 %v1038, %v1073
      %v1082 = vadd.f32 %v1039, %v1076
      %v1083 = vadd.f32 %v1040, %v1079
      %v1084 = vld [vmem:[%s305] sm:$0xff]
      %v1085 = vld [vmem:[%s305 + $0x8] sm:$0xff]
      %v1086 = vld [vmem:[%s305 + $0x10] sm:$0x3f]
      %s1087 = scalar_lea.vmem %s3, 144
      %v1088 = vld [vmem:[%s1087] sm:$0xff]
      %v1090 = vsel %vm325, %v1084, 0
      %v1093 = vsel %vm325, %v1085, 0
      %v1096 = vsel %vm325, %v1086, 0
      %1098 = vmatpush.msra.mxu0 0.0
      %1099 = vmatpush.msra.mxu0 0.0
      %1100 = vmatpush.msra.mxu0 0.0
      %1101 = vmatpush.msra.mxu0 0.0
      %1102 = vmatpush.msra.mxu0 0.0
      %1103 = vmatpush.msra.mxu0 0.0
      %1104 = vmatpush.msra.mxu0 0.0
      %1105 = vmatpush.msra.mxu0 0.0
      %1106 = vmatpush.msra.mxu0 0.0
      %1107 = vmatpush.msra.mxu0 0.0
      %1108 = vmatpush.msra.mxu0 0.0
      %1109 = vmatpush.msra.mxu0 0.0
      %1110 = vmatpush.msra.mxu0 0.0
      %1111 = vmatpush.msra.mxu0 0.0
      %1112 = vmatpush.msra.mxu0 0.0
      %1113 = vmatpush.msra.mxu0 %v1088
      %1114 = vmatmul.f32.gmra.mxu0 %v1090
      %v1115 = vpop.f32.mrf.mxu0
      %v1116 = vadd.f32 0.0, %v1115
      %1117 = vmatmul.f32.gmra.mxu0 %v1093
      %v1118 = vpop.f32.mrf.mxu0
      %v1119 = vadd.f32 0.0, %v1118
      %1120 = vmatmul.f32.gmra.mxu0 %v1096
      %v1121 = vpop.f32.mrf.mxu0
      %v1122 = vadd.f32 0.0, %v1121
      %1123 = vdwg.mxu0
      %v1124 = vadd.f32 %v1081, %v1116
      %v1125 = vadd.f32 %v1082, %v1119
      %v1126 = vadd.f32 %v1083, %v1122
      %v1127 = vld [vmem:[%s305 + $0x1] sm:$0xff]
      %v1128 = vld [vmem:[%s305 + $0x9] sm:$0xff]
      %v1129 = vld [vmem:[%s305 + $0x11] sm:$0x3f]
      %s1130 = scalar_lea.vmem %s3, 152
      %v1131 = vld [vmem:[%s1130] sm:$0xff]
      %v1133 = vsel %vm325, %v1127, 0
      %v1136 = vsel %vm325, %v1128, 0
      %v1139 = vsel %vm325, %v1129, 0
      %1141 = vmatpush.msra.mxu0 0.0
      %1142 = vmatpush.msra.mxu0 0.0
      %1143 = vmatpush.msra.mxu0 0.0
      %1144 = vmatpush.msra.mxu0 0.0
      %1145 = vmatpush.msra.mxu0 0.0
      %1146 = vmatpush.msra.mxu0 0.0
      %1147 = vmatpush.msra.mxu0 0.0
      %1148 = vmatpush.msra.mxu0 0.0
      %1149 = vmatpush.msra.mxu0 0.0
      %1150 = vmatpush.msra.mxu0 0.0
      %1151 = vmatpush.msra.mxu0 0.0
      %1152 = vmatpush.msra.mxu0 0.0
      %1153 = vmatpush.msra.mxu0 0.0
      %1154 = vmatpush.msra.mxu0 0.0
      %1155 = vmatpush.msra.mxu0 0.0
      %1156 = vmatpush.msra.mxu0 %v1131
      %1157 = vmatmul.f32.gmra.mxu0 %v1133
      %v1158 = vpop.f32.mrf.mxu0
      %v1159 = vadd.f32 0.0, %v1158
      %1160 = vmatmul.f32.gmra.mxu0 %v1136
      %v1161 = vpop.f32.mrf.mxu0
      %v1162 = vadd.f32 0.0, %v1161
      %1163 = vmatmul.f32.gmra.mxu0 %v1139
      %v1164 = vpop.f32.mrf.mxu0
      %v1165 = vadd.f32 0.0, %v1164
      %1166 = vdwg.mxu0
      %v1167 = vadd.f32 %v1124, %v1159
      %v1168 = vadd.f32 %v1125, %v1162
      %v1169 = vadd.f32 %v1126, %v1165
      %v1170 = vld [vmem:[%s305 + $0x2] sm:$0xff]
      %v1171 = vld [vmem:[%s305 + $0xa] sm:$0xff]
      %v1172 = vld [vmem:[%s305 + $0x12] sm:$0x3f]
      %s1173 = scalar_lea.vmem %s3, 160
      %v1174 = vld [vmem:[%s1173] sm:$0xff]
      %v1176 = vsel %vm325, %v1170, 0
      %v1179 = vsel %vm325, %v1171, 0
      %v1182 = vsel %vm325, %v1172, 0
      %1184 = vmatpush.msra.mxu0 0.0
      %1185 = vmatpush.msra.mxu0 0.0
      %1186 = vmatpush.msra.mxu0 0.0
      %1187 = vmatpush.msra.mxu0 0.0
      %1188 = vmatpush.msra.mxu0 0.0
      %1189 = vmatpush.msra.mxu0 0.0
      %1190 = vmatpush.msra.mxu0 0.0
      %1191 = vmatpush.msra.mxu0 0.0
      %1192 = vmatpush.msra.mxu0 0.0
      %1193 = vmatpush.msra.mxu0 0.0
      %1194 = vmatpush.msra.mxu0 0.0
      %1195 = vmatpush.msra.mxu0 0.0
      %1196 = vmatpush.msra.mxu0 0.0
      %1197 = vmatpush.msra.mxu0 0.0
      %1198 = vmatpush.msra.mxu0 0.0
      %1199 = vmatpush.msra.mxu0 %v1174
      %1200 = vmatmul.f32.gmra.mxu0 %v1176
      %v1201 = vpop.f32.mrf.mxu0
      %v1202 = vadd.f32 0.0, %v1201
      %1203 = vmatmul.f32.gmra.mxu0 %v1179
      %v1204 = vpop.f32.mrf.mxu0
      %v1205 = vadd.f32 0.0, %v1204
      %1206 = vmatmul.f32.gmra.mxu0 %v1182
      %v1207 = vpop.f32.mrf.mxu0
      %v1208 = vadd.f32 0.0, %v1207
      %1209 = vdwg.mxu0
      %v1210 = vadd.f32 %v1167, %v1202
      %v1211 = vadd.f32 %v1168, %v1205
      %v1212 = vadd.f32 %v1169, %v1208
      %v1213 = vld [vmem:[%s305 + $0x6] sm:$0xff]
      %v1214 = vld [vmem:[%s305 + $0xe] sm:$0xff]
      %v1215 = vld [vmem:[%s305 + $0x16] sm:$0x3f]
      %s1216 = scalar_lea.vmem %s3, 168
      %v1217 = vld [vmem:[%s1216] sm:$0xff]
      %v1219 = vsel %vm325, %v1213, 0
      %v1222 = vsel %vm325, %v1214, 0
      %v1225 = vsel %vm325, %v1215, 0
      %1227 = vmatpush.msra.mxu0 0.0
      %1228 = vmatpush.msra.mxu0 0.0
      %1229 = vmatpush.msra.mxu0 0.0
      %1230 = vmatpush.msra.mxu0 0.0
      %1231 = vmatpush.msra.mxu0 0.0
      %1232 = vmatpush.msra.mxu0 0.0
      %1233 = vmatpush.msra.mxu0 0.0
      %1234 = vmatpush.msra.mxu0 0.0
      %1235 = vmatpush.msra.mxu0 0.0
      %1236 = vmatpush.msra.mxu0 0.0
      %1237 = vmatpush.msra.mxu0 0.0
      %1238 = vmatpush.msra.mxu0 0.0
      %1239 = vmatpush.msra.mxu0 0.0
      %1240 = vmatpush.msra.mxu0 0.0
      %1241 = vmatpush.msra.mxu0 0.0
      %1242 = vmatpush.msra.mxu0 %v1217
      %1243 = vmatmul.f32.gmra.mxu0 %v1219
      %v1244 = vpop.f32.mrf.mxu0
      %v1245 = vadd.f32 0.0, %v1244
      %1246 = vmatmul.f32.gmra.mxu0 %v1222
      %v1247 = vpop.f32.mrf.mxu0
      %v1248 = vadd.f32 0.0, %v1247
      %1249 = vmatmul.f32.gmra.mxu0 %v1225
      %v1250 = vpop.f32.mrf.mxu0
      %v1251 = vadd.f32 0.0, %v1250
      %1252 = vdwg.mxu0
      %v1253 = vadd.f32 %v1210, %v1245
      %v1254 = vadd.f32 %v1211, %v1248
      %v1255 = vadd.f32 %v1212, %v1251
      %v1256 = vld [vmem:[%s305 + $0x7] sm:$0xff]
      %v1257 = vld [vmem:[%s305 + $0xf] sm:$0xff]
      %v1258 = vld [vmem:[%s305 + $0x17] sm:$0x3f]
      %s1259 = scalar_lea.vmem %s3, 176
      %v1260 = vld [vmem:[%s1259] sm:$0xff]
      %v1262 = vsel %vm325, %v1256, 0
      %v1265 = vsel %vm325, %v1257, 0
      %v1268 = vsel %vm325, %v1258, 0
      %1270 = vmatpush.msra.mxu0 0.0
      %1271 = vmatpush.msra.mxu0 0.0
      %1272 = vmatpush.msra.mxu0 0.0
      %1273 = vmatpush.msra.mxu0 0.0
      %1274 = vmatpush.msra.mxu0 0.0
      %1275 = vmatpush.msra.mxu0 0.0
      %1276 = vmatpush.msra.mxu0 0.0
      %1277 = vmatpush.msra.mxu0 0.0
      %1278 = vmatpush.msra.mxu0 0.0
      %1279 = vmatpush.msra.mxu0 0.0
      %1280 = vmatpush.msra.mxu0 0.0
      %1281 = vmatpush.msra.mxu0 0.0
      %1282 = vmatpush.msra.mxu0 0.0
      %1283 = vmatpush.msra.mxu0 0.0
      %1284 = vmatpush.msra.mxu0 0.0
      %1285 = vmatpush.msra.mxu0 %v1260
      %1286 = vmatmul.f32.gmra.mxu0 %v1262
      %v1287 = vpop.f32.mrf.mxu0
      %v1288 = vadd.f32 0.0, %v1287
      %1289 = vmatmul.f32.gmra.mxu0 %v1265
      %v1290 = vpop.f32.mrf.mxu0
      %v1291 = vadd.f32 0.0, %v1290
      %1292 = vmatmul.f32.gmra.mxu0 %v1268
      %v1293 = vpop.f32.mrf.mxu0
      %v1294 = vadd.f32 0.0, %v1293
      %1295 = vdwg.mxu0
      %v1296 = vadd.f32 %v1253, %v1288
      %v1297 = vadd.f32 %v1254, %v1291
      %v1298 = vadd.f32 %v1255, %v1294
      %v1299 = vld [vmem:[%s305 + $0x8] sm:$0xff]
      %v1300 = vld [vmem:[%s305 + $0x10] sm:$0xff]
      %v1301 = vld [vmem:[%s305 + $0x18] sm:$0x3f]
      %s1302 = scalar_lea.vmem %s3, 184
      %v1303 = vld [vmem:[%s1302] sm:$0xff]
      %v1305 = vsel %vm325, %v1299, 0
      %v1308 = vsel %vm325, %v1300, 0
      %v1311 = vsel %vm325, %v1301, 0
      %1313 = vmatpush.msra.mxu0 0.0
      %1314 = vmatpush.msra.mxu0 0.0
      %1315 = vmatpush.msra.mxu0 0.0
      %1316 = vmatpush.msra.mxu0 0.0
      %1317 = vmatpush.msra.mxu0 0.0
      %1318 = vmatpush.msra.mxu0 0.0
      %1319 = vmatpush.msra.mxu0 0.0
      %1320 = vmatpush.msra.mxu0 0.0
      %1321 = vmatpush.msra.mxu0 0.0
      %1322 = vmatpush.msra.mxu0 0.0
      %1323 = vmatpush.msra.mxu0 0.0
      %1324 = vmatpush.msra.mxu0 0.0
      %1325 = vmatpush.msra.mxu0 0.0
      %1326 = vmatpush.msra.mxu0 0.0
      %1327 = vmatpush.msra.mxu0 0.0
      %1328 = vmatpush.msra.mxu0 %v1303
      %1329 = vmatmul.f32.gmra.mxu0 %v1305
      %v1330 = vpop.f32.mrf.mxu0
      %v1331 = vadd.f32 0.0, %v1330
      %1332 = vmatmul.f32.gmra.mxu0 %v1308
      %v1333 = vpop.f32.mrf.mxu0
      %v1334 = vadd.f32 0.0, %v1333
      %1335 = vmatmul.f32.gmra.mxu0 %v1311
      %v1336 = vpop.f32.mrf.mxu0
      %v1337 = vadd.f32 0.0, %v1336
      %1338 = vdwg.mxu0
      %v1339 = vadd.f32 %v1296, %v1331
      %v1340 = vadd.f32 %v1297, %v1334
      %v1341 = vadd.f32 %v1298, %v1337
      %v1342 = vld [vmem:[%s305 + $0xc] sm:$0xff]
      %v1343 = vld [vmem:[%s305 + $0x14] sm:$0xff]
      %v1344 = vld [vmem:[%s305 + $0x1c] sm:$0x3f]
      %s1345 = scalar_lea.vmem %s3, 192
      %v1346 = vld [vmem:[%s1345] sm:$0xff]
      %v1348 = vsel %vm325, %v1342, 0
      %v1351 = vsel %vm325, %v1343, 0
      %v1354 = vsel %vm325, %v1344, 0
      %1356 = vmatpush.msra.mxu0 0.0
      %1357 = vmatpush.msra.mxu0 0.0
      %1358 = vmatpush.msra.mxu0 0.0
      %1359 = vmatpush.msra.mxu0 0.0
      %1360 = vmatpush.msra.mxu0 0.0
      %1361 = vmatpush.msra.mxu0 0.0
      %1362 = vmatpush.msra.mxu0 0.0
      %1363 = vmatpush.msra.mxu0 0.0
      %1364 = vmatpush.msra.mxu0 0.0
      %1365 = vmatpush.msra.mxu0 0.0
      %1366 = vmatpush.msra.mxu0 0.0
      %1367 = vmatpush.msra.mxu0 0.0
      %1368 = vmatpush.msra.mxu0 0.0
      %1369 = vmatpush.msra.mxu0 0.0
      %1370 = vmatpush.msra.mxu0 0.0
      %1371 = vmatpush.msra.mxu0 %v1346
      %1372 = vmatmul.f32.gmra.mxu0 %v1348
      %v1373 = vpop.f32.mrf.mxu0
      %v1374 = vadd.f32 0.0, %v1373
      %1375 = vmatmul.f32.gmra.mxu0 %v1351
      %v1376 = vpop.f32.mrf.mxu0
      %v1377 = vadd.f32 0.0, %v1376
      %1378 = vmatmul.f32.gmra.mxu0 %v1354
      %v1379 = vpop.f32.mrf.mxu0
      %v1380 = vadd.f32 0.0, %v1379
      %1381 = vdwg.mxu0
      %v1382 = vadd.f32 %v1339, %v1374
      %v1383 = vadd.f32 %v1340, %v1377
      %v1384 = vadd.f32 %v1341, %v1380
      %v1385 = vld [vmem:[%s305 + $0xd] sm:$0xff]
      %v1386 = vld [vmem:[%s305 + $0x15] sm:$0xff]
      %v1387 = vld [vmem:[%s305 + $0x1d] sm:$0x3f]
      %s1388 = scalar_lea.vmem %s3, 200
      %v1389 = vld [vmem:[%s1388] sm:$0xff]
      %v1391 = vsel %vm325, %v1385, 0
      %v1394 = vsel %vm325, %v1386, 0
      %v1397 = vsel %vm325, %v1387, 0
      %1399 = vmatpush.msra.mxu0 0.0
      %1400 = vmatpush.msra.mxu0 0.0
      %1401 = vmatpush.msra.mxu0 0.0
      %1402 = vmatpush.msra.mxu0 0.0
      %1403 = vmatpush.msra.mxu0 0.0
      %1404 = vmatpush.msra.mxu0 0.0
      %1405 = vmatpush.msra.mxu0 0.0
      %1406 = vmatpush.msra.mxu0 0.0
      %1407 = vmatpush.msra.mxu0 0.0
      %1408 = vmatpush.msra.mxu0 0.0
      %1409 = vmatpush.msra.mxu0 0.0
      %1410 = vmatpush.msra.mxu0 0.0
      %1411 = vmatpush.msra.mxu0 0.0
      %1412 = vmatpush.msra.mxu0 0.0
      %1413 = vmatpush.msra.mxu0 0.0
      %1414 = vmatpush.msra.mxu0 %v1389
      %1415 = vmatmul.f32.gmra.mxu0 %v1391
      %v1416 = vpop.f32.mrf.mxu0
      %v1417 = vadd.f32 0.0, %v1416
      %1418 = vmatmul.f32.gmra.mxu0 %v1394
      %v1419 = vpop.f32.mrf.mxu0
      %v1420 = vadd.f32 0.0, %v1419
      %1421 = vmatmul.f32.gmra.mxu0 %v1397
      %v1422 = vpop.f32.mrf.mxu0
      %v1423 = vadd.f32 0.0, %v1422
      %1424 = vdwg.mxu0
      %v1425 = vadd.f32 %v1382, %v1417
      %v1426 = vadd.f32 %v1383, %v1420
      %v1427 = vadd.f32 %v1384, %v1423
      %v1428 = vld [vmem:[%s305 + $0xe] sm:$0xff]
      %v1429 = vld [vmem:[%s305 + $0x16] sm:$0xff]
      %v1430 = vld [vmem:[%s305 + $0x1e] sm:$0x3f]
      %s1431 = scalar_lea.vmem %s3, 208
      %v1432 = vld [vmem:[%s1431] sm:$0xff]
      %v1434 = vsel %vm325, %v1428, 0
      %v1437 = vsel %vm325, %v1429, 0
      %v1440 = vsel %vm325, %v1430, 0
      %1442 = vmatpush.msra.mxu0 0.0
      %1443 = vmatpush.msra.mxu0 0.0
      %1444 = vmatpush.msra.mxu0 0.0
      %1445 = vmatpush.msra.mxu0 0.0
      %1446 = vmatpush.msra.mxu0 0.0
      %1447 = vmatpush.msra.mxu0 0.0
      %1448 = vmatpush.msra.mxu0 0.0
      %1449 = vmatpush.msra.mxu0 0.0
      %1450 = vmatpush.msra.mxu0 0.0
      %1451 = vmatpush.msra.mxu0 0.0
      %1452 = vmatpush.msra.mxu0 0.0
      %1453 = vmatpush.msra.mxu0 0.0
      %1454 = vmatpush.msra.mxu0 0.0
      %1455 = vmatpush.msra.mxu0 0.0
      %1456 = vmatpush.msra.mxu0 0.0
      %1457 = vmatpush.msra.mxu0 %v1432
      %1458 = vmatmul.f32.gmra.mxu0 %v1434
      %v1459 = vpop.f32.mrf.mxu0
      %v1460 = vadd.f32 0.0, %v1459
      %1461 = vmatmul.f32.gmra.mxu0 %v1437
      %v1462 = vpop.f32.mrf.mxu0
      %v1463 = vadd.f32 0.0, %v1462
      %1464 = vmatmul.f32.gmra.mxu0 %v1440
      %v1465 = vpop.f32.mrf.mxu0
      %v1466 = vadd.f32 0.0, %v1465
      %1467 = vdwg.mxu0
      %v1468 = vadd.f32 %v1425, %v1460
      %v1469 = vadd.f32 %v1426, %v1463
      %v1470 = vadd.f32 %v1427, %v1466
      %1471 = vst [vmem:[%s315] sm:$0xff] %v1468
      %1472 = vst [vmem:[%s315 + $0x8] sm:$0xff] %v1469
      %1473 = vst [vmem:[%s315 + $0x10] sm:$0x3f] %v1470
      %p1474 = scmp.lt.s32.totalorder %s19, 1
      %s1475 = scalar_select %p1474, %s19, 1
      %p1476 = scmp.lt.s32.totalorder %s20, 3
      %s1477 = scalar_select %p1476, %s20, 3
      %s1478 = smul.addr %s1477, 3
      %s1479 = smul.addr %s1475, 12
      %s1480 = sadd.s32 %s1478, %s1479
      %s1481 = smul.addr %s1480, 8
      %s1482 = scalar_lea.vmem %s4, %s1481
      // Predicated region
      $region37: #{down_block.9} parent=35 // pred_check
        %p1483 = pneg %p156
      $region38: #{down_block.9} parent=35 // pred_check_branch
        %1485 = sbr.rel (%p1483) target = $region40
      $region39: #{down_block.9} parent=35 // pred_region
        _
      $region40: #{down_block.9} parent=35 // pred_fallthru
        _
    $region36: #{down_block.9} parent=5 // pred_fallthru
      _
    %p1486 = scmp.le.s32.totalorder 2, %s10
    // Predicated region
    $region41: #{down_block.9} parent=5 // pred_check
      %p1487 = pneg %p1486
    $region42: #{down_block.9} parent=5 // pred_check_branch
      %1489 = sbr.rel (%p1487) target = $region44
    $region43: #{down_block.9} parent=5 // pred_region
      %s1490 = ssub.s32 %s10, 2
      // Predicated region
      $region45: #{down_block.9} parent=43 // pred_check
        %p1491 = pneg %p162
      $region46: #{down_block.9} parent=43 // pred_check_branch
        %1493 = sbr.rel (%p1491) target = $region48
      $region47: #{down_block.9} parent=43 // pred_region
        %p1494 = scmp.lt.s32.totalorder %s21, 1
        %s1495 = scalar_select %p1494, %s21, 1
        %p1496 = scmp.lt.s32.totalorder %s22, 3
        %s1497 = scalar_select %p1496, %s22, 3
        %s1498 = smul.addr %s1497, 3
        %s1499 = smul.addr %s1495, 12
        %s1500 = sadd.s32 %s1498, %s1499
        %s1501 = smul.addr %s1500, 8
        %s1502 = scalar_lea.vmem %s4, %s1501
      $region48: #{down_block.9} parent=43 // pred_fallthru
        _
    $region44: #{down_block.9} parent=5 // pred_fallthru
      _
  $region6: #{down_block.9} parent=0 // loop_footer
    %s14 = sadd.s32 1, %s10
  $region7: #{down_block.9} parent=0 // loop_footer_branch
    %9 = sbr.rel target = $region3
  $region8: #{down_block.9} parent=0 // loop_exit
    _

// kernel: down_block.11
$region0: #{down_block.11}
  #allocation0 [shape = 'u32[]', space=smem, size = 0x4, offset = 0x4, fixed_abs, tag = 'smem constant byte address 0x4 - core index']
  #allocation1 [shape = 'u32[72,128]{1,0:T(1,128)}', space=vmem, size = 0x9000, scoped, tag = 'internal scratch']
  %s0 = inlined_call_operand.vmem [shape: f32[2,64,8], index: 0, kind: input, shape index: {}]
  %s1 = inlined_call_operand.vmem [shape: f32[2,1,8], index: 1, kind: input, shape index: {}]
  %s2 = inlined_call_operand.vmem [shape: f32[2,1,8], index: 2, kind: input, shape index: {}]
  %s3 = inlined_call_operand.vmem [shape: f32[1,8], index: 3, kind: input, shape index: {}]
  %s4 = inlined_call_operand.vmem [shape: f32[1,8], index: 4, kind: input, shape index: {}]
  %s5 = inlined_call_operand.hbm [shape: f32[2,64,8], index: 5, kind: output, shape index: {}]
  %s6 = sld [smem:[#allocation0]]
  $region53: #{down_block.11} parent=0
    _
  %s8 = ssub.s32 1, %s6
  %s9 = scalar_select 0, %s8, %s6
  $region1: #{down_block.11} parent=0
    #allocation2 [shape = 'u8[65536]{0}', space=vmem, size = 0x10000, scoped, tag = 'output window, operand 0']
    #allocation3 [shape = 's32[2]{0}', space=sflag, size = 0x8, scoped, tag = 'scoped memory for down_block.11']
    %10 = vsyncpa [#allocation3], 0
    %s11 = scalar_lea.sflag [#allocation3], 1
    %12 = vsyncpa %s11, 0
    loop: start=0, step=1, limit=4
    $region2: #{down_block.11} parent=1 // loop_pre_header
      _
    $region3: #{down_block.11} parent=1 // loop_header
      %s14 = sphi 0, %s18
      %p15 = scmp.ge.s32.totalorder %s14, 4
      %s21 = sphi 0, %s33
      %s22 = sphi 0, %s29
      %s23 = sphi 0, %s21
      %s24 = sphi 0, %s22
      %s25 = sphi 0, %s23
      %s26 = sphi 0, %s24
      %s38 = sphi 0, %s40
      %s41 = sphi 0, %s38
      %s42 = sphi 0, %s41
      %s58 = sphi 0, %s42
      %s64 = sphi 0, %s66
      %s67 = sphi 0, %s64
      %s68 = sphi 0, %s67
      %s84 = sphi 0, %s68
      %s90 = sphi 0, %s92
      %s93 = sphi 0, %s90
      %s94 = sphi 0, %s93
      %s110 = sphi 0, %s94
      %s114 = sphi 0, %s114
      %s116 = sphi 0, %s114
      %s117 = sphi 0, %s116
      %s131 = sphi 0, %s117
      %s135 = sphi 0, %s135
      %s137 = sphi 0, %s135
      %s138 = sphi 0, %s137
      %s152 = sphi 0, %s138
      %s160 = sphi 0, %s162
      %s163 = sphi 0, %s160
      %s164 = sphi 0, %s163
      %s180 = sphi 0, %s164
    $region4: #{down_block.11} parent=1 // loop_header_branch
      %17 = sbr.rel (%p15) target = $region8
    $region5: #{down_block.11} parent=1 // loop_body
      %s19 = ssub.s32 %s14, 1
      %s20 = ssub.s32 %s14, 2
      %s27 = sadd.s32 1, %s22
      %p28 = scmp.ge.s32.totalorder %s27, 1
      %s29 = scalar_select %p28, 0, %s27
      %s30 = sadd.s32 1, %s21
      %s31 = scalar_select %p28, %s30, %s21
      %p32 = scmp.ge.s32.totalorder %s31, 2
      %s33 = scalar_select %p32, 0, %s31
      %s34 = ssub.s32 %s21, %s33
      %s35 = ssub.s32 %s22, %s29
      %s36 = sor.u32 %s34, %s35
      %p37 = scmp.eq.s32.totalorder %s36, 0
      %s39 = sadd.s32 %s38, 1
      %s40 = scalar_select %p37, %s38, %s39
      %p43 = pneg %p37
      %p44 = scmp.eq.s32.totalorder %s14, 1
      %p45 = por %p43, %p44
      %p46 = scmp.ne.s32.totalorder %s38, %s41
      %p47 = scmp.eq.s32.totalorder %s14, 0
      %p48 = por %p46, %p47
      %p49 = scmp.ne.s32.totalorder %s38, %s41
      %p50 = scmp.eq.s32.totalorder %s19, 1
      %p51 = por %p49, %p50
      %p52 = scmp.ne.s32.totalorder %s41, %s42
      %p53 = scmp.eq.s32.totalorder %s19, 0
      %p54 = por %p52, %p53
      %p55 = scmp.ne.s32.totalorder %s41, %s42
      %p56 = scmp.eq.s32.totalorder %s20, 1
      %p57 = por %p55, %p56
      %p59 = scmp.ne.s32.totalorder %s42, %s58
      %p60 = scmp.eq.s32.totalorder %s20, 0
      %p61 = por %p59, %p60
      %s62 = ssub.s32 %s21, %s33
      %p63 = scmp.eq.s32.totalorder %s62, 0
      %s65 = sadd.s32 %s64, 1
      %s66 = scalar_select %p63, %s64, %s65
      %p69 = pneg %p63
      %p70 = scmp.eq.s32.totalorder %s14, 1
      %p71 = por %p69, %p70
      %p72 = scmp.ne.s32.totalorder %s64, %s67
      %p73 = scmp.eq.s32.totalorder %s14, 0
      %p74 = por %p72, %p73
      %p75 = scmp.ne.s32.totalorder %s64, %s67
      %p76 = scmp.eq.s32.totalorder %s19, 1
      %p77 = por %p75, %p76
      %p78 = scmp.ne.s32.totalorder %s67, %s68
      %p79 = scmp.eq.s32.totalorder %s19, 0
      %p80 = por %p78, %p79
      %p81 = scmp.ne.s32.totalorder %s67, %s68
      %p82 = scmp.eq.s32.totalorder %s20, 1
      %p83 = por %p81, %p82
      %p85 = scmp.ne.s32.totalorder %s68, %s84
      %p86 = scmp.eq.s32.totalorder %s20, 0
      %p87 = por %p85, %p86
      %s88 = ssub.s32 %s21, %s33
      %p89 = scmp.eq.s32.totalorder %s88, 0
      %s91 = sadd.s32 %s90, 1
      %s92 = scalar_select %p89, %s90, %s91
      %p95 = pneg %p89
      %p96 = scmp.eq.s32.totalorder %s14, 1
      %p97 = por %p95, %p96
      %p98 = scmp.ne.s32.totalorder %s90, %s93
      %p99 = scmp.eq.s32.totalorder %s14, 0
      %p100 = por %p98, %p99
      %p101 = scmp.ne.s32.totalorder %s90, %s93
      %p102 = scmp.eq.s32.totalorder %s19, 1
      %p103 = por %p101, %p102
      %p104 = scmp.ne.s32.totalorder %s93, %s94
      %p105 = scmp.eq.s32.totalorder %s19, 0
      %p106 = por %p104, %p105
      %p107 = scmp.ne.s32.totalorder %s93, %s94
      %p108 = scmp.eq.s32.totalorder %s20, 1
      %p109 = por %p107, %p108
      %p111 = scmp.ne.s32.totalorder %s94, %s110
      %p112 = scmp.eq.s32.totalorder %s20, 0
      %p113 = por %p111, %p112
      %s115 = sadd.s32 %s114, 1
      %p118 = scmp.eq.s32.totalorder %s14, 1
      %p119 = scmp.ne.s32.totalorder %s114, %s116
      %p120 = scmp.eq.s32.totalorder %s14, 0
      %p121 = por %p119, %p120
      %p122 = scmp.ne.s32.totalorder %s114, %s116
      %p123 = scmp.eq.s32.totalorder %s19, 1
      %p124 = por %p122, %p123
      %p125 = scmp.ne.s32.totalorder %s116, %s117
      %p126 = scmp.eq.s32.totalorder %s19, 0
      %p127 = por %p125, %p126
      %p128 = scmp.ne.s32.totalorder %s116, %s117
      %p129 = scmp.eq.s32.totalorder %s20, 1
      %p130 = por %p128, %p129
      %p132 = scmp.ne.s32.totalorder %s117, %s131
      %p133 = scmp.eq.s32.totalorder %s20, 0
      %p134 = por %p132, %p133
      %s136 = sadd.s32 %s135, 1
      %p139 = scmp.eq.s32.totalorder %s14, 1
      %p140 = scmp.ne.s32.totalorder %s135, %s137
      %p141 = scmp.eq.s32.totalorder %s14, 0
      %p142 = por %p140, %p141
      %p143 = scmp.ne.s32.totalorder %s135, %s137
      %p144 = scmp.eq.s32.totalorder %s19, 1
      %p145 = por %p143, %p144
      %p146 = scmp.ne.s32.totalorder %s137, %s138
      %p147 = scmp.eq.s32.totalorder %s19, 0
      %p148 = por %p146, %p147
      %p149 = scmp.ne.s32.totalorder %s137, %s138
      %p150 = scmp.eq.s32.totalorder %s20, 1
      %p151 = por %p149, %p150
      %p153 = scmp.ne.s32.totalorder %s138, %s152
      %p154 = scmp.eq.s32.totalorder %s20, 0
      %p155 = por %p153, %p154
      %s156 = ssub.s32 %s21, %s33
      %s157 = ssub.s32 %s22, %s29
      %s158 = sor.u32 %s156, %s157
      %p159 = scmp.eq.s32.totalorder %s158, 0
      %s161 = sadd.s32 %s160, 1
      %s162 = scalar_select %p159, %s160, %s161
      %p165 = pneg %p159
      %p166 = scmp.eq.s32.totalorder %s14, 1
      %p167 = por %p165, %p166
      %p168 = scmp.ne.s32.totalorder %s160, %s163
      %p169 = scmp.eq.s32.totalorder %s14, 0
      %p170 = por %p168, %p169
      %p171 = scmp.ne.s32.totalorder %s160, %s163
      %p172 = scmp.eq.s32.totalorder %s19, 1
      %p173 = por %p171, %p172
      %p174 = scmp.ne.s32.totalorder %s163, %s164
      %p175 = scmp.eq.s32.totalorder %s19, 0
      %p176 = por %p174, %p175
      %p177 = scmp.ne.s32.totalorder %s163, %s164
      %p178 = scmp.eq.s32.totalorder %s20, 1
      %p179 = por %p177, %p178
      %p181 = scmp.ne.s32.totalorder %s164, %s180
      %p182 = scmp.eq.s32.totalorder %s20, 0
      %p183 = por %p181, %p182
      %p184 = scmp.le.s32.totalorder 1, %s14
      %p185 = scmp.lt.s32.totalorder %s14, 3
      %p186 = pnand %p184, %p185
      %p187 = pneg %p186
      // Predicated region
      $region9: #{down_block.11} parent=5 // pred_check
        _
      $region10: #{down_block.11} parent=5 // pred_check_branch
        %189 = sbr.rel (%p186) target = $region12
      $region11: #{down_block.11} parent=5 // pred_region
        %s190 = ssub.s32 %s14, 1
        // Predicated region
        $region13: #{down_block.11} parent=11 // pred_check
          %p191 = pneg %p127
        $region14: #{down_block.11} parent=11 // pred_check_branch
          %193 = sbr.rel (%p191) target = $region16
        $region15: #{down_block.11} parent=11 // pred_region
          _
        $region16: #{down_block.11} parent=11 // pred_fallthru
          _
        // Predicated region
        $region17: #{down_block.11} parent=11 // pred_check
          %p194 = pneg %p148
        $region18: #{down_block.11} parent=11 // pred_check_branch
          %196 = sbr.rel (%p194) target = $region20
        $region19: #{down_block.11} parent=11 // pred_region
          _
        $region20: #{down_block.11} parent=11 // pred_fallthru
          _
      $region12: #{down_block.11} parent=5 // pred_fallthru
        _
      %p197 = scmp.lt.s32.totalorder %s14, 2
      // Predicated region
      $region21: #{down_block.11} parent=5 // pred_check
        %p198 = pneg %p197
      $region22: #{down_block.11} parent=5 // pred_check_branch
        %200 = sbr.rel (%p198) target = $region24
      $region23: #{down_block.11} parent=5 // pred_region
        // Predicated region
        $region25: #{down_block.11} parent=23 // pred_check
          %p201 = pneg %p48
        $region26: #{down_block.11} parent=23 // pred_check_branch
          %203 = sbr.rel (%p201) target = $region28
        $region27: #{down_block.11} parent=23 // pred_region
          %s204 = smul.u32 8, %s22
          %p205 = scmp.lt.s32.totalorder %s21, 1
          %s206 = scalar_select %p205, %s21, 1
          %p207 = scmp.lt.s32.totalorder %s204, 7
          %s208 = scalar_select %p207, %s204, 7
          %s209 = smul.addr %s206, 8
          %s210 = sadd.s32 %s208, %s209
          %s211 = smul.addr %s210, 8
          %s212 = scalar_lea.vmem %s0, %s211
          %s213 = smul.u32 8, %s22
        $region28: #{down_block.11} parent=23 // pred_fallthru
          _
        // Predicated region
        $region29: #{down_block.11} parent=23 // pred_check
          %p214 = pneg %p74
        $region30: #{down_block.11} parent=23 // pred_check_branch
          %216 = sbr.rel (%p214) target = $region32
        $region31: #{down_block.11} parent=23 // pred_region
          %p217 = scmp.lt.s32.totalorder %s21, 1
          %s218 = scalar_select %p217, %s21, 1
          %s219 = scalar_lea.vmem %s1, %s218
        $region32: #{down_block.11} parent=23 // pred_fallthru
          _
        // Predicated region
        $region33: #{down_block.11} parent=23 // pred_check
          %p220 = pneg %p100
        $region34: #{down_block.11} parent=23 // pred_check_branch
          %222 = sbr.rel (%p220) target = $region36
        $region35: #{down_block.11} parent=23 // pred_region
          %p223 = scmp.lt.s32.totalorder %s21, 1
          %s224 = scalar_select %p223, %s21, 1
          %s225 = scalar_lea.vmem %s2, %s224
        $region36: #{down_block.11} parent=23 // pred_fallthru
          _
      $region24: #{down_block.11} parent=5 // pred_fallthru
        _
      %p226 = scmp.le.s32.totalorder 1, %s14
      %p227 = scmp.lt.s32.totalorder %s14, 3
      %p228 = pnand %p226, %p227
      %p229 = pneg %p228
      // Predicated region
      $region37: #{down_block.11} parent=5 // pred_check
        _
      $region38: #{down_block.11} parent=5 // pred_check_branch
        %231 = sbr.rel (%p228) target = $region40
      $region39: #{down_block.11} parent=5 // pred_region
        %s232 = ssub.s32 %s14, 1
        %s233 = smul.u32 8, %s24
        %p234 = scmp.lt.s32.totalorder %s23, 1
        %s235 = scalar_select %p234, %s23, 1
        %p236 = scmp.lt.s32.totalorder %s233, 7
        %s237 = scalar_select %p236, %s233, 7
        %s238 = smul.addr %s235, 8
        %s239 = sadd.s32 %s237, %s238
        %s240 = smul.addr %s239, 8
        %s241 = scalar_lea.vmem %s0, %s240
        %p242 = pneg %p54
        %p243 = pneg %p51
        %p244 = scmp.lt.s32.totalorder %s23, 1
        %s245 = scalar_select %p244, %s23, 1
        %s246 = scalar_lea.vmem %s1, %s245
        %p247 = pneg %p80
        %p248 = pneg %p77
        %p249 = scmp.lt.s32.totalorder %s23, 1
        %s250 = scalar_select %p249, %s23, 1
        %s251 = scalar_lea.vmem %s2, %s250
        %p252 = pneg %p106
        %p253 = pneg %p103
        %p254 = pneg %p127
        %p255 = pneg %p124
        %p256 = pneg %p148
        %p257 = pneg %p145
        %p258 = pneg %p176
        %p259 = pneg %p173
        %s260 = sand.u32 %s163, 1
        %s261 = scalar_lea.sflag [#allocation3], %s260
        %s262 = sand.u32 %s163, 1
        %s263 = smul.addr %s262, 64
        %s264 = scalar_lea.vmem [#allocation2], %s263
        %s265 = smul.u32 8, %s24
        %p266 = scmp.lt.s32.totalorder %s23, 1
        %s267 = scalar_select %p266, %s23, 1
        %p268 = scmp.lt.s32.totalorder %s265, 7
        %s269 = scalar_select %p268, %s265, 7
        %s270 = smul.addr %s267, 8
        %s271 = sadd.s32 %s269, %s270
        %s272 = smul.addr %s271, 8
        %s273 = scalar_lea.vmem %s0, %s272
        %s274 = smul.u32 8, %s24
        %p275 = scmp.lt.s32.totalorder %s23, 1
        %s276 = scalar_select %p275, %s23, 1
        %s277 = scalar_lea.vmem %s1, %s276
        %p278 = scmp.lt.s32.totalorder %s23, 1
        %s279 = scalar_select %p278, %s23, 1
        %s280 = scalar_lea.vmem %s2, %s279
        %s281 = smul.u32 8, %s24
        %v282 = vld [vmem:[%s273] sm:$0xff]
        %v283 = vld [vmem:[%s273 + $0x8] sm:$0xff]
        %v284 = vld [vmem:[%s273 + $0x10] sm:$0xff]
        %v285 = vld [vmem:[%s273 + $0x18] sm:$0xff]
        %v286 = vld [vmem:[%s273 + $0x20] sm:$0xff]
        %v287 = vld [vmem:[%s273 + $0x28] sm:$0xff]
        %v288 = vld [vmem:[%s273 + $0x30] sm:$0xff]
        %v289 = vld [vmem:[%s273 + $0x38] sm:$0xff]
        %v290 = vld [vmem:[%s277] sm:$0x1]
        %v291 = vmul.f32 %v290, 0.015625
        %v292 = vld [vmem:[%s280] sm:$0x1]
        %v293 = vmul.f32 %v292, 0.015625
        %v294 = vmul.f32 %v291, %v291
        %v295 = vsub.f32 %v293, %v294
        %v296 = vmax.f32 %v295, 0.0
        %v297 = vadd.f32 %v296, 1e-05
        %v298 = vrsqrt.pop %v297
        %v299 = vmul.f32 %v298, %v297
        %v300 = vmul.f32 %v299, %v298
        %v301 = vmul.f32 0.5, %v300
        %v302 = vsub.f32 1.5, %v301
        %v303 = vmul.f32 %v298, %v302
        %vm304 = vweird.f32 %v297
        %vm305 = vweird.f32 %v298
        %vm306 = vmor %vm304, %vm305
        %v307 = vsel %vm306, %v298, %v303
        %v309 = vperm.slane %v291, 0
        %v311 = vsub.f32 %v282, %v309
        %v312 = vsub.f32 %v283, %v309
        %v313 = vsub.f32 %v284, %v309
        %v314 = vsub.f32 %v285, %v309
        %v315 = vsub.f32 %v286, %v309
        %v316 = vsub.f32 %v287, %v309
        %v317 = vsub.f32 %v288, %v309
        %v318 = vsub.f32 %v289, %v309
        %v319 = vld [vmem:[%s3] sm:$0x1]
        %v320 = vmul.f32 %v307, %v319
        %v322 = vperm.slane %v320, 0
        %v324 = vmul.f32 %v311, %v322
        %v325 = vmul.f32 %v312, %v322
        %v326 = vmul.f32 %v313, %v322
        %v327 = vmul.f32 %v314, %v322
        %v328 = vmul.f32 %v315, %v322
        %v329 = vmul.f32 %v316, %v322
        %v330 = vmul.f32 %v317, %v322
        %v331 = vmul.f32 %v318, %v322
        %v332 = vld [vmem:[%s4] sm:$0x1]
        %v334 = vperm.slane %v332, 0
        %v336 = vadd.f32 %v324, %v334
        %v337 = vadd.f32 %v325, %v334
        %v338 = vadd.f32 %v326, %v334
        %v339 = vadd.f32 %v327, %v334
        %v340 = vadd.f32 %v328, %v334
        %v341 = vadd.f32 %v329, %v334
        %v342 = vadd.f32 %v330, %v334
        %v343 = vadd.f32 %v331, %v334
        %vm344 = vcmp.ge.f32.partialorder %v336, 0.0
        %vm345 = vcmp.ge.f32.partialorder %v337, 0.0
        %vm346 = vcmp.ge.f32.partialorder %v338, 0.0
        %vm347 = vcmp.ge.f32.partialorder %v339, 0.0
        %vm348 = vcmp.ge.f32.partialorder %v340, 0.0
        %vm349 = vcmp.ge.f32.partialorder %v341, 0.0
        %vm350 = vcmp.ge.f32.partialorder %v342, 0.0
        %vm351 = vcmp.ge.f32.partialorder %v343, 0.0
        %v352 = vmul.f32 %v336, 0.01
        %v353 = vmul.f32 %v337, 0.01
        %v354 = vmul.f32 %v338, 0.01
        %v355 = vmul.f32 %v339, 0.01
        %v356 = vmul.f32 %v340, 0.01
        %v357 = vmul.f32 %v341, 0.01
        %v358 = vmul.f32 %v342, 0.01
        %v359 = vmul.f32 %v343, 0.01
        %v360 = vsel %vm344, %v336, %v352
        %v361 = vsel %vm345, %v337, %v353
        %v362 = vsel %vm346, %v338, %v354
        %v363 = vsel %vm347, %v339, %v355
        %v364 = vsel %vm348, %v340, %v356
        %v365 = vsel %vm349, %v341, %v357
        %v366 = vsel %vm350, %v342, %v358
        %v367 = vsel %vm351, %v343, %v359
        %vm368 = vcmask 64512
        %369 = vst.msk [vmem:[%s264] sm:$0xff] %vm368, %v360
        %370 = vst.msk [vmem:[%s264 + $0x8] sm:$0xff] %vm368, %v361
        %371 = vst.msk [vmem:[%s264 + $0x10] sm:$0xff] %vm368, %v362
        %372 = vst.msk [vmem:[%s264 + $0x18] sm:$0xff] %vm368, %v363
        %373 = vst.msk [vmem:[%s264 + $0x20] sm:$0xff] %vm368, %v364
        %374 = vst.msk [vmem:[%s264 + $0x28] sm:$0xff] %vm368, %v365
        %375 = vst.msk [vmem:[%s264 + $0x30] sm:$0xff] %vm368, %v366
        %376 = vst.msk [vmem:[%s264 + $0x38] sm:$0xff] %vm368, %v367
        %s377 = sand.u32 %s163, 1
        %s378 = scalar_lea.sflag [#allocation3], %s377
        %s379 = sand.u32 %s163, 1
        %s380 = smul.addr %s379, 64
        %s381 = scalar_lea.vmem [#allocation2], %s380
        // Predicated region
        $region41: #{down_block.11} parent=39 // pred_check
          %p382 = pneg %p173
        $region42: #{down_block.11} parent=39 // pred_check_branch
          %384 = sbr.rel (%p382) target = $region44
        $region43: #{down_block.11} parent=39 // pred_region
          %s385 = smul.u32 8, %s24
          %387 = vsyncadd %s378, 0
          %s388 = smul.addr %s23, 8
          %s389 = sadd.s32 %s385, %s388
          %s390 = smul.addr %s389, 8
          %s391 = scalar_lea.hbm %s5, %s390
          %s392 = sshll.u32 %s381, 4
          %s393 = int_to_ptr.vmem [resolvable:$true] %s392
          %s394 = sshll.u32 %s391, 4
          %s395 = int_to_ptr.hbm [resolvable:$true] %s394
          %400 = dma.vmem_to_hbm [thread:$0]  %s393, 1024, %s395, %s378, 128, 128, 8
        $region44: #{down_block.11} parent=39 // pred_fallthru
          _
      $region40: #{down_block.11} parent=5 // pred_fallthru
        _
      %p401 = scmp.le.s32.totalorder 2, %s14
      // Predicated region
      $region45: #{down_block.11} parent=5 // pred_check
        %p402 = pneg %p401
      $region46: #{down_block.11} parent=5 // pred_check_branch
        %404 = sbr.rel (%p402) target = $region48
      $region47: #{down_block.11} parent=5 // pred_region
        %s405 = ssub.s32 %s14, 2
        // Predicated region
        $region49: #{down_block.11} parent=47 // pred_check
          %p406 = pneg %p179
        $region50: #{down_block.11} parent=47 // pred_check_branch
          %408 = sbr.rel (%p406) target = $region52
        $region51: #{down_block.11} parent=47 // pred_region
          %s409 = sand.u32 %s164, 1
          %s410 = scalar_lea.sflag [#allocation3], %s409
          %s411 = sand.u32 %s164, 1
          %s412 = smul.addr %s411, 64
          %s413 = scalar_lea.vmem [#allocation2], %s412
          %415 = dma.done %s410, 1024
        $region52: #{down_block.11} parent=47 // pred_fallthru
          _
      $region48: #{down_block.11} parent=5 // pred_fallthru
        _
    $region6: #{down_block.11} parent=1 // loop_footer
      %s18 = sadd.s32 1, %s14
    $region7: #{down_block.11} parent=1 // loop_footer_branch
      %13 = sbr.rel target = $region3
    $region8: #{down_block.11} parent=1 // loop_exit
      _
    %416 = vsyncpa [#allocation3], 1
    %s417 = scalar_lea.sflag [#allocation3], 1
    %418 = vsyncpa %s417, 1

</llo_original>
